<compile_context>
chip_gen: v7x
topology: tpu7x:2x2x1
jax: 0.10.0
libtpu: 0.0.40
codegen_flags: <defaults>
</compile_context>

<pallas_src>
import functools

import jax
import jax.numpy as jnp
import numpy as np
from jax.experimental import pallas as pl
from jax.experimental.pallas import tpu as pltpu

EPS = 1e-5


def basic_block_kernel(x_ref, mask_ref, w1_ref, g1_ref, b1_ref,
                       w2_ref, g2_ref, b2_ref, out_ref, *, width):
    """Whole BasicBlock in one invocation (small shapes, full VMEM residency).

    x_ref    : (C, N*H*W)  f32  channel-major pixel slab (lane-dense)
    mask_ref : (8, N*H*W)  f32  border mask, one row per NON-center 3x3 tap
    w1_ref   : (9, C, C)   f32  conv1 weights, w1_ref[tap] = (Cout, Cin)
    w2_ref   : (9, C, C)   f32  conv2 weights
    g*/b*    : (C, 1)      f32  batchnorm gamma / beta
    out_ref  : (C, N*H*W)  f32
    """
    _, nhw = x_ref.shape

    x = x_ref[...]
    mask = mask_ref[...]                     # (8, nhw), shared by both convs

    # Flat-pixel offsets of the 9 taps of a 3x3 / pad-1 convolution.
    offsets = [dy * width + dx for dy in (-1, 0, 1) for dx in (-1, 0, 1)]
    center = 4                               # (dy, dx) == (0, 0)

    def conv3x3(act, w_ref):
        # Per-tap accumulation: each tap is an XLU lane rotation, a masked
        # multiply (zero padding + cross-image-wrap suppression), and one
        # small MXU matmul.  No (9C, nhw) im2col slab is ever materialized.
        acc = None
        for t, off in enumerate(offsets):
            tap = act if off == 0 else pltpu.roll(act, shift=(-off) % nhw, axis=1)
            if t != center:
                row = t if t < center else t - 1
                tap = tap * mask[row:row + 1, :]     # sublane broadcast
            part = jnp.dot(w_ref[t], tap, preferred_element_type=jnp.float32)
            acc = part if acc is None else acc + part
        return acc

    def batchnorm(act, g, b):
        # Two-pass batch statistics over the N*H*W axis (per channel); matches
        # the reference mean / biased-variance formula exactly.
        m = jnp.sum(act, axis=1, keepdims=True) * (1.0 / nhw)
        centered = act - m
        v = jnp.sum(centered * centered, axis=1, keepdims=True) * (1.0 / nhw)
        return centered * jax.lax.rsqrt(v + EPS) * g + b

    out1 = conv3x3(x, w1_ref)
    out1 = jnp.maximum(batchnorm(out1, g1_ref[...], b1_ref[...]), 0.0)

    out2 = conv3x3(out1, w2_ref)
    out2 = batchnorm(out2, g2_ref[...], b2_ref[...])

    # Residual shortcut (identity, since stride=1 / downsample=None) + ReLU.
    out_ref[...] = jnp.maximum(out2 + x, 0.0)


def _tap_masks(n, h, w):
    """(8, n*h*w) f32 mask: 1 where a NON-center 3x3 tap stays in the image."""
    hh = np.arange(h)[:, None]
    ww = np.arange(w)[None, :]
    rows = []
    for dy in (-1, 0, 1):
        for dx in (-1, 0, 1):
            if dy == 0 and dx == 0:
                continue                       # center tap is always valid
            valid = ((hh + dy >= 0) & (hh + dy < h) &
                     (ww + dx >= 0) & (ww + dx < w))
            rows.append(np.broadcast_to(valid, (n, h, w)).reshape(-1))
    return np.stack(rows, axis=0).astype(np.float32)     # (8, n*h*w)


def pack_params(params):
    """One-time packing of module parameters into the kernel layout."""
    kh, kw, cin, cout = params["w1"].shape
    w1 = jnp.transpose(params["w1"].reshape(kh * kw, cin, cout), (0, 2, 1))
    w2 = jnp.transpose(params["w2"].reshape(kh * kw, cout, cout), (0, 2, 1))
    return {
        "w1": w1.astype(jnp.float32),            # (9, Cout, Cin)
        "w2": w2.astype(jnp.float32),            # (9, Cout, Cout)
        "g1": params["g1"].reshape(cout, 1).astype(jnp.float32),
        "b1": params["b1"].reshape(cout, 1).astype(jnp.float32),
        "g2": params["g2"].reshape(cout, 1).astype(jnp.float32),
        "b2": params["b2"].reshape(cout, 1).astype(jnp.float32),
    }


def basic_block_slab(x_slab, packed, masks, width):
    """Slab-level entry point: (C, N*H*W) in -> (C, N*H*W) out.

    This is the layout a full network would keep between blocks, so the
    NCHW<->slab transposes stay out of the per-block path.
    """
    c, nhw = x_slab.shape
    cost = pl.CostEstimate(
        flops=2 * 9 * 2 * c * c * nhw + 30 * c * nhw,
        transcendentals=2 * c,
        bytes_accessed=4 * (2 * c * nhw + 8 * nhw + 2 * 9 * c * c + 4 * c),
    )
    return pl.pallas_call(
        functools.partial(basic_block_kernel, width=width),
        out_shape=jax.ShapeDtypeStruct((c, nhw), jnp.float32),
        in_specs=[pl.BlockSpec(memory_space=pltpu.MemorySpace.VMEM)] * 8,
        out_specs=pl.BlockSpec(memory_space=pltpu.MemorySpace.VMEM),
        cost_estimate=cost,
    )(x_slab, masks, packed["w1"], packed["g1"], packed["b1"],
      packed["w2"], packed["g2"], packed["b2"])


def basic_block_forward(x_nchw, params):
    """NCHW adapter for the test (layout conversion done once, outside kernel)."""
    n, c, h, w = x_nchw.shape
    nhw = n * h * w
    packed = pack_params(params)
    masks = jnp.asarray(_tap_masks(n, h, w))           # static geometry constant
    x_slab = jnp.transpose(x_nchw, (1, 0, 2, 3)).reshape(c, nhw).astype(jnp.float32)
    out_slab = basic_block_slab(x_slab, packed, masks, w)
    return jnp.transpose(out_slab.reshape(c, n, h, w), (1, 0, 2, 3))


def init_params(key, in_channels, out_channels):
    k1, k2, k3, k4, k5, k6 = jax.random.split(key, 6)
    fan1 = 9 * in_channels
    fan2 = 9 * out_channels
    return {
        # HWIO conv weights, kaiming-ish uniform scale (deterministic)
        "w1": jax.random.uniform(k1, (3, 3, in_channels, out_channels),
                                 jnp.float32, -1.0, 1.0) / np.sqrt(fan1),
        "w2": jax.random.uniform(k2, (3, 3, out_channels, out_channels),
                                 jnp.float32, -1.0, 1.0) / np.sqrt(fan2),
        # non-trivial gamma/beta so the BN affine actually does something
        "g1": 1.0 + 0.1 * jax.random.normal(k3, (out_channels,), jnp.float32),
        "b1": 0.1 * jax.random.normal(k4, (out_channels,), jnp.float32),
        "g2": 1.0 + 0.05 * jax.random.normal(k5, (out_channels,), jnp.float32),
        "b2": 0.05 * jax.random.normal(k6, (out_channels,), jnp.float32),
    }


def ref_forward(x_nchw, params):
    """Pure-JAX reference (lax conv + batch-stat BN) for the correctness check."""
    x = jnp.transpose(x_nchw, (0, 2, 3, 1)).astype(jnp.float32)

    def conv(h, w):
        return jax.lax.conv_general_dilated(
            h, w, window_strides=(1, 1), padding="SAME",
            dimension_numbers=("NHWC", "HWIO", "NHWC"))

    def bn(h, g, b):
        m = jnp.mean(h, axis=(0, 1, 2), keepdims=True)
        v = jnp.mean((h - m) ** 2, axis=(0, 1, 2), keepdims=True)
        return (h - m) * jax.lax.rsqrt(v + EPS) * g + b

    out = jax.nn.relu(bn(conv(x, params["w1"]), params["g1"], params["b1"]))
    out = bn(conv(out, params["w2"]), params["g2"], params["b2"])
    out = jax.nn.relu(out + x)
    return jnp.transpose(out, (0, 3, 1, 2))


if __name__ == "__main__":
    # Small shapes: batch=2, channels=8 (in == out so the identity shortcut of
    # the default module config is valid), spatial 16x16 -> N*H*W = 512 lanes.
    N, C, H, W = 2, 8, 16, 16
    key = jax.random.PRNGKey(0)
    kx, kp = jax.random.split(key)

    x = jax.random.normal(kx, (N, C, H, W), jnp.float32)
    params = init_params(kp, C, C)

    out = jax.block_until_ready(basic_block_forward(x, params))
    ref = jax.block_until_ready(ref_forward(x, params))

    assert out.shape == (N, C, H, W)
    np.testing.assert_allclose(np.asarray(out), np.asarray(ref),
                               rtol=2e-4, atol=2e-4)
    print("KERNEL_OK")
</pallas_src>

<mosaic_0001>
module attributes {stable_mosaic.version = 11 : i64} {
  func.func @basic_block_kernel(%arg0: memref<8x512xf32, #tpu.memory_space<vmem>>, %arg1: memref<8x512xf32, #tpu.memory_space<vmem>>, %arg2: memref<9x8x8xf32, #tpu.memory_space<vmem>>, %arg3: memref<8x1xf32, #tpu.memory_space<vmem>>, %arg4: memref<8x1xf32, #tpu.memory_space<vmem>>, %arg5: memref<9x8x8xf32, #tpu.memory_space<vmem>>, %arg6: memref<8x1xf32, #tpu.memory_space<vmem>>, %arg7: memref<8x1xf32, #tpu.memory_space<vmem>>, %arg8: memref<8x512xf32, #tpu.memory_space<vmem>>) attributes {dimension_semantics = [], scalar_prefetch = 0 : i64, scratch_operands = 0 : i64, tpu.core_type = #tpu.core_type<tc>} {
    %c0 = arith.constant 0 : index
    %c0_0 = arith.constant 0 : index
    %0 = vector.load %arg0[%c0, %c0_0] : memref<8x512xf32, #tpu.memory_space<vmem>>, vector<8x512xf32>
    %c0_1 = arith.constant 0 : index
    %c0_2 = arith.constant 0 : index
    %1 = vector.load %arg1[%c0_1, %c0_2] : memref<8x512xf32, #tpu.memory_space<vmem>>, vector<8x512xf32>
    %c17_i32 = arith.constant 17 : i32
    %2 = tpu.dynamic_rotate %0 by %c17_i32 dim 1 : vector<8x512xf32>, i32 -> vector<8x512xf32>
    %3 = vector.extract_strided_slice %1 {offsets = [0, 0], sizes = [1, 512], strides = [1, 1]} : vector<8x512xf32> to vector<1x512xf32>
    %4 = vector.broadcast %3 : vector<1x512xf32> to vector<8x512xf32>
    %5 = arith.mulf %2, %4 : vector<8x512xf32>
    %c0_3 = arith.constant 0 : index
    %c0_4 = arith.constant 0 : index
    %c0_5 = arith.constant 0 : index
    %6 = vector.load %arg2[%c0_3, %c0_4, %c0_5] : memref<9x8x8xf32, #tpu.memory_space<vmem>>, vector<1x8x8xf32>
    %7 = vector.shape_cast %6 : vector<1x8x8xf32> to vector<8x8xf32>
    %cst = arith.constant dense<0.000000e+00> : vector<8x512xf32>
    %8 = tpu.matmul %7, %5, %cst {dimension_numbers = #tpu.dot_dimension_numbers<[1], [0], [0], [1], [0, 0, 1, 1], [], []>} : vector<8x8xf32>, vector<8x512xf32>, vector<8x512xf32> -> vector<8x512xf32>
    %c16_i32 = arith.constant 16 : i32
    %9 = tpu.dynamic_rotate %0 by %c16_i32 dim 1 : vector<8x512xf32>, i32 -> vector<8x512xf32>
    %10 = vector.extract_strided_slice %1 {offsets = [1, 0], sizes = [1, 512], strides = [1, 1]} : vector<8x512xf32> to vector<1x512xf32>
    %11 = vector.broadcast %10 : vector<1x512xf32> to vector<8x512xf32>
    %12 = arith.mulf %9, %11 : vector<8x512xf32>
    %c1 = arith.constant 1 : index
    %c0_6 = arith.constant 0 : index
    %c0_7 = arith.constant 0 : index
    %13 = vector.load %arg2[%c1, %c0_6, %c0_7] : memref<9x8x8xf32, #tpu.memory_space<vmem>>, vector<1x8x8xf32>
    %14 = vector.shape_cast %13 : vector<1x8x8xf32> to vector<8x8xf32>
    %cst_8 = arith.constant dense<0.000000e+00> : vector<8x512xf32>
    %15 = tpu.matmul %14, %12, %cst_8 {dimension_numbers = #tpu.dot_dimension_numbers<[1], [0], [0], [1], [0, 0, 1, 1], [], []>} : vector<8x8xf32>, vector<8x512xf32>, vector<8x512xf32> -> vector<8x512xf32>
    %16 = arith.addf %8, %15 : vector<8x512xf32>
    %c15_i32 = arith.constant 15 : i32
    %17 = tpu.dynamic_rotate %0 by %c15_i32 dim 1 : vector<8x512xf32>, i32 -> vector<8x512xf32>
    %18 = vector.extract_strided_slice %1 {offsets = [2, 0], sizes = [1, 512], strides = [1, 1]} : vector<8x512xf32> to vector<1x512xf32>
    %19 = vector.broadcast %18 : vector<1x512xf32> to vector<8x512xf32>
    %20 = arith.mulf %17, %19 : vector<8x512xf32>
    %c2 = arith.constant 2 : index
    %c0_9 = arith.constant 0 : index
    %c0_10 = arith.constant 0 : index
    %21 = vector.load %arg2[%c2, %c0_9, %c0_10] : memref<9x8x8xf32, #tpu.memory_space<vmem>>, vector<1x8x8xf32>
    %22 = vector.shape_cast %21 : vector<1x8x8xf32> to vector<8x8xf32>
    %cst_11 = arith.constant dense<0.000000e+00> : vector<8x512xf32>
    %23 = tpu.matmul %22, %20, %cst_11 {dimension_numbers = #tpu.dot_dimension_numbers<[1], [0], [0], [1], [0, 0, 1, 1], [], []>} : vector<8x8xf32>, vector<8x512xf32>, vector<8x512xf32> -> vector<8x512xf32>
    %24 = arith.addf %16, %23 : vector<8x512xf32>
    %c1_i32 = arith.constant 1 : i32
    %25 = tpu.dynamic_rotate %0 by %c1_i32 dim 1 : vector<8x512xf32>, i32 -> vector<8x512xf32>
    %26 = vector.extract_strided_slice %1 {offsets = [3, 0], sizes = [1, 512], strides = [1, 1]} : vector<8x512xf32> to vector<1x512xf32>
    %27 = vector.broadcast %26 : vector<1x512xf32> to vector<8x512xf32>
    %28 = arith.mulf %25, %27 : vector<8x512xf32>
    %c3 = arith.constant 3 : index
    %c0_12 = arith.constant 0 : index
    %c0_13 = arith.constant 0 : index
    %29 = vector.load %arg2[%c3, %c0_12, %c0_13] : memref<9x8x8xf32, #tpu.memory_space<vmem>>, vector<1x8x8xf32>
    %30 = vector.shape_cast %29 : vector<1x8x8xf32> to vector<8x8xf32>
    %cst_14 = arith.constant dense<0.000000e+00> : vector<8x512xf32>
    %31 = tpu.matmul %30, %28, %cst_14 {dimension_numbers = #tpu.dot_dimension_numbers<[1], [0], [0], [1], [0, 0, 1, 1], [], []>} : vector<8x8xf32>, vector<8x512xf32>, vector<8x512xf32> -> vector<8x512xf32>
    %32 = arith.addf %24, %31 : vector<8x512xf32>
    %c4 = arith.constant 4 : index
    %c0_15 = arith.constant 0 : index
    %c0_16 = arith.constant 0 : index
    %33 = vector.load %arg2[%c4, %c0_15, %c0_16] : memref<9x8x8xf32, #tpu.memory_space<vmem>>, vector<1x8x8xf32>
    %34 = vector.shape_cast %33 : vector<1x8x8xf32> to vector<8x8xf32>
    %cst_17 = arith.constant dense<0.000000e+00> : vector<8x512xf32>
    %35 = tpu.matmul %34, %0, %cst_17 {dimension_numbers = #tpu.dot_dimension_numbers<[1], [0], [0], [1], [0, 0, 1, 1], [], []>} : vector<8x8xf32>, vector<8x512xf32>, vector<8x512xf32> -> vector<8x512xf32>
    %36 = arith.addf %32, %35 : vector<8x512xf32>
    %c511_i32 = arith.constant 511 : i32
    %37 = tpu.dynamic_rotate %0 by %c511_i32 dim 1 : vector<8x512xf32>, i32 -> vector<8x512xf32>
    %38 = vector.extract_strided_slice %1 {offsets = [4, 0], sizes = [1, 512], strides = [1, 1]} : vector<8x512xf32> to vector<1x512xf32>
    %39 = vector.broadcast %38 : vector<1x512xf32> to vector<8x512xf32>
    %40 = arith.mulf %37, %39 : vector<8x512xf32>
    %c5 = arith.constant 5 : index
    %c0_18 = arith.constant 0 : index
    %c0_19 = arith.constant 0 : index
    %41 = vector.load %arg2[%c5, %c0_18, %c0_19] : memref<9x8x8xf32, #tpu.memory_space<vmem>>, vector<1x8x8xf32>
    %42 = vector.shape_cast %41 : vector<1x8x8xf32> to vector<8x8xf32>
    %cst_20 = arith.constant dense<0.000000e+00> : vector<8x512xf32>
    %43 = tpu.matmul %42, %40, %cst_20 {dimension_numbers = #tpu.dot_dimension_numbers<[1], [0], [0], [1], [0, 0, 1, 1], [], []>} : vector<8x8xf32>, vector<8x512xf32>, vector<8x512xf32> -> vector<8x512xf32>
    %44 = arith.addf %36, %43 : vector<8x512xf32>
    %c497_i32 = arith.constant 497 : i32
    %45 = tpu.dynamic_rotate %0 by %c497_i32 dim 1 : vector<8x512xf32>, i32 -> vector<8x512xf32>
    %46 = vector.extract_strided_slice %1 {offsets = [5, 0], sizes = [1, 512], strides = [1, 1]} : vector<8x512xf32> to vector<1x512xf32>
    %47 = vector.broadcast %46 : vector<1x512xf32> to vector<8x512xf32>
    %48 = arith.mulf %45, %47 : vector<8x512xf32>
    %c6 = arith.constant 6 : index
    %c0_21 = arith.constant 0 : index
    %c0_22 = arith.constant 0 : index
    %49 = vector.load %arg2[%c6, %c0_21, %c0_22] : memref<9x8x8xf32, #tpu.memory_space<vmem>>, vector<1x8x8xf32>
    %50 = vector.shape_cast %49 : vector<1x8x8xf32> to vector<8x8xf32>
    %cst_23 = arith.constant dense<0.000000e+00> : vector<8x512xf32>
    %51 = tpu.matmul %50, %48, %cst_23 {dimension_numbers = #tpu.dot_dimension_numbers<[1], [0], [0], [1], [0, 0, 1, 1], [], []>} : vector<8x8xf32>, vector<8x512xf32>, vector<8x512xf32> -> vector<8x512xf32>
    %52 = arith.addf %44, %51 : vector<8x512xf32>
    %c496_i32 = arith.constant 496 : i32
    %53 = tpu.dynamic_rotate %0 by %c496_i32 dim 1 : vector<8x512xf32>, i32 -> vector<8x512xf32>
    %54 = vector.extract_strided_slice %1 {offsets = [6, 0], sizes = [1, 512], strides = [1, 1]} : vector<8x512xf32> to vector<1x512xf32>
    %55 = vector.broadcast %54 : vector<1x512xf32> to vector<8x512xf32>
    %56 = arith.mulf %53, %55 : vector<8x512xf32>
    %c7 = arith.constant 7 : index
    %c0_24 = arith.constant 0 : index
    %c0_25 = arith.constant 0 : index
    %57 = vector.load %arg2[%c7, %c0_24, %c0_25] : memref<9x8x8xf32, #tpu.memory_space<vmem>>, vector<1x8x8xf32>
    %58 = vector.shape_cast %57 : vector<1x8x8xf32> to vector<8x8xf32>
    %cst_26 = arith.constant dense<0.000000e+00> : vector<8x512xf32>
    %59 = tpu.matmul %58, %56, %cst_26 {dimension_numbers = #tpu.dot_dimension_numbers<[1], [0], [0], [1], [0, 0, 1, 1], [], []>} : vector<8x8xf32>, vector<8x512xf32>, vector<8x512xf32> -> vector<8x512xf32>
    %60 = arith.addf %52, %59 : vector<8x512xf32>
    %c495_i32 = arith.constant 495 : i32
    %61 = tpu.dynamic_rotate %0 by %c495_i32 dim 1 : vector<8x512xf32>, i32 -> vector<8x512xf32>
    %62 = vector.extract_strided_slice %1 {offsets = [7, 0], sizes = [1, 512], strides = [1, 1]} : vector<8x512xf32> to vector<1x512xf32>
    %63 = vector.broadcast %62 : vector<1x512xf32> to vector<8x512xf32>
    %64 = arith.mulf %61, %63 : vector<8x512xf32>
    %c8 = arith.constant 8 : index
    %c0_27 = arith.constant 0 : index
    %c0_28 = arith.constant 0 : index
    %65 = vector.load %arg2[%c8, %c0_27, %c0_28] : memref<9x8x8xf32, #tpu.memory_space<vmem>>, vector<1x8x8xf32>
    %66 = vector.shape_cast %65 : vector<1x8x8xf32> to vector<8x8xf32>
    %cst_29 = arith.constant dense<0.000000e+00> : vector<8x512xf32>
    %67 = tpu.matmul %66, %64, %cst_29 {dimension_numbers = #tpu.dot_dimension_numbers<[1], [0], [0], [1], [0, 0, 1, 1], [], []>} : vector<8x8xf32>, vector<8x512xf32>, vector<8x512xf32> -> vector<8x512xf32>
    %68 = arith.addf %60, %67 : vector<8x512xf32>
    %c0_30 = arith.constant 0 : index
    %c0_31 = arith.constant 0 : index
    %69 = vector.load %arg3[%c0_30, %c0_31] : memref<8x1xf32, #tpu.memory_space<vmem>>, vector<8x1xf32>
    %c0_32 = arith.constant 0 : index
    %c0_33 = arith.constant 0 : index
    %70 = vector.load %arg4[%c0_32, %c0_33] : memref<8x1xf32, #tpu.memory_space<vmem>>, vector<8x1xf32>
    %cst_34 = arith.constant dense<0.000000e+00> : vector<8xf32>
    %71 = vector.multi_reduction <add>, %68, %cst_34 [1] : vector<8x512xf32> to vector<8xf32>
    %72 = vector.shape_cast %71 : vector<8xf32> to vector<8x1xf32>
    %cst_35 = arith.constant 0.001953125 : f32
    %73 = vector.broadcast %cst_35 : f32 to vector<8x1xf32>
    %74 = arith.mulf %72, %73 : vector<8x1xf32>
    %75 = vector.broadcast %74 : vector<8x1xf32> to vector<8x512xf32>
    %76 = arith.subf %68, %75 : vector<8x512xf32>
    %77 = arith.mulf %76, %76 : vector<8x512xf32>
    %cst_36 = arith.constant dense<0.000000e+00> : vector<8xf32>
    %78 = vector.multi_reduction <add>, %77, %cst_36 [1] : vector<8x512xf32> to vector<8xf32>
    %79 = vector.shape_cast %78 : vector<8xf32> to vector<8x1xf32>
    %cst_37 = arith.constant 0.001953125 : f32
    %80 = vector.broadcast %cst_37 : f32 to vector<8x1xf32>
    %81 = arith.mulf %79, %80 : vector<8x1xf32>
    %cst_38 = arith.constant 9.99999974E-6 : f32
    %82 = vector.broadcast %cst_38 : f32 to vector<8x1xf32>
    %83 = arith.addf %81, %82 : vector<8x1xf32>
    %84 = math.rsqrt %83 : vector<8x1xf32>
    %85 = vector.broadcast %84 : vector<8x1xf32> to vector<8x512xf32>
    %86 = arith.mulf %76, %85 : vector<8x512xf32>
    %87 = vector.broadcast %69 : vector<8x1xf32> to vector<8x512xf32>
    %88 = arith.mulf %86, %87 : vector<8x512xf32>
    %89 = vector.broadcast %70 : vector<8x1xf32> to vector<8x512xf32>
    %90 = arith.addf %88, %89 : vector<8x512xf32>
    %cst_39 = arith.constant 0.000000e+00 : f32
    %91 = vector.broadcast %cst_39 : f32 to vector<8x512xf32>
    %92 = arith.maximumf %90, %91 : vector<8x512xf32>
    %c17_i32_40 = arith.constant 17 : i32
    %93 = tpu.dynamic_rotate %92 by %c17_i32_40 dim 1 : vector<8x512xf32>, i32 -> vector<8x512xf32>
    %94 = vector.extract_strided_slice %1 {offsets = [0, 0], sizes = [1, 512], strides = [1, 1]} : vector<8x512xf32> to vector<1x512xf32>
    %95 = vector.broadcast %94 : vector<1x512xf32> to vector<8x512xf32>
    %96 = arith.mulf %93, %95 : vector<8x512xf32>
    %c0_41 = arith.constant 0 : index
    %c0_42 = arith.constant 0 : index
    %c0_43 = arith.constant 0 : index
    %97 = vector.load %arg5[%c0_41, %c0_42, %c0_43] : memref<9x8x8xf32, #tpu.memory_space<vmem>>, vector<1x8x8xf32>
    %98 = vector.shape_cast %97 : vector<1x8x8xf32> to vector<8x8xf32>
    %cst_44 = arith.constant dense<0.000000e+00> : vector<8x512xf32>
    %99 = tpu.matmul %98, %96, %cst_44 {dimension_numbers = #tpu.dot_dimension_numbers<[1], [0], [0], [1], [0, 0, 1, 1], [], []>} : vector<8x8xf32>, vector<8x512xf32>, vector<8x512xf32> -> vector<8x512xf32>
    %c16_i32_45 = arith.constant 16 : i32
    %100 = tpu.dynamic_rotate %92 by %c16_i32_45 dim 1 : vector<8x512xf32>, i32 -> vector<8x512xf32>
    %101 = vector.extract_strided_slice %1 {offsets = [1, 0], sizes = [1, 512], strides = [1, 1]} : vector<8x512xf32> to vector<1x512xf32>
    %102 = vector.broadcast %101 : vector<1x512xf32> to vector<8x512xf32>
    %103 = arith.mulf %100, %102 : vector<8x512xf32>
    %c1_46 = arith.constant 1 : index
    %c0_47 = arith.constant 0 : index
    %c0_48 = arith.constant 0 : index
    %104 = vector.load %arg5[%c1_46, %c0_47, %c0_48] : memref<9x8x8xf32, #tpu.memory_space<vmem>>, vector<1x8x8xf32>
    %105 = vector.shape_cast %104 : vector<1x8x8xf32> to vector<8x8xf32>
    %cst_49 = arith.constant dense<0.000000e+00> : vector<8x512xf32>
    %106 = tpu.matmul %105, %103, %cst_49 {dimension_numbers = #tpu.dot_dimension_numbers<[1], [0], [0], [1], [0, 0, 1, 1], [], []>} : vector<8x8xf32>, vector<8x512xf32>, vector<8x512xf32> -> vector<8x512xf32>
    %107 = arith.addf %99, %106 : vector<8x512xf32>
    %c15_i32_50 = arith.constant 15 : i32
    %108 = tpu.dynamic_rotate %92 by %c15_i32_50 dim 1 : vector<8x512xf32>, i32 -> vector<8x512xf32>
    %109 = vector.extract_strided_slice %1 {offsets = [2, 0], sizes = [1, 512], strides = [1, 1]} : vector<8x512xf32> to vector<1x512xf32>
    %110 = vector.broadcast %109 : vector<1x512xf32> to vector<8x512xf32>
    %111 = arith.mulf %108, %110 : vector<8x512xf32>
    %c2_51 = arith.constant 2 : index
    %c0_52 = arith.constant 0 : index
    %c0_53 = arith.constant 0 : index
    %112 = vector.load %arg5[%c2_51, %c0_52, %c0_53] : memref<9x8x8xf32, #tpu.memory_space<vmem>>, vector<1x8x8xf32>
    %113 = vector.shape_cast %112 : vector<1x8x8xf32> to vector<8x8xf32>
    %cst_54 = arith.constant dense<0.000000e+00> : vector<8x512xf32>
    %114 = tpu.matmul %113, %111, %cst_54 {dimension_numbers = #tpu.dot_dimension_numbers<[1], [0], [0], [1], [0, 0, 1, 1], [], []>} : vector<8x8xf32>, vector<8x512xf32>, vector<8x512xf32> -> vector<8x512xf32>
    %115 = arith.addf %107, %114 : vector<8x512xf32>
    %c1_i32_55 = arith.constant 1 : i32
    %116 = tpu.dynamic_rotate %92 by %c1_i32_55 dim 1 : vector<8x512xf32>, i32 -> vector<8x512xf32>
    %117 = vector.extract_strided_slice %1 {offsets = [3, 0], sizes = [1, 512], strides = [1, 1]} : vector<8x512xf32> to vector<1x512xf32>
    %118 = vector.broadcast %117 : vector<1x512xf32> to vector<8x512xf32>
    %119 = arith.mulf %116, %118 : vector<8x512xf32>
    %c3_56 = arith.constant 3 : index
    %c0_57 = arith.constant 0 : index
    %c0_58 = arith.constant 0 : index
    %120 = vector.load %arg5[%c3_56, %c0_57, %c0_58] : memref<9x8x8xf32, #tpu.memory_space<vmem>>, vector<1x8x8xf32>
    %121 = vector.shape_cast %120 : vector<1x8x8xf32> to vector<8x8xf32>
    %cst_59 = arith.constant dense<0.000000e+00> : vector<8x512xf32>
    %122 = tpu.matmul %121, %119, %cst_59 {dimension_numbers = #tpu.dot_dimension_numbers<[1], [0], [0], [1], [0, 0, 1, 1], [], []>} : vector<8x8xf32>, vector<8x512xf32>, vector<8x512xf32> -> vector<8x512xf32>
    %123 = arith.addf %115, %122 : vector<8x512xf32>
    %c4_60 = arith.constant 4 : index
    %c0_61 = arith.constant 0 : index
    %c0_62 = arith.constant 0 : index
    %124 = vector.load %arg5[%c4_60, %c0_61, %c0_62] : memref<9x8x8xf32, #tpu.memory_space<vmem>>, vector<1x8x8xf32>
    %125 = vector.shape_cast %124 : vector<1x8x8xf32> to vector<8x8xf32>
    %cst_63 = arith.constant dense<0.000000e+00> : vector<8x512xf32>
    %126 = tpu.matmul %125, %92, %cst_63 {dimension_numbers = #tpu.dot_dimension_numbers<[1], [0], [0], [1], [0, 0, 1, 1], [], []>} : vector<8x8xf32>, vector<8x512xf32>, vector<8x512xf32> -> vector<8x512xf32>
    %127 = arith.addf %123, %126 : vector<8x512xf32>
    %c511_i32_64 = arith.constant 511 : i32
    %128 = tpu.dynamic_rotate %92 by %c511_i32_64 dim 1 : vector<8x512xf32>, i32 -> vector<8x512xf32>
    %129 = vector.extract_strided_slice %1 {offsets = [4, 0], sizes = [1, 512], strides = [1, 1]} : vector<8x512xf32> to vector<1x512xf32>
    %130 = vector.broadcast %129 : vector<1x512xf32> to vector<8x512xf32>
    %131 = arith.mulf %128, %130 : vector<8x512xf32>
    %c5_65 = arith.constant 5 : index
    %c0_66 = arith.constant 0 : index
    %c0_67 = arith.constant 0 : index
    %132 = vector.load %arg5[%c5_65, %c0_66, %c0_67] : memref<9x8x8xf32, #tpu.memory_space<vmem>>, vector<1x8x8xf32>
    %133 = vector.shape_cast %132 : vector<1x8x8xf32> to vector<8x8xf32>
    %cst_68 = arith.constant dense<0.000000e+00> : vector<8x512xf32>
    %134 = tpu.matmul %133, %131, %cst_68 {dimension_numbers = #tpu.dot_dimension_numbers<[1], [0], [0], [1], [0, 0, 1, 1], [], []>} : vector<8x8xf32>, vector<8x512xf32>, vector<8x512xf32> -> vector<8x512xf32>
    %135 = arith.addf %127, %134 : vector<8x512xf32>
    %c497_i32_69 = arith.constant 497 : i32
    %136 = tpu.dynamic_rotate %92 by %c497_i32_69 dim 1 : vector<8x512xf32>, i32 -> vector<8x512xf32>
    %137 = vector.extract_strided_slice %1 {offsets = [5, 0], sizes = [1, 512], strides = [1, 1]} : vector<8x512xf32> to vector<1x512xf32>
    %138 = vector.broadcast %137 : vector<1x512xf32> to vector<8x512xf32>
    %139 = arith.mulf %136, %138 : vector<8x512xf32>
    %c6_70 = arith.constant 6 : index
    %c0_71 = arith.constant 0 : index
    %c0_72 = arith.constant 0 : index
    %140 = vector.load %arg5[%c6_70, %c0_71, %c0_72] : memref<9x8x8xf32, #tpu.memory_space<vmem>>, vector<1x8x8xf32>
    %141 = vector.shape_cast %140 : vector<1x8x8xf32> to vector<8x8xf32>
    %cst_73 = arith.constant dense<0.000000e+00> : vector<8x512xf32>
    %142 = tpu.matmul %141, %139, %cst_73 {dimension_numbers = #tpu.dot_dimension_numbers<[1], [0], [0], [1], [0, 0, 1, 1], [], []>} : vector<8x8xf32>, vector<8x512xf32>, vector<8x512xf32> -> vector<8x512xf32>
    %143 = arith.addf %135, %142 : vector<8x512xf32>
    %c496_i32_74 = arith.constant 496 : i32
    %144 = tpu.dynamic_rotate %92 by %c496_i32_74 dim 1 : vector<8x512xf32>, i32 -> vector<8x512xf32>
    %145 = vector.extract_strided_slice %1 {offsets = [6, 0], sizes = [1, 512], strides = [1, 1]} : vector<8x512xf32> to vector<1x512xf32>
    %146 = vector.broadcast %145 : vector<1x512xf32> to vector<8x512xf32>
    %147 = arith.mulf %144, %146 : vector<8x512xf32>
    %c7_75 = arith.constant 7 : index
    %c0_76 = arith.constant 0 : index
    %c0_77 = arith.constant 0 : index
    %148 = vector.load %arg5[%c7_75, %c0_76, %c0_77] : memref<9x8x8xf32, #tpu.memory_space<vmem>>, vector<1x8x8xf32>
    %149 = vector.shape_cast %148 : vector<1x8x8xf32> to vector<8x8xf32>
    %cst_78 = arith.constant dense<0.000000e+00> : vector<8x512xf32>
    %150 = tpu.matmul %149, %147, %cst_78 {dimension_numbers = #tpu.dot_dimension_numbers<[1], [0], [0], [1], [0, 0, 1, 1], [], []>} : vector<8x8xf32>, vector<8x512xf32>, vector<8x512xf32> -> vector<8x512xf32>
    %151 = arith.addf %143, %150 : vector<8x512xf32>
    %c495_i32_79 = arith.constant 495 : i32
    %152 = tpu.dynamic_rotate %92 by %c495_i32_79 dim 1 : vector<8x512xf32>, i32 -> vector<8x512xf32>
    %153 = vector.extract_strided_slice %1 {offsets = [7, 0], sizes = [1, 512], strides = [1, 1]} : vector<8x512xf32> to vector<1x512xf32>
    %154 = vector.broadcast %153 : vector<1x512xf32> to vector<8x512xf32>
    %155 = arith.mulf %152, %154 : vector<8x512xf32>
    %c8_80 = arith.constant 8 : index
    %c0_81 = arith.constant 0 : index
    %c0_82 = arith.constant 0 : index
    %156 = vector.load %arg5[%c8_80, %c0_81, %c0_82] : memref<9x8x8xf32, #tpu.memory_space<vmem>>, vector<1x8x8xf32>
    %157 = vector.shape_cast %156 : vector<1x8x8xf32> to vector<8x8xf32>
    %cst_83 = arith.constant dense<0.000000e+00> : vector<8x512xf32>
    %158 = tpu.matmul %157, %155, %cst_83 {dimension_numbers = #tpu.dot_dimension_numbers<[1], [0], [0], [1], [0, 0, 1, 1], [], []>} : vector<8x8xf32>, vector<8x512xf32>, vector<8x512xf32> -> vector<8x512xf32>
    %159 = arith.addf %151, %158 : vector<8x512xf32>
    %c0_84 = arith.constant 0 : index
    %c0_85 = arith.constant 0 : index
    %160 = vector.load %arg6[%c0_84, %c0_85] : memref<8x1xf32, #tpu.memory_space<vmem>>, vector<8x1xf32>
    %c0_86 = arith.constant 0 : index
    %c0_87 = arith.constant 0 : index
    %161 = vector.load %arg7[%c0_86, %c0_87] : memref<8x1xf32, #tpu.memory_space<vmem>>, vector<8x1xf32>
    %cst_88 = arith.constant dense<0.000000e+00> : vector<8xf32>
    %162 = vector.multi_reduction <add>, %159, %cst_88 [1] : vector<8x512xf32> to vector<8xf32>
    %163 = vector.shape_cast %162 : vector<8xf32> to vector<8x1xf32>
    %cst_89 = arith.constant 0.001953125 : f32
    %164 = vector.broadcast %cst_89 : f32 to vector<8x1xf32>
    %165 = arith.mulf %163, %164 : vector<8x1xf32>
    %166 = vector.broadcast %165 : vector<8x1xf32> to vector<8x512xf32>
    %167 = arith.subf %159, %166 : vector<8x512xf32>
    %168 = arith.mulf %167, %167 : vector<8x512xf32>
    %cst_90 = arith.constant dense<0.000000e+00> : vector<8xf32>
    %169 = vector.multi_reduction <add>, %168, %cst_90 [1] : vector<8x512xf32> to vector<8xf32>
    %170 = vector.shape_cast %169 : vector<8xf32> to vector<8x1xf32>
    %cst_91 = arith.constant 0.001953125 : f32
    %171 = vector.broadcast %cst_91 : f32 to vector<8x1xf32>
    %172 = arith.mulf %170, %171 : vector<8x1xf32>
    %cst_92 = arith.constant 9.99999974E-6 : f32
    %173 = vector.broadcast %cst_92 : f32 to vector<8x1xf32>
    %174 = arith.addf %172, %173 : vector<8x1xf32>
    %175 = math.rsqrt %174 : vector<8x1xf32>
    %176 = vector.broadcast %175 : vector<8x1xf32> to vector<8x512xf32>
    %177 = arith.mulf %167, %176 : vector<8x512xf32>
    %178 = vector.broadcast %160 : vector<8x1xf32> to vector<8x512xf32>
    %179 = arith.mulf %177, %178 : vector<8x512xf32>
    %180 = vector.broadcast %161 : vector<8x1xf32> to vector<8x512xf32>
    %181 = arith.addf %179, %180 : vector<8x512xf32>
    %182 = arith.addf %181, %0 : vector<8x512xf32>
    %cst_93 = arith.constant 0.000000e+00 : f32
    %183 = vector.broadcast %cst_93 : f32 to vector<8x512xf32>
    %184 = arith.maximumf %182, %183 : vector<8x512xf32>
    %c0_94 = arith.constant 0 : index
    %c0_95 = arith.constant 0 : index
    %185 = vector.load %arg8[%c0_94, %c0_95] : memref<8x512xf32, #tpu.memory_space<vmem>>, vector<8x512xf32>
    tpu.vector_store %arg8[%c0_94, %c0_95], %184 {strides = array<i32>} : memref<8x512xf32, #tpu.memory_space<vmem>>, vector<8x512xf32>,
    return
  }
}

</mosaic_0001>

<llo_original>
// kernel: tpu_custom_call.1
$region0: #{tpu_custom_call.1}
  #allocation0 [shape = 'u32[]', space=smem, size = 0x4, offset = 0x4, fixed_abs, tag = 'smem constant byte address 0x4 - core index']
  #allocation1 [shape = 'u32[144,128]{1,0:T(1,128)}', space=vmem, size = 0x12000, scoped, tag = 'internal scratch']
  %s0 = inlined_call_operand.vmem [shape: f32[8,512], index: 0, kind: input, shape index: {}]
  %s1 = inlined_call_operand.vmem [shape: f32[8,512], index: 1, kind: input, shape index: {}]
  %s2 = inlined_call_operand.vmem [shape: f32[9,8,8], index: 2, kind: input, shape index: {}]
  %s3 = inlined_call_operand.vmem [shape: f32[8,1], index: 3, kind: input, shape index: {}]
  %s4 = inlined_call_operand.vmem [shape: f32[8,1], index: 4, kind: input, shape index: {}]
  %s5 = inlined_call_operand.vmem [shape: f32[9,8,8], index: 5, kind: input, shape index: {}]
  %s6 = inlined_call_operand.vmem [shape: f32[8,1], index: 6, kind: input, shape index: {}]
  %s7 = inlined_call_operand.vmem [shape: f32[8,1], index: 7, kind: input, shape index: {}]
  %s8 = inlined_call_operand.hbm [shape: f32[8,512], index: 8, kind: output, shape index: {}]
  %s9 = sld [smem:[#allocation0]]
  $region42: #{tpu_custom_call.1} parent=0
    _
  %s11 = ssub.s32 1, %s9
  %s12 = scalar_select 0, %s11, %s9
  $region1: #{tpu_custom_call.1} parent=0
    #allocation2 [shape = 'u8[16384]{0}', space=vmem, size = 0x4000, scoped, tag = 'output window, operand 0, single buffered']
    #allocation3 [shape = 's32[1]{0}', space=sflag, size = 0x4, scoped, tag = 'scoped memory for tpu_custom_call.1']
    %13 = vsyncpa [#allocation3], 0
    // Predicated region
    $region2: #{tpu_custom_call.1} parent=1 // pred_check
      _
    $region3: #{tpu_custom_call.1} parent=1 // pred_check_branch
      %15 = sbr.rel (0) target = $region5
    $region4: #{tpu_custom_call.1} parent=1 // pred_region
      _
    $region5: #{tpu_custom_call.1} parent=1 // pred_fallthru
      _
    // Predicated region
    $region6: #{tpu_custom_call.1} parent=1 // pred_check
      _
    $region7: #{tpu_custom_call.1} parent=1 // pred_check_branch
      %17 = sbr.rel (0) target = $region9
    $region8: #{tpu_custom_call.1} parent=1 // pred_region
      _
    $region9: #{tpu_custom_call.1} parent=1 // pred_fallthru
      _
    // Predicated region
    $region10: #{tpu_custom_call.1} parent=1 // pred_check
      _
    $region11: #{tpu_custom_call.1} parent=1 // pred_check_branch
      %19 = sbr.rel (0) target = $region13
    $region12: #{tpu_custom_call.1} parent=1 // pred_region
      _
    $region13: #{tpu_custom_call.1} parent=1 // pred_fallthru
      _
    // Predicated region
    $region14: #{tpu_custom_call.1} parent=1 // pred_check
      _
    $region15: #{tpu_custom_call.1} parent=1 // pred_check_branch
      %21 = sbr.rel (0) target = $region17
    $region16: #{tpu_custom_call.1} parent=1 // pred_region
      _
    $region17: #{tpu_custom_call.1} parent=1 // pred_fallthru
      _
    // Predicated region
    $region18: #{tpu_custom_call.1} parent=1 // pred_check
      _
    $region19: #{tpu_custom_call.1} parent=1 // pred_check_branch
      %23 = sbr.rel (0) target = $region21
    $region20: #{tpu_custom_call.1} parent=1 // pred_region
      _
    $region21: #{tpu_custom_call.1} parent=1 // pred_fallthru
      _
    // Predicated region
    $region22: #{tpu_custom_call.1} parent=1 // pred_check
      _
    $region23: #{tpu_custom_call.1} parent=1 // pred_check_branch
      %25 = sbr.rel (0) target = $region25
    $region24: #{tpu_custom_call.1} parent=1 // pred_region
      _
    $region25: #{tpu_custom_call.1} parent=1 // pred_fallthru
      _
    // Predicated region
    $region26: #{tpu_custom_call.1} parent=1 // pred_check
      _
    $region27: #{tpu_custom_call.1} parent=1 // pred_check_branch
      %27 = sbr.rel (0) target = $region29
    $region28: #{tpu_custom_call.1} parent=1 // pred_region
      _
    $region29: #{tpu_custom_call.1} parent=1 // pred_fallthru
      _
    // Predicated region
    $region30: #{tpu_custom_call.1} parent=1 // pred_check
      _
    $region31: #{tpu_custom_call.1} parent=1 // pred_check_branch
      %29 = sbr.rel (0) target = $region33
    $region32: #{tpu_custom_call.1} parent=1 // pred_region
      _
    $region33: #{tpu_custom_call.1} parent=1 // pred_fallthru
      _
    %v30 = vld [vmem:[%s0] sm:$0xff]
    %v31 = vld [vmem:[%s0 + $0x8] sm:$0xff]
    %v32 = vld [vmem:[%s0 + $0x10] sm:$0xff]
    %v33 = vld [vmem:[%s0 + $0x18] sm:$0xff]
    %v34 = vld [vmem:[%s1] sm:$0xff]
    %v35 = vld [vmem:[%s1 + $0x8] sm:$0xff]
    %v36 = vld [vmem:[%s1 + $0x10] sm:$0xff]
    %v37 = vld [vmem:[%s1 + $0x18] sm:$0xff]
    %38 = vrot.lane.b32.xlu0 %v30, 17
    %v39 = vpop.permute.xlu0 %38
    %40 = vrot.lane.b32.xlu0 %v31, 17
    %v41 = vpop.permute.xlu0 %40
    %42 = vrot.lane.b32.xlu0 %v32, 17
    %v43 = vpop.permute.xlu0 %42
    %44 = vrot.lane.b32.xlu0 %v33, 17
    %v45 = vpop.permute.xlu0 %44
    %v46 = vlaneseq
    %v47 = vand.u32 %v46, 127
    %vm48 = vcmp.lt.s32.totalorder %v47, 17
    %v49 = vsel %vm48, %v43, %v45
    %v50 = vsel %vm48, %v41, %v43
    %v51 = vsel %vm48, %v39, %v41
    %v52 = vsel %vm48, %v45, %v39
    %v53 = vlaneseq
    %v54 = vshrl.u32 %v53, 7
    %v55 = vsub.s32 0, %v54
    %v56 = vrot.slane %v34, %v55
    %v57 = vlaneseq
    %v58 = vshrl.u32 %v57, 7
    %v59 = vsub.s32 0, %v58
    %v60 = vrot.slane %v35, %v59
    %v61 = vlaneseq
    %v62 = vshrl.u32 %v61, 7
    %v63 = vsub.s32 0, %v62
    %v64 = vrot.slane %v36, %v63
    %v65 = vlaneseq
    %v66 = vshrl.u32 %v65, 7
    %v67 = vsub.s32 0, %v66
    %v68 = vrot.slane %v37, %v67
    %v69 = vmul.f32 %v52, %v56
    %v70 = vmul.f32 %v51, %v60
    %v71 = vmul.f32 %v50, %v64
    %v72 = vmul.f32 %v49, %v68
    %v73 = vld [vmem:[%s2] sm:$0xff]
    %74 = vrot.lane.b32.xlu0 %v30, 16
    %v75 = vpop.permute.xlu0 %74
    %76 = vrot.lane.b32.xlu0 %v31, 16
    %v77 = vpop.permute.xlu0 %76
    %78 = vrot.lane.b32.xlu0 %v32, 16
    %v79 = vpop.permute.xlu0 %78
    %80 = vrot.lane.b32.xlu0 %v33, 16
    %v81 = vpop.permute.xlu0 %80
    %vm82 = vcmp.lt.s32.totalorder %v47, 16
    %v83 = vsel %vm82, %v79, %v81
    %v84 = vsel %vm82, %v77, %v79
    %v85 = vsel %vm82, %v75, %v77
    %v86 = vsel %vm82, %v81, %v75
    %v87 = vlaneseq
    %v88 = vshrl.u32 %v87, 7
    %v89 = vsub.s32 1, %v88
    %v90 = vrot.slane %v34, %v89
    %v91 = vlaneseq
    %v92 = vshrl.u32 %v91, 7
    %v93 = vsub.s32 1, %v92
    %v94 = vrot.slane %v35, %v93
    %v95 = vlaneseq
    %v96 = vshrl.u32 %v95, 7
    %v97 = vsub.s32 1, %v96
    %v98 = vrot.slane %v36, %v97
    %v99 = vlaneseq
    %v100 = vshrl.u32 %v99, 7
    %v101 = vsub.s32 1, %v100
    %v102 = vrot.slane %v37, %v101
    %v103 = vmul.f32 %v86, %v90
    %v104 = vmul.f32 %v85, %v94
    %v105 = vmul.f32 %v84, %v98
    %v106 = vmul.f32 %v83, %v102
    %s107 = scalar_lea.vmem %s2, 8
    %v108 = vld [vmem:[%s107] sm:$0xff]
    %vm109 = vcmask 64512
    %v111 = vsel %vm109, %v108, 0
    %113 = vmatprep.subr.mxu0 %v104
    %114 = vmatpush1.msra.mxu0 %v103
    %115 = vmatprep.subr.mxu0 0.0
    %116 = vmatpush1.msra.mxu0 0.0
    %117 = vmatprep.subr.mxu0 0.0
    %118 = vmatpush1.msra.mxu0 0.0
    %119 = vmatprep.subr.mxu0 0.0
    %120 = vmatpush1.msra.mxu0 0.0
    %121 = vmatprep.subr.mxu0 0.0
    %122 = vmatpush1.msra.mxu0 0.0
    %123 = vmatprep.subr.mxu0 0.0
    %124 = vmatpush1.msra.mxu0 0.0
    %125 = vmatprep.subr.mxu0 0.0
    %126 = vmatpush1.msra.mxu0 0.0
    %127 = vmatprep.subr.mxu0 0.0
    %128 = vmatpush1.msra.mxu0 0.0
    %129 = vmatprep.subr.mxu0 0.0
    %130 = vmatpush1.msra.mxu0 0.0
    %131 = vmatprep.subr.mxu0 0.0
    %132 = vmatpush1.msra.mxu0 0.0
    %133 = vmatprep.subr.mxu0 0.0
    %134 = vmatpush1.msra.mxu0 0.0
    %135 = vmatprep.subr.mxu0 0.0
    %136 = vmatpush1.msra.mxu0 0.0
    %137 = vmatprep.subr.mxu0 0.0
    %138 = vmatpush1.msra.mxu0 0.0
    %139 = vmatprep.subr.mxu0 0.0
    %140 = vmatpush1.msra.mxu0 0.0
    %141 = vmatprep.subr.mxu0 0.0
    %142 = vmatpush1.msra.mxu0 0.0
    %143 = vmatprep.subr.mxu0 0.0
    %144 = vmatpush1.msra.mxu0 0.0
    %145 = vmatprep.subr.mxu0 0.0
    %146 = vmatpush1.msra.mxu0 0.0
    %147 = vmatprep.subr.mxu0 0.0
    %148 = vmatpush1.msra.mxu0 0.0
    %149 = vmatprep.subr.mxu0 0.0
    %150 = vmatpush1.msra.mxu0 0.0
    %151 = vmatprep.subr.mxu0 0.0
    %152 = vmatpush1.msra.mxu0 0.0
    %153 = vmatprep.subr.mxu0 0.0
    %154 = vmatpush1.msra.mxu0 0.0
    %155 = vmatprep.subr.mxu0 0.0
    %156 = vmatpush1.msra.mxu0 0.0
    %157 = vmatprep.subr.mxu0 0.0
    %158 = vmatpush1.msra.mxu0 0.0
    %159 = vmatprep.subr.mxu0 0.0
    %160 = vmatpush1.msra.mxu0 0.0
    %161 = vmatprep.subr.mxu0 0.0
    %162 = vmatpush1.msra.mxu0 0.0
    %163 = vmatprep.subr.mxu0 0.0
    %164 = vmatpush1.msra.mxu0 0.0
    %165 = vmatprep.subr.mxu0 0.0
    %166 = vmatpush1.msra.mxu0 0.0
    %167 = vmatprep.subr.mxu0 0.0
    %168 = vmatpush1.msra.mxu0 0.0
    %169 = vmatprep.subr.mxu0 0.0
    %170 = vmatpush1.msra.mxu0 0.0
    %171 = vmatprep.subr.mxu0 0.0
    %172 = vmatpush1.msra.mxu0 0.0
    %173 = vmatprep.subr.mxu0 0.0
    %174 = vmatpush1.msra.mxu0 0.0
    %175 = vmatprep.subr.mxu0 0.0
    %176 = vmatpush1.msra.mxu0 0.0
    %177 = vmatprep.mubr.f32.mxu0 0.0
    %178 = vmatmul.mubr.f32.gmra.mrb[0].mxu0 %v111
    %v179 = vpop.f32.mrb[0].mxu0
    %v180 = vadd.f32 0.0, %v179
    %v181 = vpop.f32.mrb[0].mxu0
    %v182 = vadd.f32 0.0, %v181
    %183 = vdwg.mxu0
    %184 = vmatprep.subr.mxu0 %v106
    %185 = vmatpush1.msra.mxu0 %v105
    %186 = vmatprep.subr.mxu0 0.0
    %187 = vmatpush1.msra.mxu0 0.0
    %188 = vmatprep.subr.mxu0 0.0
    %189 = vmatpush1.msra.mxu0 0.0
    %190 = vmatprep.subr.mxu0 0.0
    %191 = vmatpush1.msra.mxu0 0.0
    %192 = vmatprep.subr.mxu0 0.0
    %193 = vmatpush1.msra.mxu0 0.0
    %194 = vmatprep.subr.mxu0 0.0
    %195 = vmatpush1.msra.mxu0 0.0
    %196 = vmatprep.subr.mxu0 0.0
    %197 = vmatpush1.msra.mxu0 0.0
    %198 = vmatprep.subr.mxu0 0.0
    %199 = vmatpush1.msra.mxu0 0.0
    %200 = vmatprep.subr.mxu0 0.0
    %201 = vmatpush1.msra.mxu0 0.0
    %202 = vmatprep.subr.mxu0 0.0
    %203 = vmatpush1.msra.mxu0 0.0
    %204 = vmatprep.subr.mxu0 0.0
    %205 = vmatpush1.msra.mxu0 0.0
    %206 = vmatprep.subr.mxu0 0.0
    %207 = vmatpush1.msra.mxu0 0.0
    %208 = vmatprep.subr.mxu0 0.0
    %209 = vmatpush1.msra.mxu0 0.0
    %210 = vmatprep.subr.mxu0 0.0
    %211 = vmatpush1.msra.mxu0 0.0
    %212 = vmatprep.subr.mxu0 0.0
    %213 = vmatpush1.msra.mxu0 0.0
    %214 = vmatprep.subr.mxu0 0.0
    %215 = vmatpush1.msra.mxu0 0.0
    %216 = vmatprep.subr.mxu0 0.0
    %217 = vmatpush1.msra.mxu0 0.0
    %218 = vmatprep.subr.mxu0 0.0
    %219 = vmatpush1.msra.mxu0 0.0
    %220 = vmatprep.subr.mxu0 0.0
    %221 = vmatpush1.msra.mxu0 0.0
    %222 = vmatprep.subr.mxu0 0.0
    %223 = vmatpush1.msra.mxu0 0.0
    %224 = vmatprep.subr.mxu0 0.0
    %225 = vmatpush1.msra.mxu0 0.0
    %226 = vmatprep.subr.mxu0 0.0
    %227 = vmatpush1.msra.mxu0 0.0
    %228 = vmatprep.subr.mxu0 0.0
    %229 = vmatpush1.msra.mxu0 0.0
    %230 = vmatprep.subr.mxu0 0.0
    %231 = vmatpush1.msra.mxu0 0.0
    %232 = vmatprep.subr.mxu0 0.0
    %233 = vmatpush1.msra.mxu0 0.0
    %234 = vmatprep.subr.mxu0 0.0
    %235 = vmatpush1.msra.mxu0 0.0
    %236 = vmatprep.subr.mxu0 0.0
    %237 = vmatpush1.msra.mxu0 0.0
    %238 = vmatprep.subr.mxu0 0.0
    %239 = vmatpush1.msra.mxu0 0.0
    %240 = vmatprep.subr.mxu0 0.0
    %241 = vmatpush1.msra.mxu0 0.0
    %242 = vmatprep.subr.mxu0 0.0
    %243 = vmatpush1.msra.mxu0 0.0
    %244 = vmatprep.subr.mxu0 0.0
    %245 = vmatpush1.msra.mxu0 0.0
    %246 = vmatprep.subr.mxu0 0.0
    %247 = vmatpush1.msra.mxu0 0.0
    %248 = vmatprep.mubr.f32.mxu0 0.0
    %249 = vmatmul.mubr.f32.gmra.mrb[0].mxu0 %v111
    %v250 = vpop.f32.mrb[0].mxu0
    %v251 = vadd.f32 0.0, %v250
    %v252 = vpop.f32.mrb[0].mxu0
    %v253 = vadd.f32 0.0, %v252
    %254 = vdwg.mxu0
    %v256 = vsel %vm109, %v73, 0
    %258 = vmatprep.subr.mxu0 %v70
    %259 = vmatpush1.msra.mxu0 %v69
    %260 = vmatprep.subr.mxu0 0.0
    %261 = vmatpush1.msra.mxu0 0.0
    %262 = vmatprep.subr.mxu0 0.0
    %263 = vmatpush1.msra.mxu0 0.0
    %264 = vmatprep.subr.mxu0 0.0
    %265 = vmatpush1.msra.mxu0 0.0
    %266 = vmatprep.subr.mxu0 0.0
    %267 = vmatpush1.msra.mxu0 0.0
    %268 = vmatprep.subr.mxu0 0.0
    %269 = vmatpush1.msra.mxu0 0.0
    %270 = vmatprep.subr.mxu0 0.0
    %271 = vmatpush1.msra.mxu0 0.0
    %272 = vmatprep.subr.mxu0 0.0
    %273 = vmatpush1.msra.mxu0 0.0
    %274 = vmatprep.subr.mxu0 0.0
    %275 = vmatpush1.msra.mxu0 0.0
    %276 = vmatprep.subr.mxu0 0.0
    %277 = vmatpush1.msra.mxu0 0.0
    %278 = vmatprep.subr.mxu0 0.0
    %279 = vmatpush1.msra.mxu0 0.0
    %280 = vmatprep.subr.mxu0 0.0
    %281 = vmatpush1.msra.mxu0 0.0
    %282 = vmatprep.subr.mxu0 0.0
    %283 = vmatpush1.msra.mxu0 0.0
    %284 = vmatprep.subr.mxu0 0.0
    %285 = vmatpush1.msra.mxu0 0.0
    %286 = vmatprep.subr.mxu0 0.0
    %287 = vmatpush1.msra.mxu0 0.0
    %288 = vmatprep.subr.mxu0 0.0
    %289 = vmatpush1.msra.mxu0 0.0
    %290 = vmatprep.subr.mxu0 0.0
    %291 = vmatpush1.msra.mxu0 0.0
    %292 = vmatprep.subr.mxu0 0.0
    %293 = vmatpush1.msra.mxu0 0.0
    %294 = vmatprep.subr.mxu0 0.0
    %295 = vmatpush1.msra.mxu0 0.0
    %296 = vmatprep.subr.mxu0 0.0
    %297 = vmatpush1.msra.mxu0 0.0
    %298 = vmatprep.subr.mxu0 0.0
    %299 = vmatpush1.msra.mxu0 0.0
    %300 = vmatprep.subr.mxu0 0.0
    %301 = vmatpush1.msra.mxu0 0.0
    %302 = vmatprep.subr.mxu0 0.0
    %303 = vmatpush1.msra.mxu0 0.0
    %304 = vmatprep.subr.mxu0 0.0
    %305 = vmatpush1.msra.mxu0 0.0
    %306 = vmatprep.subr.mxu0 0.0
    %307 = vmatpush1.msra.mxu0 0.0
    %308 = vmatprep.subr.mxu0 0.0
    %309 = vmatpush1.msra.mxu0 0.0
    %310 = vmatprep.subr.mxu0 0.0
    %311 = vmatpush1.msra.mxu0 0.0
    %312 = vmatprep.subr.mxu0 0.0
    %313 = vmatpush1.msra.mxu0 0.0
    %314 = vmatprep.subr.mxu0 0.0
    %315 = vmatpush1.msra.mxu0 0.0
    %316 = vmatprep.subr.mxu0 0.0
    %317 = vmatpush1.msra.mxu0 0.0
    %318 = vmatprep.subr.mxu0 0.0
    %319 = vmatpush1.msra.mxu0 0.0
    %320 = vmatprep.subr.mxu0 0.0
    %321 = vmatpush1.msra.mxu0 0.0
    %322 = vmatprep.mubr.f32.mxu0 0.0
    %323 = vmatmul.mubr.f32.gmra.mrb[0].mxu0 %v256
    %v324 = vpop.f32.mrb[0].mxu0
    %v325 = vadd.f32 %v180, %v324
    %v326 = vpop.f32.mrb[0].mxu0
    %v327 = vadd.f32 %v182, %v326
    %328 = vdwg.mxu0
    %329 = vmatprep.subr.mxu0 %v72
    %330 = vmatpush1.msra.mxu0 %v71
    %331 = vmatprep.subr.mxu0 0.0
    %332 = vmatpush1.msra.mxu0 0.0
    %333 = vmatprep.subr.mxu0 0.0
    %334 = vmatpush1.msra.mxu0 0.0
    %335 = vmatprep.subr.mxu0 0.0
    %336 = vmatpush1.msra.mxu0 0.0
    %337 = vmatprep.subr.mxu0 0.0
    %338 = vmatpush1.msra.mxu0 0.0
    %339 = vmatprep.subr.mxu0 0.0
    %340 = vmatpush1.msra.mxu0 0.0
    %341 = vmatprep.subr.mxu0 0.0
    %342 = vmatpush1.msra.mxu0 0.0
    %343 = vmatprep.subr.mxu0 0.0
    %344 = vmatpush1.msra.mxu0 0.0
    %345 = vmatprep.subr.mxu0 0.0
    %346 = vmatpush1.msra.mxu0 0.0
    %347 = vmatprep.subr.mxu0 0.0
    %348 = vmatpush1.msra.mxu0 0.0
    %349 = vmatprep.subr.mxu0 0.0
    %350 = vmatpush1.msra.mxu0 0.0
    %351 = vmatprep.subr.mxu0 0.0
    %352 = vmatpush1.msra.mxu0 0.0
    %353 = vmatprep.subr.mxu0 0.0
    %354 = vmatpush1.msra.mxu0 0.0
    %355 = vmatprep.subr.mxu0 0.0
    %356 = vmatpush1.msra.mxu0 0.0
    %357 = vmatprep.subr.mxu0 0.0
    %358 = vmatpush1.msra.mxu0 0.0
    %359 = vmatprep.subr.mxu0 0.0
    %360 = vmatpush1.msra.mxu0 0.0
    %361 = vmatprep.subr.mxu0 0.0
    %362 = vmatpush1.msra.mxu0 0.0
    %363 = vmatprep.subr.mxu0 0.0
    %364 = vmatpush1.msra.mxu0 0.0
    %365 = vmatprep.subr.mxu0 0.0
    %366 = vmatpush1.msra.mxu0 0.0
    %367 = vmatprep.subr.mxu0 0.0
    %368 = vmatpush1.msra.mxu0 0.0
    %369 = vmatprep.subr.mxu0 0.0
    %370 = vmatpush1.msra.mxu0 0.0
    %371 = vmatprep.subr.mxu0 0.0
    %372 = vmatpush1.msra.mxu0 0.0
    %373 = vmatprep.subr.mxu0 0.0
    %374 = vmatpush1.msra.mxu0 0.0
    %375 = vmatprep.subr.mxu0 0.0
    %376 = vmatpush1.msra.mxu0 0.0
    %377 = vmatprep.subr.mxu0 0.0
    %378 = vmatpush1.msra.mxu0 0.0
    %379 = vmatprep.subr.mxu0 0.0
    %380 = vmatpush1.msra.mxu0 0.0
    %381 = vmatprep.subr.mxu0 0.0
    %382 = vmatpush1.msra.mxu0 0.0
    %383 = vmatprep.subr.mxu0 0.0
    %384 = vmatpush1.msra.mxu0 0.0
    %385 = vmatprep.subr.mxu0 0.0
    %386 = vmatpush1.msra.mxu0 0.0
    %387 = vmatprep.subr.mxu0 0.0
    %388 = vmatpush1.msra.mxu0 0.0
    %389 = vmatprep.subr.mxu0 0.0
    %390 = vmatpush1.msra.mxu0 0.0
    %391 = vmatprep.subr.mxu0 0.0
    %392 = vmatpush1.msra.mxu0 0.0
    %393 = vmatprep.mubr.f32.mxu0 0.0
    %394 = vmatmul.mubr.f32.gmra.mrb[0].mxu0 %v256
    %v395 = vpop.f32.mrb[0].mxu0
    %v396 = vadd.f32 %v251, %v395
    %v397 = vpop.f32.mrb[0].mxu0
    %v398 = vadd.f32 %v253, %v397
    %399 = vdwg.mxu0
    %400 = vrot.lane.b32.xlu0 %v30, 15
    %v401 = vpop.permute.xlu0 %400
    %402 = vrot.lane.b32.xlu0 %v31, 15
    %v403 = vpop.permute.xlu0 %402
    %404 = vrot.lane.b32.xlu0 %v32, 15
    %v405 = vpop.permute.xlu0 %404
    %406 = vrot.lane.b32.xlu0 %v33, 15
    %v407 = vpop.permute.xlu0 %406
    %vm408 = vcmp.lt.s32.totalorder %v47, 15
    %v409 = vsel %vm408, %v405, %v407
    %v410 = vsel %vm408, %v403, %v405
    %v411 = vsel %vm408, %v401, %v403
    %v412 = vsel %vm408, %v407, %v401
    %v413 = vlaneseq
    %v414 = vshrl.u32 %v413, 7
    %v415 = vsub.s32 2, %v414
    %v416 = vrot.slane %v34, %v415
    %v417 = vlaneseq
    %v418 = vshrl.u32 %v417, 7
    %v419 = vsub.s32 2, %v418
    %v420 = vrot.slane %v35, %v419
    %v421 = vlaneseq
    %v422 = vshrl.u32 %v421, 7
    %v423 = vsub.s32 2, %v422
    %v424 = vrot.slane %v36, %v423
    %v425 = vlaneseq
    %v426 = vshrl.u32 %v425, 7
    %v427 = vsub.s32 2, %v426
    %v428 = vrot.slane %v37, %v427
    %v429 = vmul.f32 %v412, %v416
    %v430 = vmul.f32 %v411, %v420
    %v431 = vmul.f32 %v410, %v424
    %v432 = vmul.f32 %v409, %v428
    %s433 = scalar_lea.vmem %s2, 16
    %v434 = vld [vmem:[%s433] sm:$0xff]
    %v436 = vsel %vm109, %v434, 0
    %438 = vmatprep.subr.mxu0 %v430
    %439 = vmatpush1.msra.mxu0 %v429
    %440 = vmatprep.subr.mxu0 0.0
    %441 = vmatpush1.msra.mxu0 0.0
    %442 = vmatprep.subr.mxu0 0.0
    %443 = vmatpush1.msra.mxu0 0.0
    %444 = vmatprep.subr.mxu0 0.0
    %445 = vmatpush1.msra.mxu0 0.0
    %446 = vmatprep.subr.mxu0 0.0
    %447 = vmatpush1.msra.mxu0 0.0
    %448 = vmatprep.subr.mxu0 0.0
    %449 = vmatpush1.msra.mxu0 0.0
    %450 = vmatprep.subr.mxu0 0.0
    %451 = vmatpush1.msra.mxu0 0.0
    %452 = vmatprep.subr.mxu0 0.0
    %453 = vmatpush1.msra.mxu0 0.0
    %454 = vmatprep.subr.mxu0 0.0
    %455 = vmatpush1.msra.mxu0 0.0
    %456 = vmatprep.subr.mxu0 0.0
    %457 = vmatpush1.msra.mxu0 0.0
    %458 = vmatprep.subr.mxu0 0.0
    %459 = vmatpush1.msra.mxu0 0.0
    %460 = vmatprep.subr.mxu0 0.0
    %461 = vmatpush1.msra.mxu0 0.0
    %462 = vmatprep.subr.mxu0 0.0
    %463 = vmatpush1.msra.mxu0 0.0
    %464 = vmatprep.subr.mxu0 0.0
    %465 = vmatpush1.msra.mxu0 0.0
    %466 = vmatprep.subr.mxu0 0.0
    %467 = vmatpush1.msra.mxu0 0.0
    %468 = vmatprep.subr.mxu0 0.0
    %469 = vmatpush1.msra.mxu0 0.0
    %470 = vmatprep.subr.mxu0 0.0
    %471 = vmatpush1.msra.mxu0 0.0
    %472 = vmatprep.subr.mxu0 0.0
    %473 = vmatpush1.msra.mxu0 0.0
    %474 = vmatprep.subr.mxu0 0.0
    %475 = vmatpush1.msra.mxu0 0.0
    %476 = vmatprep.subr.mxu0 0.0
    %477 = vmatpush1.msra.mxu0 0.0
    %478 = vmatprep.subr.mxu0 0.0
    %479 = vmatpush1.msra.mxu0 0.0
    %480 = vmatprep.subr.mxu0 0.0
    %481 = vmatpush1.msra.mxu0 0.0
    %482 = vmatprep.subr.mxu0 0.0
    %483 = vmatpush1.msra.mxu0 0.0
    %484 = vmatprep.subr.mxu0 0.0
    %485 = vmatpush1.msra.mxu0 0.0
    %486 = vmatprep.subr.mxu0 0.0
    %487 = vmatpush1.msra.mxu0 0.0
    %488 = vmatprep.subr.mxu0 0.0
    %489 = vmatpush1.msra.mxu0 0.0
    %490 = vmatprep.subr.mxu0 0.0
    %491 = vmatpush1.msra.mxu0 0.0
    %492 = vmatprep.subr.mxu0 0.0
    %493 = vmatpush1.msra.mxu0 0.0
    %494 = vmatprep.subr.mxu0 0.0
    %495 = vmatpush1.msra.mxu0 0.0
    %496 = vmatprep.subr.mxu0 0.0
    %497 = vmatpush1.msra.mxu0 0.0
    %498 = vmatprep.subr.mxu0 0.0
    %499 = vmatpush1.msra.mxu0 0.0
    %500 = vmatprep.subr.mxu0 0.0
    %501 = vmatpush1.msra.mxu0 0.0
    %502 = vmatprep.mubr.f32.mxu0 0.0
    %503 = vmatmul.mubr.f32.gmra.mrb[0].mxu0 %v436
    %v504 = vpop.f32.mrb[0].mxu0
    %v505 = vadd.f32 0.0, %v504
    %v506 = vpop.f32.mrb[0].mxu0
    %v507 = vadd.f32 0.0, %v506
    %508 = vdwg.mxu0
    %509 = vmatprep.subr.mxu0 %v432
    %510 = vmatpush1.msra.mxu0 %v431
    %511 = vmatprep.subr.mxu0 0.0
    %512 = vmatpush1.msra.mxu0 0.0
    %513 = vmatprep.subr.mxu0 0.0
    %514 = vmatpush1.msra.mxu0 0.0
    %515 = vmatprep.subr.mxu0 0.0
    %516 = vmatpush1.msra.mxu0 0.0
    %517 = vmatprep.subr.mxu0 0.0
    %518 = vmatpush1.msra.mxu0 0.0
    %519 = vmatprep.subr.mxu0 0.0
    %520 = vmatpush1.msra.mxu0 0.0
    %521 = vmatprep.subr.mxu0 0.0
    %522 = vmatpush1.msra.mxu0 0.0
    %523 = vmatprep.subr.mxu0 0.0
    %524 = vmatpush1.msra.mxu0 0.0
    %525 = vmatprep.subr.mxu0 0.0
    %526 = vmatpush1.msra.mxu0 0.0
    %527 = vmatprep.subr.mxu0 0.0
    %528 = vmatpush1.msra.mxu0 0.0
    %529 = vmatprep.subr.mxu0 0.0
    %530 = vmatpush1.msra.mxu0 0.0
    %531 = vmatprep.subr.mxu0 0.0
    %532 = vmatpush1.msra.mxu0 0.0
    %533 = vmatprep.subr.mxu0 0.0
    %534 = vmatpush1.msra.mxu0 0.0
    %535 = vmatprep.subr.mxu0 0.0
    %536 = vmatpush1.msra.mxu0 0.0
    %537 = vmatprep.subr.mxu0 0.0
    %538 = vmatpush1.msra.mxu0 0.0
    %539 = vmatprep.subr.mxu0 0.0
    %540 = vmatpush1.msra.mxu0 0.0
    %541 = vmatprep.subr.mxu0 0.0
    %542 = vmatpush1.msra.mxu0 0.0
    %543 = vmatprep.subr.mxu0 0.0
    %544 = vmatpush1.msra.mxu0 0.0
    %545 = vmatprep.subr.mxu0 0.0
    %546 = vmatpush1.msra.mxu0 0.0
    %547 = vmatprep.subr.mxu0 0.0
    %548 = vmatpush1.msra.mxu0 0.0
    %549 = vmatprep.subr.mxu0 0.0
    %550 = vmatpush1.msra.mxu0 0.0
    %551 = vmatprep.subr.mxu0 0.0
    %552 = vmatpush1.msra.mxu0 0.0
    %553 = vmatprep.subr.mxu0 0.0
    %554 = vmatpush1.msra.mxu0 0.0
    %555 = vmatprep.subr.mxu0 0.0
    %556 = vmatpush1.msra.mxu0 0.0
    %557 = vmatprep.subr.mxu0 0.0
    %558 = vmatpush1.msra.mxu0 0.0
    %559 = vmatprep.subr.mxu0 0.0
    %560 = vmatpush1.msra.mxu0 0.0
    %561 = vmatprep.subr.mxu0 0.0
    %562 = vmatpush1.msra.mxu0 0.0
    %563 = vmatprep.subr.mxu0 0.0
    %564 = vmatpush1.msra.mxu0 0.0
    %565 = vmatprep.subr.mxu0 0.0
    %566 = vmatpush1.msra.mxu0 0.0
    %567 = vmatprep.subr.mxu0 0.0
    %568 = vmatpush1.msra.mxu0 0.0
    %569 = vmatprep.subr.mxu0 0.0
    %570 = vmatpush1.msra.mxu0 0.0
    %571 = vmatprep.subr.mxu0 0.0
    %572 = vmatpush1.msra.mxu0 0.0
    %573 = vmatprep.mubr.f32.mxu0 0.0
    %574 = vmatmul.mubr.f32.gmra.mrb[0].mxu0 %v436
    %v575 = vpop.f32.mrb[0].mxu0
    %v576 = vadd.f32 0.0, %v575
    %v577 = vpop.f32.mrb[0].mxu0
    %v578 = vadd.f32 0.0, %v577
    %579 = vdwg.mxu0
    %v580 = vadd.f32 %v325, %v505
    %v581 = vadd.f32 %v327, %v507
    %v582 = vadd.f32 %v396, %v576
    %v583 = vadd.f32 %v398, %v578
    %584 = vrot.lane.b32.xlu0 %v30, 1
    %v585 = vpop.permute.xlu0 %584
    %586 = vrot.lane.b32.xlu0 %v31, 1
    %v587 = vpop.permute.xlu0 %586
    %588 = vrot.lane.b32.xlu0 %v32, 1
    %v589 = vpop.permute.xlu0 %588
    %590 = vrot.lane.b32.xlu0 %v33, 1
    %v591 = vpop.permute.xlu0 %590
    %vm592 = vcmp.lt.s32.totalorder %v47, 1
    %v593 = vsel %vm592, %v589, %v591
    %v594 = vsel %vm592, %v587, %v589
    %v595 = vsel %vm592, %v585, %v587
    %v596 = vsel %vm592, %v591, %v585
    %v597 = vlaneseq
    %v598 = vshrl.u32 %v597, 7
    %v599 = vsub.s32 3, %v598
    %v600 = vrot.slane %v34, %v599
    %v601 = vlaneseq
    %v602 = vshrl.u32 %v601, 7
    %v603 = vsub.s32 3, %v602
    %v604 = vrot.slane %v35, %v603
    %v605 = vlaneseq
    %v606 = vshrl.u32 %v605, 7
    %v607 = vsub.s32 3, %v606
    %v608 = vrot.slane %v36, %v607
    %v609 = vlaneseq
    %v610 = vshrl.u32 %v609, 7
    %v611 = vsub.s32 3, %v610
    %v612 = vrot.slane %v37, %v611
    %v613 = vmul.f32 %v596, %v600
    %v614 = vmul.f32 %v595, %v604
    %v615 = vmul.f32 %v594, %v608
    %v616 = vmul.f32 %v593, %v612
    %s617 = scalar_lea.vmem %s2, 24
    %v618 = vld [vmem:[%s617] sm:$0xff]
    %v620 = vsel %vm109, %v618, 0
    %622 = vmatprep.subr.mxu0 %v614
    %623 = vmatpush1.msra.mxu0 %v613
    %624 = vmatprep.subr.mxu0 0.0
    %625 = vmatpush1.msra.mxu0 0.0
    %626 = vmatprep.subr.mxu0 0.0
    %627 = vmatpush1.msra.mxu0 0.0
    %628 = vmatprep.subr.mxu0 0.0
    %629 = vmatpush1.msra.mxu0 0.0
    %630 = vmatprep.subr.mxu0 0.0
    %631 = vmatpush1.msra.mxu0 0.0
    %632 = vmatprep.subr.mxu0 0.0
    %633 = vmatpush1.msra.mxu0 0.0
    %634 = vmatprep.subr.mxu0 0.0
    %635 = vmatpush1.msra.mxu0 0.0
    %636 = vmatprep.subr.mxu0 0.0
    %637 = vmatpush1.msra.mxu0 0.0
    %638 = vmatprep.subr.mxu0 0.0
    %639 = vmatpush1.msra.mxu0 0.0
    %640 = vmatprep.subr.mxu0 0.0
    %641 = vmatpush1.msra.mxu0 0.0
    %642 = vmatprep.subr.mxu0 0.0
    %643 = vmatpush1.msra.mxu0 0.0
    %644 = vmatprep.subr.mxu0 0.0
    %645 = vmatpush1.msra.mxu0 0.0
    %646 = vmatprep.subr.mxu0 0.0
    %647 = vmatpush1.msra.mxu0 0.0
    %648 = vmatprep.subr.mxu0 0.0
    %649 = vmatpush1.msra.mxu0 0.0
    %650 = vmatprep.subr.mxu0 0.0
    %651 = vmatpush1.msra.mxu0 0.0
    %652 = vmatprep.subr.mxu0 0.0
    %653 = vmatpush1.msra.mxu0 0.0
    %654 = vmatprep.subr.mxu0 0.0
    %655 = vmatpush1.msra.mxu0 0.0
    %656 = vmatprep.subr.mxu0 0.0
    %657 = vmatpush1.msra.mxu0 0.0
    %658 = vmatprep.subr.mxu0 0.0
    %659 = vmatpush1.msra.mxu0 0.0
    %660 = vmatprep.subr.mxu0 0.0
    %661 = vmatpush1.msra.mxu0 0.0
    %662 = vmatprep.subr.mxu0 0.0
    %663 = vmatpush1.msra.mxu0 0.0
    %664 = vmatprep.subr.mxu0 0.0
    %665 = vmatpush1.msra.mxu0 0.0
    %666 = vmatprep.subr.mxu0 0.0
    %667 = vmatpush1.msra.mxu0 0.0
    %668 = vmatprep.subr.mxu0 0.0
    %669 = vmatpush1.msra.mxu0 0.0
    %670 = vmatprep.subr.mxu0 0.0
    %671 = vmatpush1.msra.mxu0 0.0
    %672 = vmatprep.subr.mxu0 0.0
    %673 = vmatpush1.msra.mxu0 0.0
    %674 = vmatprep.subr.mxu0 0.0
    %675 = vmatpush1.msra.mxu0 0.0
    %676 = vmatprep.subr.mxu0 0.0
    %677 = vmatpush1.msra.mxu0 0.0
    %678 = vmatprep.subr.mxu0 0.0
    %679 = vmatpush1.msra.mxu0 0.0
    %680 = vmatprep.subr.mxu0 0.0
    %681 = vmatpush1.msra.mxu0 0.0
    %682 = vmatprep.subr.mxu0 0.0
    %683 = vmatpush1.msra.mxu0 0.0
    %684 = vmatprep.subr.mxu0 0.0
    %685 = vmatpush1.msra.mxu0 0.0
    %686 = vmatprep.mubr.f32.mxu0 0.0
    %687 = vmatmul.mubr.f32.gmra.mrb[0].mxu0 %v620
    %v688 = vpop.f32.mrb[0].mxu0
    %v689 = vadd.f32 0.0, %v688
    %v690 = vpop.f32.mrb[0].mxu0
    %v691 = vadd.f32 0.0, %v690
    %692 = vdwg.mxu0
    %693 = vmatprep.subr.mxu0 %v616
    %694 = vmatpush1.msra.mxu0 %v615
    %695 = vmatprep.subr.mxu0 0.0
    %696 = vmatpush1.msra.mxu0 0.0
    %697 = vmatprep.subr.mxu0 0.0
    %698 = vmatpush1.msra.mxu0 0.0
    %699 = vmatprep.subr.mxu0 0.0
    %700 = vmatpush1.msra.mxu0 0.0
    %701 = vmatprep.subr.mxu0 0.0
    %702 = vmatpush1.msra.mxu0 0.0
    %703 = vmatprep.subr.mxu0 0.0
    %704 = vmatpush1.msra.mxu0 0.0
    %705 = vmatprep.subr.mxu0 0.0
    %706 = vmatpush1.msra.mxu0 0.0
    %707 = vmatprep.subr.mxu0 0.0
    %708 = vmatpush1.msra.mxu0 0.0
    %709 = vmatprep.subr.mxu0 0.0
    %710 = vmatpush1.msra.mxu0 0.0
    %711 = vmatprep.subr.mxu0 0.0
    %712 = vmatpush1.msra.mxu0 0.0
    %713 = vmatprep.subr.mxu0 0.0
    %714 = vmatpush1.msra.mxu0 0.0
    %715 = vmatprep.subr.mxu0 0.0
    %716 = vmatpush1.msra.mxu0 0.0
    %717 = vmatprep.subr.mxu0 0.0
    %718 = vmatpush1.msra.mxu0 0.0
    %719 = vmatprep.subr.mxu0 0.0
    %720 = vmatpush1.msra.mxu0 0.0
    %721 = vmatprep.subr.mxu0 0.0
    %722 = vmatpush1.msra.mxu0 0.0
    %723 = vmatprep.subr.mxu0 0.0
    %724 = vmatpush1.msra.mxu0 0.0
    %725 = vmatprep.subr.mxu0 0.0
    %726 = vmatpush1.msra.mxu0 0.0
    %727 = vmatprep.subr.mxu0 0.0
    %728 = vmatpush1.msra.mxu0 0.0
    %729 = vmatprep.subr.mxu0 0.0
    %730 = vmatpush1.msra.mxu0 0.0
    %731 = vmatprep.subr.mxu0 0.0
    %732 = vmatpush1.msra.mxu0 0.0
    %733 = vmatprep.subr.mxu0 0.0
    %734 = vmatpush1.msra.mxu0 0.0
    %735 = vmatprep.subr.mxu0 0.0
    %736 = vmatpush1.msra.mxu0 0.0
    %737 = vmatprep.subr.mxu0 0.0
    %738 = vmatpush1.msra.mxu0 0.0
    %739 = vmatprep.subr.mxu0 0.0
    %740 = vmatpush1.msra.mxu0 0.0
    %741 = vmatprep.subr.mxu0 0.0
    %742 = vmatpush1.msra.mxu0 0.0
    %743 = vmatprep.subr.mxu0 0.0
    %744 = vmatpush1.msra.mxu0 0.0
    %745 = vmatprep.subr.mxu0 0.0
    %746 = vmatpush1.msra.mxu0 0.0
    %747 = vmatprep.subr.mxu0 0.0
    %748 = vmatpush1.msra.mxu0 0.0
    %749 = vmatprep.subr.mxu0 0.0
    %750 = vmatpush1.msra.mxu0 0.0
    %751 = vmatprep.subr.mxu0 0.0
    %752 = vmatpush1.msra.mxu0 0.0
    %753 = vmatprep.subr.mxu0 0.0
    %754 = vmatpush1.msra.mxu0 0.0
    %755 = vmatprep.subr.mxu0 0.0
    %756 = vmatpush1.msra.mxu0 0.0
    %757 = vmatprep.mubr.f32.mxu0 0.0
    %758 = vmatmul.mubr.f32.gmra.mrb[0].mxu0 %v620
    %v759 = vpop.f32.mrb[0].mxu0
    %v760 = vadd.f32 0.0, %v759
    %v761 = vpop.f32.mrb[0].mxu0
    %v762 = vadd.f32 0.0, %v761
    %763 = vdwg.mxu0
    %v764 = vadd.f32 %v580, %v689
    %v765 = vadd.f32 %v581, %v691
    %v766 = vadd.f32 %v582, %v760
    %v767 = vadd.f32 %v583, %v762
    %s768 = scalar_lea.vmem %s2, 32
    %v769 = vld [vmem:[%s768] sm:$0xff]
    %v771 = vsel %vm109, %v769, 0
    %773 = vmatprep.subr.mxu0 %v31
    %774 = vmatpush1.msra.mxu0 %v30
    %775 = vmatprep.subr.mxu0 0.0
    %776 = vmatpush1.msra.mxu0 0.0
    %777 = vmatprep.subr.mxu0 0.0
    %778 = vmatpush1.msra.mxu0 0.0
    %779 = vmatprep.subr.mxu0 0.0
    %780 = vmatpush1.msra.mxu0 0.0
    %781 = vmatprep.subr.mxu0 0.0
    %782 = vmatpush1.msra.mxu0 0.0
    %783 = vmatprep.subr.mxu0 0.0
    %784 = vmatpush1.msra.mxu0 0.0
    %785 = vmatprep.subr.mxu0 0.0
    %786 = vmatpush1.msra.mxu0 0.0
    %787 = vmatprep.subr.mxu0 0.0
    %788 = vmatpush1.msra.mxu0 0.0
    %789 = vmatprep.subr.mxu0 0.0
    %790 = vmatpush1.msra.mxu0 0.0
    %791 = vmatprep.subr.mxu0 0.0
    %792 = vmatpush1.msra.mxu0 0.0
    %793 = vmatprep.subr.mxu0 0.0
    %794 = vmatpush1.msra.mxu0 0.0
    %795 = vmatprep.subr.mxu0 0.0
    %796 = vmatpush1.msra.mxu0 0.0
    %797 = vmatprep.subr.mxu0 0.0
    %798 = vmatpush1.msra.mxu0 0.0
    %799 = vmatprep.subr.mxu0 0.0
    %800 = vmatpush1.msra.mxu0 0.0
    %801 = vmatprep.subr.mxu0 0.0
    %802 = vmatpush1.msra.mxu0 0.0
    %803 = vmatprep.subr.mxu0 0.0
    %804 = vmatpush1.msra.mxu0 0.0
    %805 = vmatprep.subr.mxu0 0.0
    %806 = vmatpush1.msra.mxu0 0.0
    %807 = vmatprep.subr.mxu0 0.0
    %808 = vmatpush1.msra.mxu0 0.0
    %809 = vmatprep.subr.mxu0 0.0
    %810 = vmatpush1.msra.mxu0 0.0
    %811 = vmatprep.subr.mxu0 0.0
    %812 = vmatpush1.msra.mxu0 0.0
    %813 = vmatprep.subr.mxu0 0.0
    %814 = vmatpush1.msra.mxu0 0.0
    %815 = vmatprep.subr.mxu0 0.0
    %816 = vmatpush1.msra.mxu0 0.0
    %817 = vmatprep.subr.mxu0 0.0
    %818 = vmatpush1.msra.mxu0 0.0
    %819 = vmatprep.subr.mxu0 0.0
    %820 = vmatpush1.msra.mxu0 0.0
    %821 = vmatprep.subr.mxu0 0.0
    %822 = vmatpush1.msra.mxu0 0.0
    %823 = vmatprep.subr.mxu0 0.0
    %824 = vmatpush1.msra.mxu0 0.0
    %825 = vmatprep.subr.mxu0 0.0
    %826 = vmatpush1.msra.mxu0 0.0
    %827 = vmatprep.subr.mxu0 0.0
    %828 = vmatpush1.msra.mxu0 0.0
    %829 = vmatprep.subr.mxu0 0.0
    %830 = vmatpush1.msra.mxu0 0.0
    %831 = vmatprep.subr.mxu0 0.0
    %832 = vmatpush1.msra.mxu0 0.0
    %833 = vmatprep.subr.mxu0 0.0
    %834 = vmatpush1.msra.mxu0 0.0
    %835 = vmatprep.subr.mxu0 0.0
    %836 = vmatpush1.msra.mxu0 0.0
    %837 = vmatprep.mubr.f32.mxu0 0.0
    %838 = vmatmul.mubr.f32.gmra.mrb[0].mxu0 %v771
    %v839 = vpop.f32.mrb[0].mxu0
    %v840 = vadd.f32 0.0, %v839
    %v841 = vpop.f32.mrb[0].mxu0
    %v842 = vadd.f32 0.0, %v841
    %843 = vdwg.mxu0
    %844 = vmatprep.subr.mxu0 %v33
    %845 = vmatpush1.msra.mxu0 %v32
    %846 = vmatprep.subr.mxu0 0.0
    %847 = vmatpush1.msra.mxu0 0.0
    %848 = vmatprep.subr.mxu0 0.0
    %849 = vmatpush1.msra.mxu0 0.0
    %850 = vmatprep.subr.mxu0 0.0
    %851 = vmatpush1.msra.mxu0 0.0
    %852 = vmatprep.subr.mxu0 0.0
    %853 = vmatpush1.msra.mxu0 0.0
    %854 = vmatprep.subr.mxu0 0.0
    %855 = vmatpush1.msra.mxu0 0.0
    %856 = vmatprep.subr.mxu0 0.0
    %857 = vmatpush1.msra.mxu0 0.0
    %858 = vmatprep.subr.mxu0 0.0
    %859 = vmatpush1.msra.mxu0 0.0
    %860 = vmatprep.subr.mxu0 0.0
    %861 = vmatpush1.msra.mxu0 0.0
    %862 = vmatprep.subr.mxu0 0.0
    %863 = vmatpush1.msra.mxu0 0.0
    %864 = vmatprep.subr.mxu0 0.0
    %865 = vmatpush1.msra.mxu0 0.0
    %866 = vmatprep.subr.mxu0 0.0
    %867 = vmatpush1.msra.mxu0 0.0
    %868 = vmatprep.subr.mxu0 0.0
    %869 = vmatpush1.msra.mxu0 0.0
    %870 = vmatprep.subr.mxu0 0.0
    %871 = vmatpush1.msra.mxu0 0.0
    %872 = vmatprep.subr.mxu0 0.0
    %873 = vmatpush1.msra.mxu0 0.0
    %874 = vmatprep.subr.mxu0 0.0
    %875 = vmatpush1.msra.mxu0 0.0
    %876 = vmatprep.subr.mxu0 0.0
    %877 = vmatpush1.msra.mxu0 0.0
    %878 = vmatprep.subr.mxu0 0.0
    %879 = vmatpush1.msra.mxu0 0.0
    %880 = vmatprep.subr.mxu0 0.0
    %881 = vmatpush1.msra.mxu0 0.0
    %882 = vmatprep.subr.mxu0 0.0
    %883 = vmatpush1.msra.mxu0 0.0
    %884 = vmatprep.subr.mxu0 0.0
    %885 = vmatpush1.msra.mxu0 0.0
    %886 = vmatprep.subr.mxu0 0.0
    %887 = vmatpush1.msra.mxu0 0.0
    %888 = vmatprep.subr.mxu0 0.0
    %889 = vmatpush1.msra.mxu0 0.0
    %890 = vmatprep.subr.mxu0 0.0
    %891 = vmatpush1.msra.mxu0 0.0
    %892 = vmatprep.subr.mxu0 0.0
    %893 = vmatpush1.msra.mxu0 0.0
    %894 = vmatprep.subr.mxu0 0.0
    %895 = vmatpush1.msra.mxu0 0.0
    %896 = vmatprep.subr.mxu0 0.0
    %897 = vmatpush1.msra.mxu0 0.0
    %898 = vmatprep.subr.mxu0 0.0
    %899 = vmatpush1.msra.mxu0 0.0
    %900 = vmatprep.subr.mxu0 0.0
    %901 = vmatpush1.msra.mxu0 0.0
    %902 = vmatprep.subr.mxu0 0.0
    %903 = vmatpush1.msra.mxu0 0.0
    %904 = vmatprep.subr.mxu0 0.0
    %905 = vmatpush1.msra.mxu0 0.0
    %906 = vmatprep.subr.mxu0 0.0
    %907 = vmatpush1.msra.mxu0 0.0
    %908 = vmatprep.mubr.f32.mxu0 0.0
    %909 = vmatmul.mubr.f32.gmra.mrb[0].mxu0 %v771
    %v910 = vpop.f32.mrb[0].mxu0
    %v911 = vadd.f32 0.0, %v910
    %v912 = vpop.f32.mrb[0].mxu0
    %v913 = vadd.f32 0.0, %v912
    %914 = vdwg.mxu0
    %v915 = vadd.f32 %v764, %v840
    %v916 = vadd.f32 %v765, %v842
    %v917 = vadd.f32 %v766, %v911
    %v918 = vadd.f32 %v767, %v913
    %919 = vrot.lane.b32.xlu0 %v30, 127
    %v920 = vpop.permute.xlu0 %919
    %921 = vrot.lane.b32.xlu0 %v31, 127
    %v922 = vpop.permute.xlu0 %921
    %923 = vrot.lane.b32.xlu0 %v32, 127
    %v924 = vpop.permute.xlu0 %923
    %925 = vrot.lane.b32.xlu0 %v33, 127
    %v926 = vpop.permute.xlu0 %925
    %vm927 = vcmp.lt.s32.totalorder %v47, 127
    %v928 = vsel %vm927, %v924, %v926
    %v929 = vsel %vm927, %v922, %v924
    %v930 = vsel %vm927, %v920, %v922
    %v931 = vsel %vm927, %v926, %v920
    %v932 = vlaneseq
    %v933 = vshrl.u32 %v932, 7
    %v934 = vsub.s32 4, %v933
    %v935 = vrot.slane %v34, %v934
    %v936 = vlaneseq
    %v937 = vshrl.u32 %v936, 7
    %v938 = vsub.s32 4, %v937
    %v939 = vrot.slane %v35, %v938
    %v940 = vlaneseq
    %v941 = vshrl.u32 %v940, 7
    %v942 = vsub.s32 4, %v941
    %v943 = vrot.slane %v36, %v942
    %v944 = vlaneseq
    %v945 = vshrl.u32 %v944, 7
    %v946 = vsub.s32 4, %v945
    %v947 = vrot.slane %v37, %v946
    %v948 = vmul.f32 %v930, %v935
    %v949 = vmul.f32 %v929, %v939
    %v950 = vmul.f32 %v928, %v943
    %v951 = vmul.f32 %v931, %v947
    %s952 = scalar_lea.vmem %s2, 40
    %v953 = vld [vmem:[%s952] sm:$0xff]
    %v955 = vsel %vm109, %v953, 0
    %957 = vmatprep.subr.mxu0 %v949
    %958 = vmatpush1.msra.mxu0 %v948
    %959 = vmatprep.subr.mxu0 0.0
    %960 = vmatpush1.msra.mxu0 0.0
    %961 = vmatprep.subr.mxu0 0.0
    %962 = vmatpush1.msra.mxu0 0.0
    %963 = vmatprep.subr.mxu0 0.0
    %964 = vmatpush1.msra.mxu0 0.0
    %965 = vmatprep.subr.mxu0 0.0
    %966 = vmatpush1.msra.mxu0 0.0
    %967 = vmatprep.subr.mxu0 0.0
    %968 = vmatpush1.msra.mxu0 0.0
    %969 = vmatprep.subr.mxu0 0.0
    %970 = vmatpush1.msra.mxu0 0.0
    %971 = vmatprep.subr.mxu0 0.0
    %972 = vmatpush1.msra.mxu0 0.0
    %973 = vmatprep.subr.mxu0 0.0
    %974 = vmatpush1.msra.mxu0 0.0
    %975 = vmatprep.subr.mxu0 0.0
    %976 = vmatpush1.msra.mxu0 0.0
    %977 = vmatprep.subr.mxu0 0.0
    %978 = vmatpush1.msra.mxu0 0.0
    %979 = vmatprep.subr.mxu0 0.0
    %980 = vmatpush1.msra.mxu0 0.0
    %981 = vmatprep.subr.mxu0 0.0
    %982 = vmatpush1.msra.mxu0 0.0
    %983 = vmatprep.subr.mxu0 0.0
    %984 = vmatpush1.msra.mxu0 0.0
    %985 = vmatprep.subr.mxu0 0.0
    %986 = vmatpush1.msra.mxu0 0.0
    %987 = vmatprep.subr.mxu0 0.0
    %988 = vmatpush1.msra.mxu0 0.0
    %989 = vmatprep.subr.mxu0 0.0
    %990 = vmatpush1.msra.mxu0 0.0
    %991 = vmatprep.subr.mxu0 0.0
    %992 = vmatpush1.msra.mxu0 0.0
    %993 = vmatprep.subr.mxu0 0.0
    %994 = vmatpush1.msra.mxu0 0.0
    %995 = vmatprep.subr.mxu0 0.0
    %996 = vmatpush1.msra.mxu0 0.0
    %997 = vmatprep.subr.mxu0 0.0
    %998 = vmatpush1.msra.mxu0 0.0
    %999 = vmatprep.subr.mxu0 0.0
    %1000 = vmatpush1.msra.mxu0 0.0
    %1001 = vmatprep.subr.mxu0 0.0
    %1002 = vmatpush1.msra.mxu0 0.0
    %1003 = vmatprep.subr.mxu0 0.0
    %1004 = vmatpush1.msra.mxu0 0.0
    %1005 = vmatprep.subr.mxu0 0.0
    %1006 = vmatpush1.msra.mxu0 0.0
    %1007 = vmatprep.subr.mxu0 0.0
    %1008 = vmatpush1.msra.mxu0 0.0
    %1009 = vmatprep.subr.mxu0 0.0
    %1010 = vmatpush1.msra.mxu0 0.0
    %1011 = vmatprep.subr.mxu0 0.0
    %1012 = vmatpush1.msra.mxu0 0.0
    %1013 = vmatprep.subr.mxu0 0.0
    %1014 = vmatpush1.msra.mxu0 0.0
    %1015 = vmatprep.subr.mxu0 0.0
    %1016 = vmatpush1.msra.mxu0 0.0
    %1017 = vmatprep.subr.mxu0 0.0
    %1018 = vmatpush1.msra.mxu0 0.0
    %1019 = vmatprep.subr.mxu0 0.0
    %1020 = vmatpush1.msra.mxu0 0.0
    %1021 = vmatprep.mubr.f32.mxu0 0.0
    %1022 = vmatmul.mubr.f32.gmra.mrb[0].mxu0 %v955
    %v1023 = vpop.f32.mrb[0].mxu0
    %v1024 = vadd.f32 0.0, %v1023
    %v1025 = vpop.f32.mrb[0].mxu0
    %v1026 = vadd.f32 0.0, %v1025
    %1027 = vdwg.mxu0
    %1028 = vmatprep.subr.mxu0 %v951
    %1029 = vmatpush1.msra.mxu0 %v950
    %1030 = vmatprep.subr.mxu0 0.0
    %1031 = vmatpush1.msra.mxu0 0.0
    %1032 = vmatprep.subr.mxu0 0.0
    %1033 = vmatpush1.msra.mxu0 0.0
    %1034 = vmatprep.subr.mxu0 0.0
    %1035 = vmatpush1.msra.mxu0 0.0
    %1036 = vmatprep.subr.mxu0 0.0
    %1037 = vmatpush1.msra.mxu0 0.0
    %1038 = vmatprep.subr.mxu0 0.0
    %1039 = vmatpush1.msra.mxu0 0.0
    %1040 = vmatprep.subr.mxu0 0.0
    %1041 = vmatpush1.msra.mxu0 0.0
    %1042 = vmatprep.subr.mxu0 0.0
    %1043 = vmatpush1.msra.mxu0 0.0
    %1044 = vmatprep.subr.mxu0 0.0
    %1045 = vmatpush1.msra.mxu0 0.0
    %1046 = vmatprep.subr.mxu0 0.0
    %1047 = vmatpush1.msra.mxu0 0.0
    %1048 = vmatprep.subr.mxu0 0.0
    %1049 = vmatpush1.msra.mxu0 0.0
    %1050 = vmatprep.subr.mxu0 0.0
    %1051 = vmatpush1.msra.mxu0 0.0
    %1052 = vmatprep.subr.mxu0 0.0
    %1053 = vmatpush1.msra.mxu0 0.0
    %1054 = vmatprep.subr.mxu0 0.0
    %1055 = vmatpush1.msra.mxu0 0.0
    %1056 = vmatprep.subr.mxu0 0.0
    %1057 = vmatpush1.msra.mxu0 0.0
    %1058 = vmatprep.subr.mxu0 0.0
    %1059 = vmatpush1.msra.mxu0 0.0
    %1060 = vmatprep.subr.mxu0 0.0
    %1061 = vmatpush1.msra.mxu0 0.0
    %1062 = vmatprep.subr.mxu0 0.0
    %1063 = vmatpush1.msra.mxu0 0.0
    %1064 = vmatprep.subr.mxu0 0.0
    %1065 = vmatpush1.msra.mxu0 0.0
    %1066 = vmatprep.subr.mxu0 0.0
    %1067 = vmatpush1.msra.mxu0 0.0
    %1068 = vmatprep.subr.mxu0 0.0
    %1069 = vmatpush1.msra.mxu0 0.0
    %1070 = vmatprep.subr.mxu0 0.0
    %1071 = vmatpush1.msra.mxu0 0.0
    %1072 = vmatprep.subr.mxu0 0.0
    %1073 = vmatpush1.msra.mxu0 0.0
    %1074 = vmatprep.subr.mxu0 0.0
    %1075 = vmatpush1.msra.mxu0 0.0
    %1076 = vmatprep.subr.mxu0 0.0
    %1077 = vmatpush1.msra.mxu0 0.0
    %1078 = vmatprep.subr.mxu0 0.0
    %1079 = vmatpush1.msra.mxu0 0.0
    %1080 = vmatprep.subr.mxu0 0.0
    %1081 = vmatpush1.msra.mxu0 0.0
    %1082 = vmatprep.subr.mxu0 0.0
    %1083 = vmatpush1.msra.mxu0 0.0
    %1084 = vmatprep.subr.mxu0 0.0
    %1085 = vmatpush1.msra.mxu0 0.0
    %1086 = vmatprep.subr.mxu0 0.0
    %1087 = vmatpush1.msra.mxu0 0.0
    %1088 = vmatprep.subr.mxu0 0.0
    %1089 = vmatpush1.msra.mxu0 0.0
    %1090 = vmatprep.subr.mxu0 0.0
    %1091 = vmatpush1.msra.mxu0 0.0
    %1092 = vmatprep.mubr.f32.mxu0 0.0
    %1093 = vmatmul.mubr.f32.gmra.mrb[0].mxu0 %v955
    %v1094 = vpop.f32.mrb[0].mxu0
    %v1095 = vadd.f32 0.0, %v1094
    %v1096 = vpop.f32.mrb[0].mxu0
    %v1097 = vadd.f32 0.0, %v1096
    %1098 = vdwg.mxu0
    %v1099 = vadd.f32 %v915, %v1024
    %v1100 = vadd.f32 %v916, %v1026
    %v1101 = vadd.f32 %v917, %v1095
    %v1102 = vadd.f32 %v918, %v1097
    %1103 = vrot.lane.b32.xlu0 %v30, 113
    %v1104 = vpop.permute.xlu0 %1103
    %1105 = vrot.lane.b32.xlu0 %v31, 113
    %v1106 = vpop.permute.xlu0 %1105
    %1107 = vrot.lane.b32.xlu0 %v32, 113
    %v1108 = vpop.permute.xlu0 %1107
    %1109 = vrot.lane.b32.xlu0 %v33, 113
    %v1110 = vpop.permute.xlu0 %1109
    %vm1111 = vcmp.lt.s32.totalorder %v47, 113
    %v1112 = vsel %vm1111, %v1108, %v1110
    %v1113 = vsel %vm1111, %v1106, %v1108
    %v1114 = vsel %vm1111, %v1104, %v1106
    %v1115 = vsel %vm1111, %v1110, %v1104
    %v1116 = vlaneseq
    %v1117 = vshrl.u32 %v1116, 7
    %v1118 = vsub.s32 5, %v1117
    %v1119 = vrot.slane %v34, %v1118
    %v1120 = vlaneseq
    %v1121 = vshrl.u32 %v1120, 7
    %v1122 = vsub.s32 5, %v1121
    %v1123 = vrot.slane %v35, %v1122
    %v1124 = vlaneseq
    %v1125 = vshrl.u32 %v1124, 7
    %v1126 = vsub.s32 5, %v1125
    %v1127 = vrot.slane %v36, %v1126
    %v1128 = vlaneseq
    %v1129 = vshrl.u32 %v1128, 7
    %v1130 = vsub.s32 5, %v1129
    %v1131 = vrot.slane %v37, %v1130
    %v1132 = vmul.f32 %v1114, %v1119
    %v1133 = vmul.f32 %v1113, %v1123
    %v1134 = vmul.f32 %v1112, %v1127
    %v1135 = vmul.f32 %v1115, %v1131
    %s1136 = scalar_lea.vmem %s2, 48
    %v1137 = vld [vmem:[%s1136] sm:$0xff]
    %v1139 = vsel %vm109, %v1137, 0
    %1141 = vmatprep.subr.mxu0 %v1133
    %1142 = vmatpush1.msra.mxu0 %v1132
    %1143 = vmatprep.subr.mxu0 0.0
    %1144 = vmatpush1.msra.mxu0 0.0
    %1145 = vmatprep.subr.mxu0 0.0
    %1146 = vmatpush1.msra.mxu0 0.0
    %1147 = vmatprep.subr.mxu0 0.0
    %1148 = vmatpush1.msra.mxu0 0.0
    %1149 = vmatprep.subr.mxu0 0.0
    %1150 = vmatpush1.msra.mxu0 0.0
    %1151 = vmatprep.subr.mxu0 0.0
    %1152 = vmatpush1.msra.mxu0 0.0
    %1153 = vmatprep.subr.mxu0 0.0
    %1154 = vmatpush1.msra.mxu0 0.0
    %1155 = vmatprep.subr.mxu0 0.0
    %1156 = vmatpush1.msra.mxu0 0.0
    %1157 = vmatprep.subr.mxu0 0.0
    %1158 = vmatpush1.msra.mxu0 0.0
    %1159 = vmatprep.subr.mxu0 0.0
    %1160 = vmatpush1.msra.mxu0 0.0
    %1161 = vmatprep.subr.mxu0 0.0
    %1162 = vmatpush1.msra.mxu0 0.0
    %1163 = vmatprep.subr.mxu0 0.0
    %1164 = vmatpush1.msra.mxu0 0.0
    %1165 = vmatprep.subr.mxu0 0.0
    %1166 = vmatpush1.msra.mxu0 0.0
    %1167 = vmatprep.subr.mxu0 0.0
    %1168 = vmatpush1.msra.mxu0 0.0
    %1169 = vmatprep.subr.mxu0 0.0
    %1170 = vmatpush1.msra.mxu0 0.0
    %1171 = vmatprep.subr.mxu0 0.0
    %1172 = vmatpush1.msra.mxu0 0.0
    %1173 = vmatprep.subr.mxu0 0.0
    %1174 = vmatpush1.msra.mxu0 0.0
    %1175 = vmatprep.subr.mxu0 0.0
    %1176 = vmatpush1.msra.mxu0 0.0
    %1177 = vmatprep.subr.mxu0 0.0
    %1178 = vmatpush1.msra.mxu0 0.0
    %1179 = vmatprep.subr.mxu0 0.0
    %1180 = vmatpush1.msra.mxu0 0.0
    %1181 = vmatprep.subr.mxu0 0.0
    %1182 = vmatpush1.msra.mxu0 0.0
    %1183 = vmatprep.subr.mxu0 0.0
    %1184 = vmatpush1.msra.mxu0 0.0
    %1185 = vmatprep.subr.mxu0 0.0
    %1186 = vmatpush1.msra.mxu0 0.0
    %1187 = vmatprep.subr.mxu0 0.0
    %1188 = vmatpush1.msra.mxu0 0.0
    %1189 = vmatprep.subr.mxu0 0.0
    %1190 = vmatpush1.msra.mxu0 0.0
    %1191 = vmatprep.subr.mxu0 0.0
    %1192 = vmatpush1.msra.mxu0 0.0
    %1193 = vmatprep.subr.mxu0 0.0
    %1194 = vmatpush1.msra.mxu0 0.0
    %1195 = vmatprep.subr.mxu0 0.0
    %1196 = vmatpush1.msra.mxu0 0.0
    %1197 = vmatprep.subr.mxu0 0.0
    %1198 = vmatpush1.msra.mxu0 0.0
    %1199 = vmatprep.subr.mxu0 0.0
    %1200 = vmatpush1.msra.mxu0 0.0
    %1201 = vmatprep.subr.mxu0 0.0
    %1202 = vmatpush1.msra.mxu0 0.0
    %1203 = vmatprep.subr.mxu0 0.0
    %1204 = vmatpush1.msra.mxu0 0.0
    %1205 = vmatprep.mubr.f32.mxu0 0.0
    %1206 = vmatmul.mubr.f32.gmra.mrb[0].mxu0 %v1139
    %v1207 = vpop.f32.mrb[0].mxu0
    %v1208 = vadd.f32 0.0, %v1207
    %v1209 = vpop.f32.mrb[0].mxu0
    %v1210 = vadd.f32 0.0, %v1209
    %1211 = vdwg.mxu0
    %1212 = vmatprep.subr.mxu0 %v1135
    %1213 = vmatpush1.msra.mxu0 %v1134
    %1214 = vmatprep.subr.mxu0 0.0
    %1215 = vmatpush1.msra.mxu0 0.0
    %1216 = vmatprep.subr.mxu0 0.0
    %1217 = vmatpush1.msra.mxu0 0.0
    %1218 = vmatprep.subr.mxu0 0.0
    %1219 = vmatpush1.msra.mxu0 0.0
    %1220 = vmatprep.subr.mxu0 0.0
    %1221 = vmatpush1.msra.mxu0 0.0
    %1222 = vmatprep.subr.mxu0 0.0
    %1223 = vmatpush1.msra.mxu0 0.0
    %1224 = vmatprep.subr.mxu0 0.0
    %1225 = vmatpush1.msra.mxu0 0.0
    %1226 = vmatprep.subr.mxu0 0.0
    %1227 = vmatpush1.msra.mxu0 0.0
    %1228 = vmatprep.subr.mxu0 0.0
    %1229 = vmatpush1.msra.mxu0 0.0
    %1230 = vmatprep.subr.mxu0 0.0
    %1231 = vmatpush1.msra.mxu0 0.0
    %1232 = vmatprep.subr.mxu0 0.0
    %1233 = vmatpush1.msra.mxu0 0.0
    %1234 = vmatprep.subr.mxu0 0.0
    %1235 = vmatpush1.msra.mxu0 0.0
    %1236 = vmatprep.subr.mxu0 0.0
    %1237 = vmatpush1.msra.mxu0 0.0
    %1238 = vmatprep.subr.mxu0 0.0
    %1239 = vmatpush1.msra.mxu0 0.0
    %1240 = vmatprep.subr.mxu0 0.0
    %1241 = vmatpush1.msra.mxu0 0.0
    %1242 = vmatprep.subr.mxu0 0.0
    %1243 = vmatpush1.msra.mxu0 0.0
    %1244 = vmatprep.subr.mxu0 0.0
    %1245 = vmatpush1.msra.mxu0 0.0
    %1246 = vmatprep.subr.mxu0 0.0
    %1247 = vmatpush1.msra.mxu0 0.0
    %1248 = vmatprep.subr.mxu0 0.0
    %1249 = vmatpush1.msra.mxu0 0.0
    %1250 = vmatprep.subr.mxu0 0.0
    %1251 = vmatpush1.msra.mxu0 0.0
    %1252 = vmatprep.subr.mxu0 0.0
    %1253 = vmatpush1.msra.mxu0 0.0
    %1254 = vmatprep.subr.mxu0 0.0
    %1255 = vmatpush1.msra.mxu0 0.0
    %1256 = vmatprep.subr.mxu0 0.0
    %1257 = vmatpush1.msra.mxu0 0.0
    %1258 = vmatprep.subr.mxu0 0.0
    %1259 = vmatpush1.msra.mxu0 0.0
    %1260 = vmatprep.subr.mxu0 0.0
    %1261 = vmatpush1.msra.mxu0 0.0
    %1262 = vmatprep.subr.mxu0 0.0
    %1263 = vmatpush1.msra.mxu0 0.0
    %1264 = vmatprep.subr.mxu0 0.0
    %1265 = vmatpush1.msra.mxu0 0.0
    %1266 = vmatprep.subr.mxu0 0.0
    %1267 = vmatpush1.msra.mxu0 0.0
    %1268 = vmatprep.subr.mxu0 0.0
    %1269 = vmatpush1.msra.mxu0 0.0
    %1270 = vmatprep.subr.mxu0 0.0
    %1271 = vmatpush1.msra.mxu0 0.0
    %1272 = vmatprep.subr.mxu0 0.0
    %1273 = vmatpush1.msra.mxu0 0.0
    %1274 = vmatprep.subr.mxu0 0.0
    %1275 = vmatpush1.msra.mxu0 0.0
    %1276 = vmatprep.mubr.f32.mxu0 0.0
    %1277 = vmatmul.mubr.f32.gmra.mrb[0].mxu0 %v1139
    %v1278 = vpop.f32.mrb[0].mxu0
    %v1279 = vadd.f32 0.0, %v1278
    %v1280 = vpop.f32.mrb[0].mxu0
    %v1281 = vadd.f32 0.0, %v1280
    %1282 = vdwg.mxu0
    %v1283 = vadd.f32 %v1099, %v1208
    %v1284 = vadd.f32 %v1100, %v1210
    %v1285 = vadd.f32 %v1101, %v1279
    %v1286 = vadd.f32 %v1102, %v1281
    %1287 = vrot.lane.b32.xlu0 %v30, 112
    %v1288 = vpop.permute.xlu0 %1287
    %1289 = vrot.lane.b32.xlu0 %v31, 112
    %v1290 = vpop.permute.xlu0 %1289
    %1291 = vrot.lane.b32.xlu0 %v32, 112
    %v1292 = vpop.permute.xlu0 %1291
    %1293 = vrot.lane.b32.xlu0 %v33, 112
    %v1294 = vpop.permute.xlu0 %1293
    %vm1295 = vcmp.lt.s32.totalorder %v47, 112
    %v1296 = vsel %vm1295, %v1292, %v1294
    %v1297 = vsel %vm1295, %v1290, %v1292
    %v1298 = vsel %vm1295, %v1288, %v1290
    %v1299 = vsel %vm1295, %v1294, %v1288
    %v1300 = vlaneseq
    %v1301 = vshrl.u32 %v1300, 7
    %v1302 = vsub.s32 6, %v1301
    %v1303 = vrot.slane %v34, %v1302
    %v1304 = vlaneseq
    %v1305 = vshrl.u32 %v1304, 7
    %v1306 = vsub.s32 6, %v1305
    %v1307 = vrot.slane %v35, %v1306
    %v1308 = vlaneseq
    %v1309 = vshrl.u32 %v1308, 7
    %v1310 = vsub.s32 6, %v1309
    %v1311 = vrot.slane %v36, %v1310
    %v1312 = vlaneseq
    %v1313 = vshrl.u32 %v1312, 7
    %v1314 = vsub.s32 6, %v1313
    %v1315 = vrot.slane %v37, %v1314
    %v1316 = vmul.f32 %v1298, %v1303
    %v1317 = vmul.f32 %v1297, %v1307
    %v1318 = vmul.f32 %v1296, %v1311
    %v1319 = vmul.f32 %v1299, %v1315
    %s1320 = scalar_lea.vmem %s2, 56
    %v1321 = vld [vmem:[%s1320] sm:$0xff]
    %v1323 = vsel %vm109, %v1321, 0
    %1325 = vmatprep.subr.mxu0 %v1317
    %1326 = vmatpush1.msra.mxu0 %v1316
    %1327 = vmatprep.subr.mxu0 0.0
    %1328 = vmatpush1.msra.mxu0 0.0
    %1329 = vmatprep.subr.mxu0 0.0
    %1330 = vmatpush1.msra.mxu0 0.0
    %1331 = vmatprep.subr.mxu0 0.0
    %1332 = vmatpush1.msra.mxu0 0.0
    %1333 = vmatprep.subr.mxu0 0.0
    %1334 = vmatpush1.msra.mxu0 0.0
    %1335 = vmatprep.subr.mxu0 0.0
    %1336 = vmatpush1.msra.mxu0 0.0
    %1337 = vmatprep.subr.mxu0 0.0
    %1338 = vmatpush1.msra.mxu0 0.0
    %1339 = vmatprep.subr.mxu0 0.0
    %1340 = vmatpush1.msra.mxu0 0.0
    %1341 = vmatprep.subr.mxu0 0.0
    %1342 = vmatpush1.msra.mxu0 0.0
    %1343 = vmatprep.subr.mxu0 0.0
    %1344 = vmatpush1.msra.mxu0 0.0
    %1345 = vmatprep.subr.mxu0 0.0
    %1346 = vmatpush1.msra.mxu0 0.0
    %1347 = vmatprep.subr.mxu0 0.0
    %1348 = vmatpush1.msra.mxu0 0.0
    %1349 = vmatprep.subr.mxu0 0.0
    %1350 = vmatpush1.msra.mxu0 0.0
    %1351 = vmatprep.subr.mxu0 0.0
    %1352 = vmatpush1.msra.mxu0 0.0
    %1353 = vmatprep.subr.mxu0 0.0
    %1354 = vmatpush1.msra.mxu0 0.0
    %1355 = vmatprep.subr.mxu0 0.0
    %1356 = vmatpush1.msra.mxu0 0.0
    %1357 = vmatprep.subr.mxu0 0.0
    %1358 = vmatpush1.msra.mxu0 0.0
    %1359 = vmatprep.subr.mxu0 0.0
    %1360 = vmatpush1.msra.mxu0 0.0
    %1361 = vmatprep.subr.mxu0 0.0
    %1362 = vmatpush1.msra.mxu0 0.0
    %1363 = vmatprep.subr.mxu0 0.0
    %1364 = vmatpush1.msra.mxu0 0.0
    %1365 = vmatprep.subr.mxu0 0.0
    %1366 = vmatpush1.msra.mxu0 0.0
    %1367 = vmatprep.subr.mxu0 0.0
    %1368 = vmatpush1.msra.mxu0 0.0
    %1369 = vmatprep.subr.mxu0 0.0
    %1370 = vmatpush1.msra.mxu0 0.0
    %1371 = vmatprep.subr.mxu0 0.0
    %1372 = vmatpush1.msra.mxu0 0.0
    %1373 = vmatprep.subr.mxu0 0.0
    %1374 = vmatpush1.msra.mxu0 0.0
    %1375 = vmatprep.subr.mxu0 0.0
    %1376 = vmatpush1.msra.mxu0 0.0
    %1377 = vmatprep.subr.mxu0 0.0
    %1378 = vmatpush1.msra.mxu0 0.0
    %1379 = vmatprep.subr.mxu0 0.0
    %1380 = vmatpush1.msra.mxu0 0.0
    %1381 = vmatprep.subr.mxu0 0.0
    %1382 = vmatpush1.msra.mxu0 0.0
    %1383 = vmatprep.subr.mxu0 0.0
    %1384 = vmatpush1.msra.mxu0 0.0
    %1385 = vmatprep.subr.mxu0 0.0
    %1386 = vmatpush1.msra.mxu0 0.0
    %1387 = vmatprep.subr.mxu0 0.0
    %1388 = vmatpush1.msra.mxu0 0.0
    %1389 = vmatprep.mubr.f32.mxu0 0.0
    %1390 = vmatmul.mubr.f32.gmra.mrb[0].mxu0 %v1323
    %v1391 = vpop.f32.mrb[0].mxu0
    %v1392 = vadd.f32 0.0, %v1391
    %v1393 = vpop.f32.mrb[0].mxu0
    %v1394 = vadd.f32 0.0, %v1393
    %1395 = vdwg.mxu0
    %1396 = vmatprep.subr.mxu0 %v1319
    %1397 = vmatpush1.msra.mxu0 %v1318
    %1398 = vmatprep.subr.mxu0 0.0
    %1399 = vmatpush1.msra.mxu0 0.0
    %1400 = vmatprep.subr.mxu0 0.0
    %1401 = vmatpush1.msra.mxu0 0.0
    %1402 = vmatprep.subr.mxu0 0.0
    %1403 = vmatpush1.msra.mxu0 0.0
    %1404 = vmatprep.subr.mxu0 0.0
    %1405 = vmatpush1.msra.mxu0 0.0
    %1406 = vmatprep.subr.mxu0 0.0
    %1407 = vmatpush1.msra.mxu0 0.0
    %1408 = vmatprep.subr.mxu0 0.0
    %1409 = vmatpush1.msra.mxu0 0.0
    %1410 = vmatprep.subr.mxu0 0.0
    %1411 = vmatpush1.msra.mxu0 0.0
    %1412 = vmatprep.subr.mxu0 0.0
    %1413 = vmatpush1.msra.mxu0 0.0
    %1414 = vmatprep.subr.mxu0 0.0
    %1415 = vmatpush1.msra.mxu0 0.0
    %1416 = vmatprep.subr.mxu0 0.0
    %1417 = vmatpush1.msra.mxu0 0.0
    %1418 = vmatprep.subr.mxu0 0.0
    %1419 = vmatpush1.msra.mxu0 0.0
    %1420 = vmatprep.subr.mxu0 0.0
    %1421 = vmatpush1.msra.mxu0 0.0
    %1422 = vmatprep.subr.mxu0 0.0
    %1423 = vmatpush1.msra.mxu0 0.0
    %1424 = vmatprep.subr.mxu0 0.0
    %1425 = vmatpush1.msra.mxu0 0.0
    %1426 = vmatprep.subr.mxu0 0.0
    %1427 = vmatpush1.msra.mxu0 0.0
    %1428 = vmatprep.subr.mxu0 0.0
    %1429 = vmatpush1.msra.mxu0 0.0
    %1430 = vmatprep.subr.mxu0 0.0
    %1431 = vmatpush1.msra.mxu0 0.0
    %1432 = vmatprep.subr.mxu0 0.0
    %1433 = vmatpush1.msra.mxu0 0.0
    %1434 = vmatprep.subr.mxu0 0.0
    %1435 = vmatpush1.msra.mxu0 0.0
    %1436 = vmatprep.subr.mxu0 0.0
    %1437 = vmatpush1.msra.mxu0 0.0
    %1438 = vmatprep.subr.mxu0 0.0
    %1439 = vmatpush1.msra.mxu0 0.0
    %1440 = vmatprep.subr.mxu0 0.0
    %1441 = vmatpush1.msra.mxu0 0.0
    %1442 = vmatprep.subr.mxu0 0.0
    %1443 = vmatpush1.msra.mxu0 0.0
    %1444 = vmatprep.subr.mxu0 0.0
    %1445 = vmatpush1.msra.mxu0 0.0
    %1446 = vmatprep.subr.mxu0 0.0
    %1447 = vmatpush1.msra.mxu0 0.0
    %1448 = vmatprep.subr.mxu0 0.0
    %1449 = vmatpush1.msra.mxu0 0.0
    %1450 = vmatprep.subr.mxu0 0.0
    %1451 = vmatpush1.msra.mxu0 0.0
    %1452 = vmatprep.subr.mxu0 0.0
    %1453 = vmatpush1.msra.mxu0 0.0
    %1454 = vmatprep.subr.mxu0 0.0
    %1455 = vmatpush1.msra.mxu0 0.0
    %1456 = vmatprep.subr.mxu0 0.0
    %1457 = vmatpush1.msra.mxu0 0.0
    %1458 = vmatprep.subr.mxu0 0.0
    %1459 = vmatpush1.msra.mxu0 0.0
    %1460 = vmatprep.mubr.f32.mxu0 0.0
    %1461 = vmatmul.mubr.f32.gmra.mrb[0].mxu0 %v1323
    %v1462 = vpop.f32.mrb[0].mxu0
    %v1463 = vadd.f32 0.0, %v1462
    %v1464 = vpop.f32.mrb[0].mxu0
    %v1465 = vadd.f32 0.0, %v1464
    %1466 = vdwg.mxu0
    %v1467 = vadd.f32 %v1283, %v1392
    %v1468 = vadd.f32 %v1284, %v1394
    %v1469 = vadd.f32 %v1285, %v1463
    %v1470 = vadd.f32 %v1286, %v1465
    %1471 = vrot.lane.b32.xlu0 %v30, 111
    %v1472 = vpop.permute.xlu0 %1471
    %1473 = vrot.lane.b32.xlu0 %v31, 111
    %v1474 = vpop.permute.xlu0 %1473
    %1475 = vrot.lane.b32.xlu0 %v32, 111
    %v1476 = vpop.permute.xlu0 %1475
    %1477 = vrot.lane.b32.xlu0 %v33, 111
    %v1478 = vpop.permute.xlu0 %1477
    %vm1479 = vcmp.lt.s32.totalorder %v47, 111
    %v1480 = vsel %vm1479, %v1476, %v1478
    %v1481 = vsel %vm1479, %v1474, %v1476
    %v1482 = vsel %vm1479, %v1472, %v1474
    %v1483 = vsel %vm1479, %v1478, %v1472
    %v1484 = vlaneseq
    %v1485 = vshrl.u32 %v1484, 7
    %v1486 = vsub.s32 7, %v1485
    %v1487 = vrot.slane %v34, %v1486
    %v1488 = vlaneseq
    %v1489 = vshrl.u32 %v1488, 7
    %v1490 = vsub.s32 7, %v1489
    %v1491 = vrot.slane %v35, %v1490
    %v1492 = vlaneseq
    %v1493 = vshrl.u32 %v1492, 7
    %v1494 = vsub.s32 7, %v1493
    %v1495 = vrot.slane %v36, %v1494
    %v1496 = vlaneseq
    %v1497 = vshrl.u32 %v1496, 7
    %v1498 = vsub.s32 7, %v1497
    %v1499 = vrot.slane %v37, %v1498
    %v1500 = vmul.f32 %v1482, %v1487
    %v1501 = vmul.f32 %v1481, %v1491
    %v1502 = vmul.f32 %v1480, %v1495
    %v1503 = vmul.f32 %v1483, %v1499
    %s1504 = scalar_lea.vmem %s2, 64
    %v1505 = vld [vmem:[%s1504] sm:$0xff]
    %v1507 = vsel %vm109, %v1505, 0
    %1509 = vmatprep.subr.mxu0 %v1501
    %1510 = vmatpush1.msra.mxu0 %v1500
    %1511 = vmatprep.subr.mxu0 0.0
    %1512 = vmatpush1.msra.mxu0 0.0
    %1513 = vmatprep.subr.mxu0 0.0
    %1514 = vmatpush1.msra.mxu0 0.0
    %1515 = vmatprep.subr.mxu0 0.0
    %1516 = vmatpush1.msra.mxu0 0.0
    %1517 = vmatprep.subr.mxu0 0.0
    %1518 = vmatpush1.msra.mxu0 0.0
    %1519 = vmatprep.subr.mxu0 0.0
    %1520 = vmatpush1.msra.mxu0 0.0
    %1521 = vmatprep.subr.mxu0 0.0
    %1522 = vmatpush1.msra.mxu0 0.0
    %1523 = vmatprep.subr.mxu0 0.0
    %1524 = vmatpush1.msra.mxu0 0.0
    %1525 = vmatprep.subr.mxu0 0.0
    %1526 = vmatpush1.msra.mxu0 0.0
    %1527 = vmatprep.subr.mxu0 0.0
    %1528 = vmatpush1.msra.mxu0 0.0
    %1529 = vmatprep.subr.mxu0 0.0
    %1530 = vmatpush1.msra.mxu0 0.0
    %1531 = vmatprep.subr.mxu0 0.0
    %1532 = vmatpush1.msra.mxu0 0.0
    %1533 = vmatprep.subr.mxu0 0.0
    %1534 = vmatpush1.msra.mxu0 0.0
    %1535 = vmatprep.subr.mxu0 0.0
    %1536 = vmatpush1.msra.mxu0 0.0
    %1537 = vmatprep.subr.mxu0 0.0
    %1538 = vmatpush1.msra.mxu0 0.0
    %1539 = vmatprep.subr.mxu0 0.0
    %1540 = vmatpush1.msra.mxu0 0.0
    %1541 = vmatprep.subr.mxu0 0.0
    %1542 = vmatpush1.msra.mxu0 0.0
    %1543 = vmatprep.subr.mxu0 0.0
    %1544 = vmatpush1.msra.mxu0 0.0
    %1545 = vmatprep.subr.mxu0 0.0
    %1546 = vmatpush1.msra.mxu0 0.0
    %1547 = vmatprep.subr.mxu0 0.0
    %1548 = vmatpush1.msra.mxu0 0.0
    %1549 = vmatprep.subr.mxu0 0.0
    %1550 = vmatpush1.msra.mxu0 0.0
    %1551 = vmatprep.subr.mxu0 0.0
    %1552 = vmatpush1.msra.mxu0 0.0
    %1553 = vmatprep.subr.mxu0 0.0
    %1554 = vmatpush1.msra.mxu0 0.0
    %1555 = vmatprep.subr.mxu0 0.0
    %1556 = vmatpush1.msra.mxu0 0.0
    %1557 = vmatprep.subr.mxu0 0.0
    %1558 = vmatpush1.msra.mxu0 0.0
    %1559 = vmatprep.subr.mxu0 0.0
    %1560 = vmatpush1.msra.mxu0 0.0
    %1561 = vmatprep.subr.mxu0 0.0
    %1562 = vmatpush1.msra.mxu0 0.0
    %1563 = vmatprep.subr.mxu0 0.0
    %1564 = vmatpush1.msra.mxu0 0.0
    %1565 = vmatprep.subr.mxu0 0.0
    %1566 = vmatpush1.msra.mxu0 0.0
    %1567 = vmatprep.subr.mxu0 0.0
    %1568 = vmatpush1.msra.mxu0 0.0
    %1569 = vmatprep.subr.mxu0 0.0
    %1570 = vmatpush1.msra.mxu0 0.0
    %1571 = vmatprep.subr.mxu0 0.0
    %1572 = vmatpush1.msra.mxu0 0.0
    %1573 = vmatprep.mubr.f32.mxu0 0.0
    %1574 = vmatmul.mubr.f32.gmra.mrb[0].mxu0 %v1507
    %v1575 = vpop.f32.mrb[0].mxu0
    %v1576 = vadd.f32 0.0, %v1575
    %v1577 = vpop.f32.mrb[0].mxu0
    %v1578 = vadd.f32 0.0, %v1577
    %1579 = vdwg.mxu0
    %1580 = vmatprep.subr.mxu0 %v1503
    %1581 = vmatpush1.msra.mxu0 %v1502
    %1582 = vmatprep.subr.mxu0 0.0
    %1583 = vmatpush1.msra.mxu0 0.0
    %1584 = vmatprep.subr.mxu0 0.0
    %1585 = vmatpush1.msra.mxu0 0.0
    %1586 = vmatprep.subr.mxu0 0.0
    %1587 = vmatpush1.msra.mxu0 0.0
    %1588 = vmatprep.subr.mxu0 0.0
    %1589 = vmatpush1.msra.mxu0 0.0
    %1590 = vmatprep.subr.mxu0 0.0
    %1591 = vmatpush1.msra.mxu0 0.0
    %1592 = vmatprep.subr.mxu0 0.0
    %1593 = vmatpush1.msra.mxu0 0.0
    %1594 = vmatprep.subr.mxu0 0.0
    %1595 = vmatpush1.msra.mxu0 0.0
    %1596 = vmatprep.subr.mxu0 0.0
    %1597 = vmatpush1.msra.mxu0 0.0
    %1598 = vmatprep.subr.mxu0 0.0
    %1599 = vmatpush1.msra.mxu0 0.0
    %1600 = vmatprep.subr.mxu0 0.0
    %1601 = vmatpush1.msra.mxu0 0.0
    %1602 = vmatprep.subr.mxu0 0.0
    %1603 = vmatpush1.msra.mxu0 0.0
    %1604 = vmatprep.subr.mxu0 0.0
    %1605 = vmatpush1.msra.mxu0 0.0
    %1606 = vmatprep.subr.mxu0 0.0
    %1607 = vmatpush1.msra.mxu0 0.0
    %1608 = vmatprep.subr.mxu0 0.0
    %1609 = vmatpush1.msra.mxu0 0.0
    %1610 = vmatprep.subr.mxu0 0.0
    %1611 = vmatpush1.msra.mxu0 0.0
    %1612 = vmatprep.subr.mxu0 0.0
    %1613 = vmatpush1.msra.mxu0 0.0
    %1614 = vmatprep.subr.mxu0 0.0
    %1615 = vmatpush1.msra.mxu0 0.0
    %1616 = vmatprep.subr.mxu0 0.0
    %1617 = vmatpush1.msra.mxu0 0.0
    %1618 = vmatprep.subr.mxu0 0.0
    %1619 = vmatpush1.msra.mxu0 0.0
    %1620 = vmatprep.subr.mxu0 0.0
    %1621 = vmatpush1.msra.mxu0 0.0
    %1622 = vmatprep.subr.mxu0 0.0
    %1623 = vmatpush1.msra.mxu0 0.0
    %1624 = vmatprep.subr.mxu0 0.0
    %1625 = vmatpush1.msra.mxu0 0.0
    %1626 = vmatprep.subr.mxu0 0.0
    %1627 = vmatpush1.msra.mxu0 0.0
    %1628 = vmatprep.subr.mxu0 0.0
    %1629 = vmatpush1.msra.mxu0 0.0
    %1630 = vmatprep.subr.mxu0 0.0
    %1631 = vmatpush1.msra.mxu0 0.0
    %1632 = vmatprep.subr.mxu0 0.0
    %1633 = vmatpush1.msra.mxu0 0.0
    %1634 = vmatprep.subr.mxu0 0.0
    %1635 = vmatpush1.msra.mxu0 0.0
    %1636 = vmatprep.subr.mxu0 0.0
    %1637 = vmatpush1.msra.mxu0 0.0
    %1638 = vmatprep.subr.mxu0 0.0
    %1639 = vmatpush1.msra.mxu0 0.0
    %1640 = vmatprep.subr.mxu0 0.0
    %1641 = vmatpush1.msra.mxu0 0.0
    %1642 = vmatprep.subr.mxu0 0.0
    %1643 = vmatpush1.msra.mxu0 0.0
    %1644 = vmatprep.mubr.f32.mxu0 0.0
    %1645 = vmatmul.mubr.f32.gmra.mrb[0].mxu0 %v1507
    %v1646 = vpop.f32.mrb[0].mxu0
    %v1647 = vadd.f32 0.0, %v1646
    %v1648 = vpop.f32.mrb[0].mxu0
    %v1649 = vadd.f32 0.0, %v1648
    %1650 = vdwg.mxu0
    %v1651 = vadd.f32 %v1467, %v1576
    %v1652 = vadd.f32 %v1468, %v1578
    %v1653 = vadd.f32 %v1469, %v1647
    %v1654 = vadd.f32 %v1470, %v1649
    %v1655 = vld [vmem:[%s3] sm:$0xff]
    %v1656 = vld [vmem:[%s4] sm:$0xff]
    %v1657 = vadd.f32 %v1651, %v1652
    %v1658 = vadd.f32 %v1657, %v1653
    %v1659 = vadd.f32 %v1658, %v1654
    %1660 = vadd.xlane.f32.xlu0 %v1659
    %v1661 = vpop.xlane.xlu0 %1660
    %v1662 = vmul.f32 %v1661, 0.001953125
    %v1663 = vsub.f32 %v1651, %v1662
    %v1664 = vsub.f32 %v1652, %v1662
    %v1665 = vsub.f32 %v1653, %v1662
    %v1666 = vsub.f32 %v1654, %v1662
    %v1667 = vmul.f32 %v1663, %v1663
    %v1668 = vmul.f32 %v1664, %v1664
    %v1669 = vmul.f32 %v1665, %v1665
    %v1670 = vmul.f32 %v1666, %v1666
    %v1671 = vadd.f32 %v1667, %v1668
    %v1672 = vadd.f32 %v1671, %v1669
    %v1673 = vadd.f32 %v1672, %v1670
    %1674 = vadd.xlane.f32.xlu0 %v1673
    %v1675 = vpop.xlane.xlu0 %1674
    %v1676 = vmul.f32 %v1675, 0.001953125
    %v1677 = vadd.f32 %v1676, 1e-05
    %v1678 = vrsqrt.pop %v1677
    %v1679 = vmul.f32 %v1663, %v1678
    %v1680 = vmul.f32 %v1664, %v1678
    %v1681 = vmul.f32 %v1665, %v1678
    %v1682 = vmul.f32 %v1666, %v1678
    %1684 = vset.pattern.permute.xlu0 0
    %1685 = vperm.xlu0 %1684, %v1655
    %v1686 = vpop.permute.xlu0 %1685
    %v1688 = vmul.f32 %v1679, %v1686
    %v1689 = vmul.f32 %v1680, %v1686
    %v1690 = vmul.f32 %v1681, %v1686
    %v1691 = vmul.f32 %v1682, %v1686
    %1693 = vset.pattern.permute.xlu0 0
    %1694 = vperm.xlu0 %1693, %v1656
    %v1695 = vpop.permute.xlu0 %1694
    %v1697 = vadd.f32 %v1688, %v1695
    %v1698 = vadd.f32 %v1689, %v1695
    %v1699 = vadd.f32 %v1690, %v1695
    %v1700 = vadd.f32 %v1691, %v1695
    %v1701 = vmax.f32 %v1697, 0.0
    %v1702 = vmax.f32 %v1698, 0.0
    %v1703 = vmax.f32 %v1699, 0.0
    %v1704 = vmax.f32 %v1700, 0.0
    %1705 = vrot.lane.b32.xlu0 %v1701, 17
    %v1706 = vpop.permute.xlu0 %1705
    %1707 = vrot.lane.b32.xlu0 %v1702, 17
    %v1708 = vpop.permute.xlu0 %1707
    %1709 = vrot.lane.b32.xlu0 %v1703, 17
    %v1710 = vpop.permute.xlu0 %1709
    %1711 = vrot.lane.b32.xlu0 %v1704, 17
    %v1712 = vpop.permute.xlu0 %1711
    %v1713 = vsel %vm48, %v1710, %v1712
    %v1714 = vsel %vm48, %v1708, %v1710
    %v1715 = vsel %vm48, %v1706, %v1708
    %v1716 = vsel %vm48, %v1712, %v1706
    %v1717 = vmul.f32 %v1716, %v56
    %v1718 = vmul.f32 %v1715, %v60
    %v1719 = vmul.f32 %v1714, %v64
    %v1720 = vmul.f32 %v1713, %v68
    %v1721 = vld [vmem:[%s5] sm:$0xff]
    %1722 = vrot.lane.b32.xlu0 %v1701, 16
    %v1723 = vpop.permute.xlu0 %1722
    %1724 = vrot.lane.b32.xlu0 %v1702, 16
    %v1725 = vpop.permute.xlu0 %1724
    %1726 = vrot.lane.b32.xlu0 %v1703, 16
    %v1727 = vpop.permute.xlu0 %1726
    %1728 = vrot.lane.b32.xlu0 %v1704, 16
    %v1729 = vpop.permute.xlu0 %1728
    %v1730 = vsel %vm82, %v1727, %v1729
    %v1731 = vsel %vm82, %v1725, %v1727
    %v1732 = vsel %vm82, %v1723, %v1725
    %v1733 = vsel %vm82, %v1729, %v1723
    %v1734 = vmul.f32 %v1733, %v90
    %v1735 = vmul.f32 %v1732, %v94
    %v1736 = vmul.f32 %v1731, %v98
    %v1737 = vmul.f32 %v1730, %v102
    %s1738 = scalar_lea.vmem %s5, 8
    %v1739 = vld [vmem:[%s1738] sm:$0xff]
    %v1741 = vsel %vm109, %v1739, 0
    %1743 = vmatprep.subr.mxu0 %v1735
    %1744 = vmatpush1.msra.mxu0 %v1734
    %1745 = vmatprep.subr.mxu0 0.0
    %1746 = vmatpush1.msra.mxu0 0.0
    %1747 = vmatprep.subr.mxu0 0.0
    %1748 = vmatpush1.msra.mxu0 0.0
    %1749 = vmatprep.subr.mxu0 0.0
    %1750 = vmatpush1.msra.mxu0 0.0
    %1751 = vmatprep.subr.mxu0 0.0
    %1752 = vmatpush1.msra.mxu0 0.0
    %1753 = vmatprep.subr.mxu0 0.0
    %1754 = vmatpush1.msra.mxu0 0.0
    %1755 = vmatprep.subr.mxu0 0.0
    %1756 = vmatpush1.msra.mxu0 0.0
    %1757 = vmatprep.subr.mxu0 0.0
    %1758 = vmatpush1.msra.mxu0 0.0
    %1759 = vmatprep.subr.mxu0 0.0
    %1760 = vmatpush1.msra.mxu0 0.0
    %1761 = vmatprep.subr.mxu0 0.0
    %1762 = vmatpush1.msra.mxu0 0.0
    %1763 = vmatprep.subr.mxu0 0.0
    %1764 = vmatpush1.msra.mxu0 0.0
    %1765 = vmatprep.subr.mxu0 0.0
    %1766 = vmatpush1.msra.mxu0 0.0
    %1767 = vmatprep.subr.mxu0 0.0
    %1768 = vmatpush1.msra.mxu0 0.0
    %1769 = vmatprep.subr.mxu0 0.0
    %1770 = vmatpush1.msra.mxu0 0.0
    %1771 = vmatprep.subr.mxu0 0.0
    %1772 = vmatpush1.msra.mxu0 0.0
    %1773 = vmatprep.subr.mxu0 0.0
    %1774 = vmatpush1.msra.mxu0 0.0
    %1775 = vmatprep.subr.mxu0 0.0
    %1776 = vmatpush1.msra.mxu0 0.0
    %1777 = vmatprep.subr.mxu0 0.0
    %1778 = vmatpush1.msra.mxu0 0.0
    %1779 = vmatprep.subr.mxu0 0.0
    %1780 = vmatpush1.msra.mxu0 0.0
    %1781 = vmatprep.subr.mxu0 0.0
    %1782 = vmatpush1.msra.mxu0 0.0
    %1783 = vmatprep.subr.mxu0 0.0
    %1784 = vmatpush1.msra.mxu0 0.0
    %1785 = vmatprep.subr.mxu0 0.0
    %1786 = vmatpush1.msra.mxu0 0.0
    %1787 = vmatprep.subr.mxu0 0.0
    %1788 = vmatpush1.msra.mxu0 0.0
    %1789 = vmatprep.subr.mxu0 0.0
    %1790 = vmatpush1.msra.mxu0 0.0
    %1791 = vmatprep.subr.mxu0 0.0
    %1792 = vmatpush1.msra.mxu0 0.0
    %1793 = vmatprep.subr.mxu0 0.0
    %1794 = vmatpush1.msra.mxu0 0.0
    %1795 = vmatprep.subr.mxu0 0.0
    %1796 = vmatpush1.msra.mxu0 0.0
    %1797 = vmatprep.subr.mxu0 0.0
    %1798 = vmatpush1.msra.mxu0 0.0
    %1799 = vmatprep.subr.mxu0 0.0
    %1800 = vmatpush1.msra.mxu0 0.0
    %1801 = vmatprep.subr.mxu0 0.0
    %1802 = vmatpush1.msra.mxu0 0.0
    %1803 = vmatprep.subr.mxu0 0.0
    %1804 = vmatpush1.msra.mxu0 0.0
    %1805 = vmatprep.subr.mxu0 0.0
    %1806 = vmatpush1.msra.mxu0 0.0
    %1807 = vmatprep.mubr.f32.mxu0 0.0
    %1808 = vmatmul.mubr.f32.gmra.mrb[0].mxu0 %v1741
    %v1809 = vpop.f32.mrb[0].mxu0
    %v1810 = vadd.f32 0.0, %v1809
    %v1811 = vpop.f32.mrb[0].mxu0
    %v1812 = vadd.f32 0.0, %v1811
    %1813 = vdwg.mxu0
    %1814 = vmatprep.subr.mxu0 %v1737
    %1815 = vmatpush1.msra.mxu0 %v1736
    %1816 = vmatprep.subr.mxu0 0.0
    %1817 = vmatpush1.msra.mxu0 0.0
    %1818 = vmatprep.subr.mxu0 0.0
    %1819 = vmatpush1.msra.mxu0 0.0
    %1820 = vmatprep.subr.mxu0 0.0
    %1821 = vmatpush1.msra.mxu0 0.0
    %1822 = vmatprep.subr.mxu0 0.0
    %1823 = vmatpush1.msra.mxu0 0.0
    %1824 = vmatprep.subr.mxu0 0.0
    %1825 = vmatpush1.msra.mxu0 0.0
    %1826 = vmatprep.subr.mxu0 0.0
    %1827 = vmatpush1.msra.mxu0 0.0
    %1828 = vmatprep.subr.mxu0 0.0
    %1829 = vmatpush1.msra.mxu0 0.0
    %1830 = vmatprep.subr.mxu0 0.0
    %1831 = vmatpush1.msra.mxu0 0.0
    %1832 = vmatprep.subr.mxu0 0.0
    %1833 = vmatpush1.msra.mxu0 0.0
    %1834 = vmatprep.subr.mxu0 0.0
    %1835 = vmatpush1.msra.mxu0 0.0
    %1836 = vmatprep.subr.mxu0 0.0
    %1837 = vmatpush1.msra.mxu0 0.0
    %1838 = vmatprep.subr.mxu0 0.0
    %1839 = vmatpush1.msra.mxu0 0.0
    %1840 = vmatprep.subr.mxu0 0.0
    %1841 = vmatpush1.msra.mxu0 0.0
    %1842 = vmatprep.subr.mxu0 0.0
    %1843 = vmatpush1.msra.mxu0 0.0
    %1844 = vmatprep.subr.mxu0 0.0
    %1845 = vmatpush1.msra.mxu0 0.0
    %1846 = vmatprep.subr.mxu0 0.0
    %1847 = vmatpush1.msra.mxu0 0.0
    %1848 = vmatprep.subr.mxu0 0.0
    %1849 = vmatpush1.msra.mxu0 0.0
    %1850 = vmatprep.subr.mxu0 0.0
    %1851 = vmatpush1.msra.mxu0 0.0
    %1852 = vmatprep.subr.mxu0 0.0
    %1853 = vmatpush1.msra.mxu0 0.0
    %1854 = vmatprep.subr.mxu0 0.0
    %1855 = vmatpush1.msra.mxu0 0.0
    %1856 = vmatprep.subr.mxu0 0.0
    %1857 = vmatpush1.msra.mxu0 0.0
    %1858 = vmatprep.subr.mxu0 0.0
    %1859 = vmatpush1.msra.mxu0 0.0
    %1860 = vmatprep.subr.mxu0 0.0
    %1861 = vmatpush1.msra.mxu0 0.0
    %1862 = vmatprep.subr.mxu0 0.0
    %1863 = vmatpush1.msra.mxu0 0.0
    %1864 = vmatprep.subr.mxu0 0.0
    %1865 = vmatpush1.msra.mxu0 0.0
    %1866 = vmatprep.subr.mxu0 0.0
    %1867 = vmatpush1.msra.mxu0 0.0
    %1868 = vmatprep.subr.mxu0 0.0
    %1869 = vmatpush1.msra.mxu0 0.0
    %1870 = vmatprep.subr.mxu0 0.0
    %1871 = vmatpush1.msra.mxu0 0.0
    %1872 = vmatprep.subr.mxu0 0.0
    %1873 = vmatpush1.msra.mxu0 0.0
    %1874 = vmatprep.subr.mxu0 0.0
    %1875 = vmatpush1.msra.mxu0 0.0
    %1876 = vmatprep.subr.mxu0 0.0
    %1877 = vmatpush1.msra.mxu0 0.0
    %1878 = vmatprep.mubr.f32.mxu0 0.0
    %1879 = vmatmul.mubr.f32.gmra.mrb[0].mxu0 %v1741
    %v1880 = vpop.f32.mrb[0].mxu0
    %v1881 = vadd.f32 0.0, %v1880
    %v1882 = vpop.f32.mrb[0].mxu0
    %v1883 = vadd.f32 0.0, %v1882
    %1884 = vdwg.mxu0
    %v1886 = vsel %vm109, %v1721, 0
    %1888 = vmatprep.subr.mxu0 %v1718
    %1889 = vmatpush1.msra.mxu0 %v1717
    %1890 = vmatprep.subr.mxu0 0.0
    %1891 = vmatpush1.msra.mxu0 0.0
    %1892 = vmatprep.subr.mxu0 0.0
    %1893 = vmatpush1.msra.mxu0 0.0
    %1894 = vmatprep.subr.mxu0 0.0
    %1895 = vmatpush1.msra.mxu0 0.0
    %1896 = vmatprep.subr.mxu0 0.0
    %1897 = vmatpush1.msra.mxu0 0.0
    %1898 = vmatprep.subr.mxu0 0.0
    %1899 = vmatpush1.msra.mxu0 0.0
    %1900 = vmatprep.subr.mxu0 0.0
    %1901 = vmatpush1.msra.mxu0 0.0
    %1902 = vmatprep.subr.mxu0 0.0
    %1903 = vmatpush1.msra.mxu0 0.0
    %1904 = vmatprep.subr.mxu0 0.0
    %1905 = vmatpush1.msra.mxu0 0.0
    %1906 = vmatprep.subr.mxu0 0.0
    %1907 = vmatpush1.msra.mxu0 0.0
    %1908 = vmatprep.subr.mxu0 0.0
    %1909 = vmatpush1.msra.mxu0 0.0
    %1910 = vmatprep.subr.mxu0 0.0
    %1911 = vmatpush1.msra.mxu0 0.0
    %1912 = vmatprep.subr.mxu0 0.0
    %1913 = vmatpush1.msra.mxu0 0.0
    %1914 = vmatprep.subr.mxu0 0.0
    %1915 = vmatpush1.msra.mxu0 0.0
    %1916 = vmatprep.subr.mxu0 0.0
    %1917 = vmatpush1.msra.mxu0 0.0
    %1918 = vmatprep.subr.mxu0 0.0
    %1919 = vmatpush1.msra.mxu0 0.0
    %1920 = vmatprep.subr.mxu0 0.0
    %1921 = vmatpush1.msra.mxu0 0.0
    %1922 = vmatprep.subr.mxu0 0.0
    %1923 = vmatpush1.msra.mxu0 0.0
    %1924 = vmatprep.subr.mxu0 0.0
    %1925 = vmatpush1.msra.mxu0 0.0
    %1926 = vmatprep.subr.mxu0 0.0
    %1927 = vmatpush1.msra.mxu0 0.0
    %1928 = vmatprep.subr.mxu0 0.0
    %1929 = vmatpush1.msra.mxu0 0.0
    %1930 = vmatprep.subr.mxu0 0.0
    %1931 = vmatpush1.msra.mxu0 0.0
    %1932 = vmatprep.subr.mxu0 0.0
    %1933 = vmatpush1.msra.mxu0 0.0
    %1934 = vmatprep.subr.mxu0 0.0
    %1935 = vmatpush1.msra.mxu0 0.0
    %1936 = vmatprep.subr.mxu0 0.0
    %1937 = vmatpush1.msra.mxu0 0.0
    %1938 = vmatprep.subr.mxu0 0.0
    %1939 = vmatpush1.msra.mxu0 0.0
    %1940 = vmatprep.subr.mxu0 0.0
    %1941 = vmatpush1.msra.mxu0 0.0
    %1942 = vmatprep.subr.mxu0 0.0
    %1943 = vmatpush1.msra.mxu0 0.0
    %1944 = vmatprep.subr.mxu0 0.0
    %1945 = vmatpush1.msra.mxu0 0.0
    %1946 = vmatprep.subr.mxu0 0.0
    %1947 = vmatpush1.msra.mxu0 0.0
    %1948 = vmatprep.subr.mxu0 0.0
    %1949 = vmatpush1.msra.mxu0 0.0
    %1950 = vmatprep.subr.mxu0 0.0
    %1951 = vmatpush1.msra.mxu0 0.0
    %1952 = vmatprep.mubr.f32.mxu0 0.0
    %1953 = vmatmul.mubr.f32.gmra.mrb[0].mxu0 %v1886
    %v1954 = vpop.f32.mrb[0].mxu0
    %v1955 = vadd.f32 %v1810, %v1954
    %v1956 = vpop.f32.mrb[0].mxu0
    %v1957 = vadd.f32 %v1812, %v1956
    %1958 = vdwg.mxu0
    %1959 = vmatprep.subr.mxu0 %v1720
    %1960 = vmatpush1.msra.mxu0 %v1719
    %1961 = vmatprep.subr.mxu0 0.0
    %1962 = vmatpush1.msra.mxu0 0.0
    %1963 = vmatprep.subr.mxu0 0.0
    %1964 = vmatpush1.msra.mxu0 0.0
    %1965 = vmatprep.subr.mxu0 0.0
    %1966 = vmatpush1.msra.mxu0 0.0
    %1967 = vmatprep.subr.mxu0 0.0
    %1968 = vmatpush1.msra.mxu0 0.0
    %1969 = vmatprep.subr.mxu0 0.0
    %1970 = vmatpush1.msra.mxu0 0.0
    %1971 = vmatprep.subr.mxu0 0.0
    %1972 = vmatpush1.msra.mxu0 0.0
    %1973 = vmatprep.subr.mxu0 0.0
    %1974 = vmatpush1.msra.mxu0 0.0
    %1975 = vmatprep.subr.mxu0 0.0
    %1976 = vmatpush1.msra.mxu0 0.0
    %1977 = vmatprep.subr.mxu0 0.0
    %1978 = vmatpush1.msra.mxu0 0.0
    %1979 = vmatprep.subr.mxu0 0.0
    %1980 = vmatpush1.msra.mxu0 0.0
    %1981 = vmatprep.subr.mxu0 0.0
    %1982 = vmatpush1.msra.mxu0 0.0
    %1983 = vmatprep.subr.mxu0 0.0
    %1984 = vmatpush1.msra.mxu0 0.0
    %1985 = vmatprep.subr.mxu0 0.0
    %1986 = vmatpush1.msra.mxu0 0.0
    %1987 = vmatprep.subr.mxu0 0.0
    %1988 = vmatpush1.msra.mxu0 0.0
    %1989 = vmatprep.subr.mxu0 0.0
    %1990 = vmatpush1.msra.mxu0 0.0
    %1991 = vmatprep.subr.mxu0 0.0
    %1992 = vmatpush1.msra.mxu0 0.0
    %1993 = vmatprep.subr.mxu0 0.0
    %1994 = vmatpush1.msra.mxu0 0.0
    %1995 = vmatprep.subr.mxu0 0.0
    %1996 = vmatpush1.msra.mxu0 0.0
    %1997 = vmatprep.subr.mxu0 0.0
    %1998 = vmatpush1.msra.mxu0 0.0
    %1999 = vmatprep.subr.mxu0 0.0
    %2000 = vmatpush1.msra.mxu0 0.0
    %2001 = vmatprep.subr.mxu0 0.0
    %2002 = vmatpush1.msra.mxu0 0.0
    %2003 = vmatprep.subr.mxu0 0.0
    %2004 = vmatpush1.msra.mxu0 0.0
    %2005 = vmatprep.subr.mxu0 0.0
    %2006 = vmatpush1.msra.mxu0 0.0
    %2007 = vmatprep.subr.mxu0 0.0
    %2008 = vmatpush1.msra.mxu0 0.0
    %2009 = vmatprep.subr.mxu0 0.0
    %2010 = vmatpush1.msra.mxu0 0.0
    %2011 = vmatprep.subr.mxu0 0.0
    %2012 = vmatpush1.msra.mxu0 0.0
    %2013 = vmatprep.subr.mxu0 0.0
    %2014 = vmatpush1.msra.mxu0 0.0
    %2015 = vmatprep.subr.mxu0 0.0
    %2016 = vmatpush1.msra.mxu0 0.0
    %2017 = vmatprep.subr.mxu0 0.0
    %2018 = vmatpush1.msra.mxu0 0.0
    %2019 = vmatprep.subr.mxu0 0.0
    %2020 = vmatpush1.msra.mxu0 0.0
    %2021 = vmatprep.subr.mxu0 0.0
    %2022 = vmatpush1.msra.mxu0 0.0
    %2023 = vmatprep.mubr.f32.mxu0 0.0
    %2024 = vmatmul.mubr.f32.gmra.mrb[0].mxu0 %v1886
    %v2025 = vpop.f32.mrb[0].mxu0
    %v2026 = vadd.f32 %v1881, %v2025
    %v2027 = vpop.f32.mrb[0].mxu0
    %v2028 = vadd.f32 %v1883, %v2027
    %2029 = vdwg.mxu0
    %2030 = vrot.lane.b32.xlu0 %v1701, 15
    %v2031 = vpop.permute.xlu0 %2030
    %2032 = vrot.lane.b32.xlu0 %v1702, 15
    %v2033 = vpop.permute.xlu0 %2032
    %2034 = vrot.lane.b32.xlu0 %v1703, 15
    %v2035 = vpop.permute.xlu0 %2034
    %2036 = vrot.lane.b32.xlu0 %v1704, 15
    %v2037 = vpop.permute.xlu0 %2036
    %v2038 = vsel %vm408, %v2035, %v2037
    %v2039 = vsel %vm408, %v2033, %v2035
    %v2040 = vsel %vm408, %v2031, %v2033
    %v2041 = vsel %vm408, %v2037, %v2031
    %v2042 = vmul.f32 %v2041, %v416
    %v2043 = vmul.f32 %v2040, %v420
    %v2044 = vmul.f32 %v2039, %v424
    %v2045 = vmul.f32 %v2038, %v428
    %s2046 = scalar_lea.vmem %s5, 16
    %v2047 = vld [vmem:[%s2046] sm:$0xff]
    %v2049 = vsel %vm109, %v2047, 0
    %2051 = vmatprep.subr.mxu0 %v2043
    %2052 = vmatpush1.msra.mxu0 %v2042
    %2053 = vmatprep.subr.mxu0 0.0
    %2054 = vmatpush1.msra.mxu0 0.0
    %2055 = vmatprep.subr.mxu0 0.0
    %2056 = vmatpush1.msra.mxu0 0.0
    %2057 = vmatprep.subr.mxu0 0.0
    %2058 = vmatpush1.msra.mxu0 0.0
    %2059 = vmatprep.subr.mxu0 0.0
    %2060 = vmatpush1.msra.mxu0 0.0
    %2061 = vmatprep.subr.mxu0 0.0
    %2062 = vmatpush1.msra.mxu0 0.0
    %2063 = vmatprep.subr.mxu0 0.0
    %2064 = vmatpush1.msra.mxu0 0.0
    %2065 = vmatprep.subr.mxu0 0.0
    %2066 = vmatpush1.msra.mxu0 0.0
    %2067 = vmatprep.subr.mxu0 0.0
    %2068 = vmatpush1.msra.mxu0 0.0
    %2069 = vmatprep.subr.mxu0 0.0
    %2070 = vmatpush1.msra.mxu0 0.0
    %2071 = vmatprep.subr.mxu0 0.0
    %2072 = vmatpush1.msra.mxu0 0.0
    %2073 = vmatprep.subr.mxu0 0.0
    %2074 = vmatpush1.msra.mxu0 0.0
    %2075 = vmatprep.subr.mxu0 0.0
    %2076 = vmatpush1.msra.mxu0 0.0
    %2077 = vmatprep.subr.mxu0 0.0
    %2078 = vmatpush1.msra.mxu0 0.0
    %2079 = vmatprep.subr.mxu0 0.0
    %2080 = vmatpush1.msra.mxu0 0.0
    %2081 = vmatprep.subr.mxu0 0.0
    %2082 = vmatpush1.msra.mxu0 0.0
    %2083 = vmatprep.subr.mxu0 0.0
    %2084 = vmatpush1.msra.mxu0 0.0
    %2085 = vmatprep.subr.mxu0 0.0
    %2086 = vmatpush1.msra.mxu0 0.0
    %2087 = vmatprep.subr.mxu0 0.0
    %2088 = vmatpush1.msra.mxu0 0.0
    %2089 = vmatprep.subr.mxu0 0.0
    %2090 = vmatpush1.msra.mxu0 0.0
    %2091 = vmatprep.subr.mxu0 0.0
    %2092 = vmatpush1.msra.mxu0 0.0
    %2093 = vmatprep.subr.mxu0 0.0
    %2094 = vmatpush1.msra.mxu0 0.0
    %2095 = vmatprep.subr.mxu0 0.0
    %2096 = vmatpush1.msra.mxu0 0.0
    %2097 = vmatprep.subr.mxu0 0.0
    %2098 = vmatpush1.msra.mxu0 0.0
    %2099 = vmatprep.subr.mxu0 0.0
    %2100 = vmatpush1.msra.mxu0 0.0
    %2101 = vmatprep.subr.mxu0 0.0
    %2102 = vmatpush1.msra.mxu0 0.0
    %2103 = vmatprep.subr.mxu0 0.0
    %2104 = vmatpush1.msra.mxu0 0.0
    %2105 = vmatprep.subr.mxu0 0.0
    %2106 = vmatpush1.msra.mxu0 0.0
    %2107 = vmatprep.subr.mxu0 0.0
    %2108 = vmatpush1.msra.mxu0 0.0
    %2109 = vmatprep.subr.mxu0 0.0
    %2110 = vmatpush1.msra.mxu0 0.0
    %2111 = vmatprep.subr.mxu0 0.0
    %2112 = vmatpush1.msra.mxu0 0.0
    %2113 = vmatprep.subr.mxu0 0.0
    %2114 = vmatpush1.msra.mxu0 0.0
    %2115 = vmatprep.mubr.f32.mxu0 0.0
    %2116 = vmatmul.mubr.f32.gmra.mrb[0].mxu0 %v2049
    %v2117 = vpop.f32.mrb[0].mxu0
    %v2118 = vadd.f32 0.0, %v2117
    %v2119 = vpop.f32.mrb[0].mxu0
    %v2120 = vadd.f32 0.0, %v2119
    %2121 = vdwg.mxu0
    %2122 = vmatprep.subr.mxu0 %v2045
    %2123 = vmatpush1.msra.mxu0 %v2044
    %2124 = vmatprep.subr.mxu0 0.0
    %2125 = vmatpush1.msra.mxu0 0.0
    %2126 = vmatprep.subr.mxu0 0.0
    %2127 = vmatpush1.msra.mxu0 0.0
    %2128 = vmatprep.subr.mxu0 0.0
    %2129 = vmatpush1.msra.mxu0 0.0
    %2130 = vmatprep.subr.mxu0 0.0
    %2131 = vmatpush1.msra.mxu0 0.0
    %2132 = vmatprep.subr.mxu0 0.0
    %2133 = vmatpush1.msra.mxu0 0.0
    %2134 = vmatprep.subr.mxu0 0.0
    %2135 = vmatpush1.msra.mxu0 0.0
    %2136 = vmatprep.subr.mxu0 0.0
    %2137 = vmatpush1.msra.mxu0 0.0
    %2138 = vmatprep.subr.mxu0 0.0
    %2139 = vmatpush1.msra.mxu0 0.0
    %2140 = vmatprep.subr.mxu0 0.0
    %2141 = vmatpush1.msra.mxu0 0.0
    %2142 = vmatprep.subr.mxu0 0.0
    %2143 = vmatpush1.msra.mxu0 0.0
    %2144 = vmatprep.subr.mxu0 0.0
    %2145 = vmatpush1.msra.mxu0 0.0
    %2146 = vmatprep.subr.mxu0 0.0
    %2147 = vmatpush1.msra.mxu0 0.0
    %2148 = vmatprep.subr.mxu0 0.0
    %2149 = vmatpush1.msra.mxu0 0.0
    %2150 = vmatprep.subr.mxu0 0.0
    %2151 = vmatpush1.msra.mxu0 0.0
    %2152 = vmatprep.subr.mxu0 0.0
    %2153 = vmatpush1.msra.mxu0 0.0
    %2154 = vmatprep.subr.mxu0 0.0
    %2155 = vmatpush1.msra.mxu0 0.0
    %2156 = vmatprep.subr.mxu0 0.0
    %2157 = vmatpush1.msra.mxu0 0.0
    %2158 = vmatprep.subr.mxu0 0.0
    %2159 = vmatpush1.msra.mxu0 0.0
    %2160 = vmatprep.subr.mxu0 0.0
    %2161 = vmatpush1.msra.mxu0 0.0
    %2162 = vmatprep.subr.mxu0 0.0
    %2163 = vmatpush1.msra.mxu0 0.0
    %2164 = vmatprep.subr.mxu0 0.0
    %2165 = vmatpush1.msra.mxu0 0.0
    %2166 = vmatprep.subr.mxu0 0.0
    %2167 = vmatpush1.msra.mxu0 0.0
    %2168 = vmatprep.subr.mxu0 0.0
    %2169 = vmatpush1.msra.mxu0 0.0
    %2170 = vmatprep.subr.mxu0 0.0
    %2171 = vmatpush1.msra.mxu0 0.0
    %2172 = vmatprep.subr.mxu0 0.0
    %2173 = vmatpush1.msra.mxu0 0.0
    %2174 = vmatprep.subr.mxu0 0.0
    %2175 = vmatpush1.msra.mxu0 0.0
    %2176 = vmatprep.subr.mxu0 0.0
    %2177 = vmatpush1.msra.mxu0 0.0
    %2178 = vmatprep.subr.mxu0 0.0
    %2179 = vmatpush1.msra.mxu0 0.0
    %2180 = vmatprep.subr.mxu0 0.0
    %2181 = vmatpush1.msra.mxu0 0.0
    %2182 = vmatprep.subr.mxu0 0.0
    %2183 = vmatpush1.msra.mxu0 0.0
    %2184 = vmatprep.subr.mxu0 0.0
    %2185 = vmatpush1.msra.mxu0 0.0
    %2186 = vmatprep.mubr.f32.mxu0 0.0
    %2187 = vmatmul.mubr.f32.gmra.mrb[0].mxu0 %v2049
    %v2188 = vpop.f32.mrb[0].mxu0
    %v2189 = vadd.f32 0.0, %v2188
    %v2190 = vpop.f32.mrb[0].mxu0
    %v2191 = vadd.f32 0.0, %v2190
    %2192 = vdwg.mxu0
    %v2193 = vadd.f32 %v1955, %v2118
    %v2194 = vadd.f32 %v1957, %v2120
    %v2195 = vadd.f32 %v2026, %v2189
    %v2196 = vadd.f32 %v2028, %v2191
    %2197 = vrot.lane.b32.xlu0 %v1701, 1
    %v2198 = vpop.permute.xlu0 %2197
    %2199 = vrot.lane.b32.xlu0 %v1702, 1
    %v2200 = vpop.permute.xlu0 %2199
    %2201 = vrot.lane.b32.xlu0 %v1703, 1
    %v2202 = vpop.permute.xlu0 %2201
    %2203 = vrot.lane.b32.xlu0 %v1704, 1
    %v2204 = vpop.permute.xlu0 %2203
    %v2205 = vsel %vm592, %v2202, %v2204
    %v2206 = vsel %vm592, %v2200, %v2202
    %v2207 = vsel %vm592, %v2198, %v2200
    %v2208 = vsel %vm592, %v2204, %v2198
    %v2209 = vmul.f32 %v2208, %v600
    %v2210 = vmul.f32 %v2207, %v604
    %v2211 = vmul.f32 %v2206, %v608
    %v2212 = vmul.f32 %v2205, %v612
    %s2213 = scalar_lea.vmem %s5, 24
    %v2214 = vld [vmem:[%s2213] sm:$0xff]
    %v2216 = vsel %vm109, %v2214, 0
    %2218 = vmatprep.subr.mxu0 %v2210
    %2219 = vmatpush1.msra.mxu0 %v2209
    %2220 = vmatprep.subr.mxu0 0.0
    %2221 = vmatpush1.msra.mxu0 0.0
    %2222 = vmatprep.subr.mxu0 0.0
    %2223 = vmatpush1.msra.mxu0 0.0
    %2224 = vmatprep.subr.mxu0 0.0
    %2225 = vmatpush1.msra.mxu0 0.0
    %2226 = vmatprep.subr.mxu0 0.0
    %2227 = vmatpush1.msra.mxu0 0.0
    %2228 = vmatprep.subr.mxu0 0.0
    %2229 = vmatpush1.msra.mxu0 0.0
    %2230 = vmatprep.subr.mxu0 0.0
    %2231 = vmatpush1.msra.mxu0 0.0
    %2232 = vmatprep.subr.mxu0 0.0
    %2233 = vmatpush1.msra.mxu0 0.0
    %2234 = vmatprep.subr.mxu0 0.0
    %2235 = vmatpush1.msra.mxu0 0.0
    %2236 = vmatprep.subr.mxu0 0.0
    %2237 = vmatpush1.msra.mxu0 0.0
    %2238 = vmatprep.subr.mxu0 0.0
    %2239 = vmatpush1.msra.mxu0 0.0
    %2240 = vmatprep.subr.mxu0 0.0
    %2241 = vmatpush1.msra.mxu0 0.0
    %2242 = vmatprep.subr.mxu0 0.0
    %2243 = vmatpush1.msra.mxu0 0.0
    %2244 = vmatprep.subr.mxu0 0.0
    %2245 = vmatpush1.msra.mxu0 0.0
    %2246 = vmatprep.subr.mxu0 0.0
    %2247 = vmatpush1.msra.mxu0 0.0
    %2248 = vmatprep.subr.mxu0 0.0
    %2249 = vmatpush1.msra.mxu0 0.0
    %2250 = vmatprep.subr.mxu0 0.0
    %2251 = vmatpush1.msra.mxu0 0.0
    %2252 = vmatprep.subr.mxu0 0.0
    %2253 = vmatpush1.msra.mxu0 0.0
    %2254 = vmatprep.subr.mxu0 0.0
    %2255 = vmatpush1.msra.mxu0 0.0
    %2256 = vmatprep.subr.mxu0 0.0
    %2257 = vmatpush1.msra.mxu0 0.0
    %2258 = vmatprep.subr.mxu0 0.0
    %2259 = vmatpush1.msra.mxu0 0.0
    %2260 = vmatprep.subr.mxu0 0.0
    %2261 = vmatpush1.msra.mxu0 0.0
    %2262 = vmatprep.subr.mxu0 0.0
    %2263 = vmatpush1.msra.mxu0 0.0
    %2264 = vmatprep.subr.mxu0 0.0
    %2265 = vmatpush1.msra.mxu0 0.0
    %2266 = vmatprep.subr.mxu0 0.0
    %2267 = vmatpush1.msra.mxu0 0.0
    %2268 = vmatprep.subr.mxu0 0.0
    %2269 = vmatpush1.msra.mxu0 0.0
    %2270 = vmatprep.subr.mxu0 0.0
    %2271 = vmatpush1.msra.mxu0 0.0
    %2272 = vmatprep.subr.mxu0 0.0
    %2273 = vmatpush1.msra.mxu0 0.0
    %2274 = vmatprep.subr.mxu0 0.0
    %2275 = vmatpush1.msra.mxu0 0.0
    %2276 = vmatprep.subr.mxu0 0.0
    %2277 = vmatpush1.msra.mxu0 0.0
    %2278 = vmatprep.subr.mxu0 0.0
    %2279 = vmatpush1.msra.mxu0 0.0
    %2280 = vmatprep.subr.mxu0 0.0
    %2281 = vmatpush1.msra.mxu0 0.0
    %2282 = vmatprep.mubr.f32.mxu0 0.0
    %2283 = vmatmul.mubr.f32.gmra.mrb[0].mxu0 %v2216
    %v2284 = vpop.f32.mrb[0].mxu0
    %v2285 = vadd.f32 0.0, %v2284
    %v2286 = vpop.f32.mrb[0].mxu0
    %v2287 = vadd.f32 0.0, %v2286
    %2288 = vdwg.mxu0
    %2289 = vmatprep.subr.mxu0 %v2212
    %2290 = vmatpush1.msra.mxu0 %v2211
    %2291 = vmatprep.subr.mxu0 0.0
    %2292 = vmatpush1.msra.mxu0 0.0
    %2293 = vmatprep.subr.mxu0 0.0
    %2294 = vmatpush1.msra.mxu0 0.0
    %2295 = vmatprep.subr.mxu0 0.0
    %2296 = vmatpush1.msra.mxu0 0.0
    %2297 = vmatprep.subr.mxu0 0.0
    %2298 = vmatpush1.msra.mxu0 0.0
    %2299 = vmatprep.subr.mxu0 0.0
    %2300 = vmatpush1.msra.mxu0 0.0
    %2301 = vmatprep.subr.mxu0 0.0
    %2302 = vmatpush1.msra.mxu0 0.0
    %2303 = vmatprep.subr.mxu0 0.0
    %2304 = vmatpush1.msra.mxu0 0.0
    %2305 = vmatprep.subr.mxu0 0.0
    %2306 = vmatpush1.msra.mxu0 0.0
    %2307 = vmatprep.subr.mxu0 0.0
    %2308 = vmatpush1.msra.mxu0 0.0
    %2309 = vmatprep.subr.mxu0 0.0
    %2310 = vmatpush1.msra.mxu0 0.0
    %2311 = vmatprep.subr.mxu0 0.0
    %2312 = vmatpush1.msra.mxu0 0.0
    %2313 = vmatprep.subr.mxu0 0.0
    %2314 = vmatpush1.msra.mxu0 0.0
    %2315 = vmatprep.subr.mxu0 0.0
    %2316 = vmatpush1.msra.mxu0 0.0
    %2317 = vmatprep.subr.mxu0 0.0
    %2318 = vmatpush1.msra.mxu0 0.0
    %2319 = vmatprep.subr.mxu0 0.0
    %2320 = vmatpush1.msra.mxu0 0.0
    %2321 = vmatprep.subr.mxu0 0.0
    %2322 = vmatpush1.msra.mxu0 0.0
    %2323 = vmatprep.subr.mxu0 0.0
    %2324 = vmatpush1.msra.mxu0 0.0
    %2325 = vmatprep.subr.mxu0 0.0
    %2326 = vmatpush1.msra.mxu0 0.0
    %2327 = vmatprep.subr.mxu0 0.0
    %2328 = vmatpush1.msra.mxu0 0.0
    %2329 = vmatprep.subr.mxu0 0.0
    %2330 = vmatpush1.msra.mxu0 0.0
    %2331 = vmatprep.subr.mxu0 0.0
    %2332 = vmatpush1.msra.mxu0 0.0
    %2333 = vmatprep.subr.mxu0 0.0
    %2334 = vmatpush1.msra.mxu0 0.0
    %2335 = vmatprep.subr.mxu0 0.0
    %2336 = vmatpush1.msra.mxu0 0.0
    %2337 = vmatprep.subr.mxu0 0.0
    %2338 = vmatpush1.msra.mxu0 0.0
    %2339 = vmatprep.subr.mxu0 0.0
    %2340 = vmatpush1.msra.mxu0 0.0
    %2341 = vmatprep.subr.mxu0 0.0
    %2342 = vmatpush1.msra.mxu0 0.0
    %2343 = vmatprep.subr.mxu0 0.0
    %2344 = vmatpush1.msra.mxu0 0.0
    %2345 = vmatprep.subr.mxu0 0.0
    %2346 = vmatpush1.msra.mxu0 0.0
    %2347 = vmatprep.subr.mxu0 0.0
    %2348 = vmatpush1.msra.mxu0 0.0
    %2349 = vmatprep.subr.mxu0 0.0
    %2350 = vmatpush1.msra.mxu0 0.0
    %2351 = vmatprep.subr.mxu0 0.0
    %2352 = vmatpush1.msra.mxu0 0.0
    %2353 = vmatprep.mubr.f32.mxu0 0.0
    %2354 = vmatmul.mubr.f32.gmra.mrb[0].mxu0 %v2216
    %v2355 = vpop.f32.mrb[0].mxu0
    %v2356 = vadd.f32 0.0, %v2355
    %v2357 = vpop.f32.mrb[0].mxu0
    %v2358 = vadd.f32 0.0, %v2357
    %2359 = vdwg.mxu0
    %v2360 = vadd.f32 %v2193, %v2285
    %v2361 = vadd.f32 %v2194, %v2287
    %v2362 = vadd.f32 %v2195, %v2356
    %v2363 = vadd.f32 %v2196, %v2358
    %s2364 = scalar_lea.vmem %s5, 32
    %v2365 = vld [vmem:[%s2364] sm:$0xff]
    %v2367 = vsel %vm109, %v2365, 0
    %2369 = vmatprep.subr.mxu0 %v1702
    %2370 = vmatpush1.msra.mxu0 %v1701
    %2371 = vmatprep.subr.mxu0 0.0
    %2372 = vmatpush1.msra.mxu0 0.0
    %2373 = vmatprep.subr.mxu0 0.0
    %2374 = vmatpush1.msra.mxu0 0.0
    %2375 = vmatprep.subr.mxu0 0.0
    %2376 = vmatpush1.msra.mxu0 0.0
    %2377 = vmatprep.subr.mxu0 0.0
    %2378 = vmatpush1.msra.mxu0 0.0
    %2379 = vmatprep.subr.mxu0 0.0
    %2380 = vmatpush1.msra.mxu0 0.0
    %2381 = vmatprep.subr.mxu0 0.0
    %2382 = vmatpush1.msra.mxu0 0.0
    %2383 = vmatprep.subr.mxu0 0.0
    %2384 = vmatpush1.msra.mxu0 0.0
    %2385 = vmatprep.subr.mxu0 0.0
    %2386 = vmatpush1.msra.mxu0 0.0
    %2387 = vmatprep.subr.mxu0 0.0
    %2388 = vmatpush1.msra.mxu0 0.0
    %2389 = vmatprep.subr.mxu0 0.0
    %2390 = vmatpush1.msra.mxu0 0.0
    %2391 = vmatprep.subr.mxu0 0.0
    %2392 = vmatpush1.msra.mxu0 0.0
    %2393 = vmatprep.subr.mxu0 0.0
    %2394 = vmatpush1.msra.mxu0 0.0
    %2395 = vmatprep.subr.mxu0 0.0
    %2396 = vmatpush1.msra.mxu0 0.0
    %2397 = vmatprep.subr.mxu0 0.0
    %2398 = vmatpush1.msra.mxu0 0.0
    %2399 = vmatprep.subr.mxu0 0.0
    %2400 = vmatpush1.msra.mxu0 0.0
    %2401 = vmatprep.subr.mxu0 0.0
    %2402 = vmatpush1.msra.mxu0 0.0
    %2403 = vmatprep.subr.mxu0 0.0
    %2404 = vmatpush1.msra.mxu0 0.0
    %2405 = vmatprep.subr.mxu0 0.0
    %2406 = vmatpush1.msra.mxu0 0.0
    %2407 = vmatprep.subr.mxu0 0.0
    %2408 = vmatpush1.msra.mxu0 0.0
    %2409 = vmatprep.subr.mxu0 0.0
    %2410 = vmatpush1.msra.mxu0 0.0
    %2411 = vmatprep.subr.mxu0 0.0
    %2412 = vmatpush1.msra.mxu0 0.0
    %2413 = vmatprep.subr.mxu0 0.0
    %2414 = vmatpush1.msra.mxu0 0.0
    %2415 = vmatprep.subr.mxu0 0.0
    %2416 = vmatpush1.msra.mxu0 0.0
    %2417 = vmatprep.subr.mxu0 0.0
    %2418 = vmatpush1.msra.mxu0 0.0
    %2419 = vmatprep.subr.mxu0 0.0
    %2420 = vmatpush1.msra.mxu0 0.0
    %2421 = vmatprep.subr.mxu0 0.0
    %2422 = vmatpush1.msra.mxu0 0.0
    %2423 = vmatprep.subr.mxu0 0.0
    %2424 = vmatpush1.msra.mxu0 0.0
    %2425 = vmatprep.subr.mxu0 0.0
    %2426 = vmatpush1.msra.mxu0 0.0
    %2427 = vmatprep.subr.mxu0 0.0
    %2428 = vmatpush1.msra.mxu0 0.0
    %2429 = vmatprep.subr.mxu0 0.0
    %2430 = vmatpush1.msra.mxu0 0.0
    %2431 = vmatprep.subr.mxu0 0.0
    %2432 = vmatpush1.msra.mxu0 0.0
    %2433 = vmatprep.mubr.f32.mxu0 0.0
    %2434 = vmatmul.mubr.f32.gmra.mrb[0].mxu0 %v2367
    %v2435 = vpop.f32.mrb[0].mxu0
    %v2436 = vadd.f32 0.0, %v2435
    %v2437 = vpop.f32.mrb[0].mxu0
    %v2438 = vadd.f32 0.0, %v2437
    %2439 = vdwg.mxu0
    %2440 = vmatprep.subr.mxu0 %v1704
    %2441 = vmatpush1.msra.mxu0 %v1703
    %2442 = vmatprep.subr.mxu0 0.0
    %2443 = vmatpush1.msra.mxu0 0.0
    %2444 = vmatprep.subr.mxu0 0.0
    %2445 = vmatpush1.msra.mxu0 0.0
    %2446 = vmatprep.subr.mxu0 0.0
    %2447 = vmatpush1.msra.mxu0 0.0
    %2448 = vmatprep.subr.mxu0 0.0
    %2449 = vmatpush1.msra.mxu0 0.0
    %2450 = vmatprep.subr.mxu0 0.0
    %2451 = vmatpush1.msra.mxu0 0.0
    %2452 = vmatprep.subr.mxu0 0.0
    %2453 = vmatpush1.msra.mxu0 0.0
    %2454 = vmatprep.subr.mxu0 0.0
    %2455 = vmatpush1.msra.mxu0 0.0
    %2456 = vmatprep.subr.mxu0 0.0
    %2457 = vmatpush1.msra.mxu0 0.0
    %2458 = vmatprep.subr.mxu0 0.0
    %2459 = vmatpush1.msra.mxu0 0.0
    %2460 = vmatprep.subr.mxu0 0.0
    %2461 = vmatpush1.msra.mxu0 0.0
    %2462 = vmatprep.subr.mxu0 0.0
    %2463 = vmatpush1.msra.mxu0 0.0
    %2464 = vmatprep.subr.mxu0 0.0
    %2465 = vmatpush1.msra.mxu0 0.0
    %2466 = vmatprep.subr.mxu0 0.0
    %2467 = vmatpush1.msra.mxu0 0.0
    %2468 = vmatprep.subr.mxu0 0.0
    %2469 = vmatpush1.msra.mxu0 0.0
    %2470 = vmatprep.subr.mxu0 0.0
    %2471 = vmatpush1.msra.mxu0 0.0
    %2472 = vmatprep.subr.mxu0 0.0
    %2473 = vmatpush1.msra.mxu0 0.0
    %2474 = vmatprep.subr.mxu0 0.0
    %2475 = vmatpush1.msra.mxu0 0.0
    %2476 = vmatprep.subr.mxu0 0.0
    %2477 = vmatpush1.msra.mxu0 0.0
    %2478 = vmatprep.subr.mxu0 0.0
    %2479 = vmatpush1.msra.mxu0 0.0
    %2480 = vmatprep.subr.mxu0 0.0
    %2481 = vmatpush1.msra.mxu0 0.0
    %2482 = vmatprep.subr.mxu0 0.0
    %2483 = vmatpush1.msra.mxu0 0.0
    %2484 = vmatprep.subr.mxu0 0.0
    %2485 = vmatpush1.msra.mxu0 0.0
    %2486 = vmatprep.subr.mxu0 0.0
    %2487 = vmatpush1.msra.mxu0 0.0
    %2488 = vmatprep.subr.mxu0 0.0
    %2489 = vmatpush1.msra.mxu0 0.0
    %2490 = vmatprep.subr.mxu0 0.0
    %2491 = vmatpush1.msra.mxu0 0.0
    %2492 = vmatprep.subr.mxu0 0.0
    %2493 = vmatpush1.msra.mxu0 0.0
    %2494 = vmatprep.subr.mxu0 0.0
    %2495 = vmatpush1.msra.mxu0 0.0
    %2496 = vmatprep.subr.mxu0 0.0
    %2497 = vmatpush1.msra.mxu0 0.0
    %2498 = vmatprep.subr.mxu0 0.0
    %2499 = vmatpush1.msra.mxu0 0.0
    %2500 = vmatprep.subr.mxu0 0.0
    %2501 = vmatpush1.msra.mxu0 0.0
    %2502 = vmatprep.subr.mxu0 0.0
    %2503 = vmatpush1.msra.mxu0 0.0
    %2504 = vmatprep.mubr.f32.mxu0 0.0
    %2505 = vmatmul.mubr.f32.gmra.mrb[0].mxu0 %v2367
    %v2506 = vpop.f32.mrb[0].mxu0
    %v2507 = vadd.f32 0.0, %v2506
    %v2508 = vpop.f32.mrb[0].mxu0
    %v2509 = vadd.f32 0.0, %v2508
    %2510 = vdwg.mxu0
    %v2511 = vadd.f32 %v2360, %v2436
    %v2512 = vadd.f32 %v2361, %v2438
    %v2513 = vadd.f32 %v2362, %v2507
    %v2514 = vadd.f32 %v2363, %v2509
    %2515 = vrot.lane.b32.xlu0 %v1701, 127
    %v2516 = vpop.permute.xlu0 %2515
    %2517 = vrot.lane.b32.xlu0 %v1702, 127
    %v2518 = vpop.permute.xlu0 %2517
    %2519 = vrot.lane.b32.xlu0 %v1703, 127
    %v2520 = vpop.permute.xlu0 %2519
    %2521 = vrot.lane.b32.xlu0 %v1704, 127
    %v2522 = vpop.permute.xlu0 %2521
    %v2523 = vsel %vm927, %v2520, %v2522
    %v2524 = vsel %vm927, %v2518, %v2520
    %v2525 = vsel %vm927, %v2516, %v2518
    %v2526 = vsel %vm927, %v2522, %v2516
    %v2527 = vmul.f32 %v2525, %v935
    %v2528 = vmul.f32 %v2524, %v939
    %v2529 = vmul.f32 %v2523, %v943
    %v2530 = vmul.f32 %v2526, %v947
    %s2531 = scalar_lea.vmem %s5, 40
    %v2532 = vld [vmem:[%s2531] sm:$0xff]
    %v2534 = vsel %vm109, %v2532, 0
    %2536 = vmatprep.subr.mxu0 %v2528
    %2537 = vmatpush1.msra.mxu0 %v2527
    %2538 = vmatprep.subr.mxu0 0.0
    %2539 = vmatpush1.msra.mxu0 0.0
    %2540 = vmatprep.subr.mxu0 0.0
    %2541 = vmatpush1.msra.mxu0 0.0
    %2542 = vmatprep.subr.mxu0 0.0
    %2543 = vmatpush1.msra.mxu0 0.0
    %2544 = vmatprep.subr.mxu0 0.0
    %2545 = vmatpush1.msra.mxu0 0.0
    %2546 = vmatprep.subr.mxu0 0.0
    %2547 = vmatpush1.msra.mxu0 0.0
    %2548 = vmatprep.subr.mxu0 0.0
    %2549 = vmatpush1.msra.mxu0 0.0
    %2550 = vmatprep.subr.mxu0 0.0
    %2551 = vmatpush1.msra.mxu0 0.0
    %2552 = vmatprep.subr.mxu0 0.0
    %2553 = vmatpush1.msra.mxu0 0.0
    %2554 = vmatprep.subr.mxu0 0.0
    %2555 = vmatpush1.msra.mxu0 0.0
    %2556 = vmatprep.subr.mxu0 0.0
    %2557 = vmatpush1.msra.mxu0 0.0
    %2558 = vmatprep.subr.mxu0 0.0
    %2559 = vmatpush1.msra.mxu0 0.0
    %2560 = vmatprep.subr.mxu0 0.0
    %2561 = vmatpush1.msra.mxu0 0.0
    %2562 = vmatprep.subr.mxu0 0.0
    %2563 = vmatpush1.msra.mxu0 0.0
    %2564 = vmatprep.subr.mxu0 0.0
    %2565 = vmatpush1.msra.mxu0 0.0
    %2566 = vmatprep.subr.mxu0 0.0
    %2567 = vmatpush1.msra.mxu0 0.0
    %2568 = vmatprep.subr.mxu0 0.0
    %2569 = vmatpush1.msra.mxu0 0.0
    %2570 = vmatprep.subr.mxu0 0.0
    %2571 = vmatpush1.msra.mxu0 0.0
    %2572 = vmatprep.subr.mxu0 0.0
    %2573 = vmatpush1.msra.mxu0 0.0
    %2574 = vmatprep.subr.mxu0 0.0
    %2575 = vmatpush1.msra.mxu0 0.0
    %2576 = vmatprep.subr.mxu0 0.0
    %2577 = vmatpush1.msra.mxu0 0.0
    %2578 = vmatprep.subr.mxu0 0.0
    %2579 = vmatpush1.msra.mxu0 0.0
    %2580 = vmatprep.subr.mxu0 0.0
    %2581 = vmatpush1.msra.mxu0 0.0
    %2582 = vmatprep.subr.mxu0 0.0
    %2583 = vmatpush1.msra.mxu0 0.0
    %2584 = vmatprep.subr.mxu0 0.0
    %2585 = vmatpush1.msra.mxu0 0.0
    %2586 = vmatprep.subr.mxu0 0.0
    %2587 = vmatpush1.msra.mxu0 0.0
    %2588 = vmatprep.subr.mxu0 0.0
    %2589 = vmatpush1.msra.mxu0 0.0
    %2590 = vmatprep.subr.mxu0 0.0
    %2591 = vmatpush1.msra.mxu0 0.0
    %2592 = vmatprep.subr.mxu0 0.0
    %2593 = vmatpush1.msra.mxu0 0.0
    %2594 = vmatprep.subr.mxu0 0.0
    %2595 = vmatpush1.msra.mxu0 0.0
    %2596 = vmatprep.subr.mxu0 0.0
    %2597 = vmatpush1.msra.mxu0 0.0
    %2598 = vmatprep.subr.mxu0 0.0
    %2599 = vmatpush1.msra.mxu0 0.0
    %2600 = vmatprep.mubr.f32.mxu0 0.0
    %2601 = vmatmul.mubr.f32.gmra.mrb[0].mxu0 %v2534
    %v2602 = vpop.f32.mrb[0].mxu0
    %v2603 = vadd.f32 0.0, %v2602
    %v2604 = vpop.f32.mrb[0].mxu0
    %v2605 = vadd.f32 0.0, %v2604
    %2606 = vdwg.mxu0
    %2607 = vmatprep.subr.mxu0 %v2530
    %2608 = vmatpush1.msra.mxu0 %v2529
    %2609 = vmatprep.subr.mxu0 0.0
    %2610 = vmatpush1.msra.mxu0 0.0
    %2611 = vmatprep.subr.mxu0 0.0
    %2612 = vmatpush1.msra.mxu0 0.0
    %2613 = vmatprep.subr.mxu0 0.0
    %2614 = vmatpush1.msra.mxu0 0.0
    %2615 = vmatprep.subr.mxu0 0.0
    %2616 = vmatpush1.msra.mxu0 0.0
    %2617 = vmatprep.subr.mxu0 0.0
    %2618 = vmatpush1.msra.mxu0 0.0
    %2619 = vmatprep.subr.mxu0 0.0
    %2620 = vmatpush1.msra.mxu0 0.0
    %2621 = vmatprep.subr.mxu0 0.0
    %2622 = vmatpush1.msra.mxu0 0.0
    %2623 = vmatprep.subr.mxu0 0.0
    %2624 = vmatpush1.msra.mxu0 0.0
    %2625 = vmatprep.subr.mxu0 0.0
    %2626 = vmatpush1.msra.mxu0 0.0
    %2627 = vmatprep.subr.mxu0 0.0
    %2628 = vmatpush1.msra.mxu0 0.0
    %2629 = vmatprep.subr.mxu0 0.0
    %2630 = vmatpush1.msra.mxu0 0.0
    %2631 = vmatprep.subr.mxu0 0.0
    %2632 = vmatpush1.msra.mxu0 0.0
    %2633 = vmatprep.subr.mxu0 0.0
    %2634 = vmatpush1.msra.mxu0 0.0
    %2635 = vmatprep.subr.mxu0 0.0
    %2636 = vmatpush1.msra.mxu0 0.0
    %2637 = vmatprep.subr.mxu0 0.0
    %2638 = vmatpush1.msra.mxu0 0.0
    %2639 = vmatprep.subr.mxu0 0.0
    %2640 = vmatpush1.msra.mxu0 0.0
    %2641 = vmatprep.subr.mxu0 0.0
    %2642 = vmatpush1.msra.mxu0 0.0
    %2643 = vmatprep.subr.mxu0 0.0
    %2644 = vmatpush1.msra.mxu0 0.0
    %2645 = vmatprep.subr.mxu0 0.0
    %2646 = vmatpush1.msra.mxu0 0.0
    %2647 = vmatprep.subr.mxu0 0.0
    %2648 = vmatpush1.msra.mxu0 0.0
    %2649 = vmatprep.subr.mxu0 0.0
    %2650 = vmatpush1.msra.mxu0 0.0
    %2651 = vmatprep.subr.mxu0 0.0
    %2652 = vmatpush1.msra.mxu0 0.0
    %2653 = vmatprep.subr.mxu0 0.0
    %2654 = vmatpush1.msra.mxu0 0.0
    %2655 = vmatprep.subr.mxu0 0.0
    %2656 = vmatpush1.msra.mxu0 0.0
    %2657 = vmatprep.subr.mxu0 0.0
    %2658 = vmatpush1.msra.mxu0 0.0
    %2659 = vmatprep.subr.mxu0 0.0
    %2660 = vmatpush1.msra.mxu0 0.0
    %2661 = vmatprep.subr.mxu0 0.0
    %2662 = vmatpush1.msra.mxu0 0.0
    %2663 = vmatprep.subr.mxu0 0.0
    %2664 = vmatpush1.msra.mxu0 0.0
    %2665 = vmatprep.subr.mxu0 0.0
    %2666 = vmatpush1.msra.mxu0 0.0
    %2667 = vmatprep.subr.mxu0 0.0
    %2668 = vmatpush1.msra.mxu0 0.0
    %2669 = vmatprep.subr.mxu0 0.0
    %2670 = vmatpush1.msra.mxu0 0.0
    %2671 = vmatprep.mubr.f32.mxu0 0.0
    %2672 = vmatmul.mubr.f32.gmra.mrb[0].mxu0 %v2534
    %v2673 = vpop.f32.mrb[0].mxu0
    %v2674 = vadd.f32 0.0, %v2673
    %v2675 = vpop.f32.mrb[0].mxu0
    %v2676 = vadd.f32 0.0, %v2675
    %2677 = vdwg.mxu0
    %v2678 = vadd.f32 %v2511, %v2603
    %v2679 = vadd.f32 %v2512, %v2605
    %v2680 = vadd.f32 %v2513, %v2674
    %v2681 = vadd.f32 %v2514, %v2676
    %2682 = vrot.lane.b32.xlu0 %v1701, 113
    %v2683 = vpop.permute.xlu0 %2682
    %2684 = vrot.lane.b32.xlu0 %v1702, 113
    %v2685 = vpop.permute.xlu0 %2684
    %2686 = vrot.lane.b32.xlu0 %v1703, 113
    %v2687 = vpop.permute.xlu0 %2686
    %2688 = vrot.lane.b32.xlu0 %v1704, 113
    %v2689 = vpop.permute.xlu0 %2688
    %v2690 = vsel %vm1111, %v2687, %v2689
    %v2691 = vsel %vm1111, %v2685, %v2687
    %v2692 = vsel %vm1111, %v2683, %v2685
    %v2693 = vsel %vm1111, %v2689, %v2683
    %v2694 = vmul.f32 %v2692, %v1119
    %v2695 = vmul.f32 %v2691, %v1123
    %v2696 = vmul.f32 %v2690, %v1127
    %v2697 = vmul.f32 %v2693, %v1131
    %s2698 = scalar_lea.vmem %s5, 48
    %v2699 = vld [vmem:[%s2698] sm:$0xff]
    %v2701 = vsel %vm109, %v2699, 0
    %2703 = vmatprep.subr.mxu0 %v2695
    %2704 = vmatpush1.msra.mxu0 %v2694
    %2705 = vmatprep.subr.mxu0 0.0
    %2706 = vmatpush1.msra.mxu0 0.0
    %2707 = vmatprep.subr.mxu0 0.0
    %2708 = vmatpush1.msra.mxu0 0.0
    %2709 = vmatprep.subr.mxu0 0.0
    %2710 = vmatpush1.msra.mxu0 0.0
    %2711 = vmatprep.subr.mxu0 0.0
    %2712 = vmatpush1.msra.mxu0 0.0
    %2713 = vmatprep.subr.mxu0 0.0
    %2714 = vmatpush1.msra.mxu0 0.0
    %2715 = vmatprep.subr.mxu0 0.0
    %2716 = vmatpush1.msra.mxu0 0.0
    %2717 = vmatprep.subr.mxu0 0.0
    %2718 = vmatpush1.msra.mxu0 0.0
    %2719 = vmatprep.subr.mxu0 0.0
    %2720 = vmatpush1.msra.mxu0 0.0
    %2721 = vmatprep.subr.mxu0 0.0
    %2722 = vmatpush1.msra.mxu0 0.0
    %2723 = vmatprep.subr.mxu0 0.0
    %2724 = vmatpush1.msra.mxu0 0.0
    %2725 = vmatprep.subr.mxu0 0.0
    %2726 = vmatpush1.msra.mxu0 0.0
    %2727 = vmatprep.subr.mxu0 0.0
    %2728 = vmatpush1.msra.mxu0 0.0
    %2729 = vmatprep.subr.mxu0 0.0
    %2730 = vmatpush1.msra.mxu0 0.0
    %2731 = vmatprep.subr.mxu0 0.0
    %2732 = vmatpush1.msra.mxu0 0.0
    %2733 = vmatprep.subr.mxu0 0.0
    %2734 = vmatpush1.msra.mxu0 0.0
    %2735 = vmatprep.subr.mxu0 0.0
    %2736 = vmatpush1.msra.mxu0 0.0
    %2737 = vmatprep.subr.mxu0 0.0
    %2738 = vmatpush1.msra.mxu0 0.0
    %2739 = vmatprep.subr.mxu0 0.0
    %2740 = vmatpush1.msra.mxu0 0.0
    %2741 = vmatprep.subr.mxu0 0.0
    %2742 = vmatpush1.msra.mxu0 0.0
    %2743 = vmatprep.subr.mxu0 0.0
    %2744 = vmatpush1.msra.mxu0 0.0
    %2745 = vmatprep.subr.mxu0 0.0
    %2746 = vmatpush1.msra.mxu0 0.0
    %2747 = vmatprep.subr.mxu0 0.0
    %2748 = vmatpush1.msra.mxu0 0.0
    %2749 = vmatprep.subr.mxu0 0.0
    %2750 = vmatpush1.msra.mxu0 0.0
    %2751 = vmatprep.subr.mxu0 0.0
    %2752 = vmatpush1.msra.mxu0 0.0
    %2753 = vmatprep.subr.mxu0 0.0
    %2754 = vmatpush1.msra.mxu0 0.0
    %2755 = vmatprep.subr.mxu0 0.0
    %2756 = vmatpush1.msra.mxu0 0.0
    %2757 = vmatprep.subr.mxu0 0.0
    %2758 = vmatpush1.msra.mxu0 0.0
    %2759 = vmatprep.subr.mxu0 0.0
    %2760 = vmatpush1.msra.mxu0 0.0
    %2761 = vmatprep.subr.mxu0 0.0
    %2762 = vmatpush1.msra.mxu0 0.0
    %2763 = vmatprep.subr.mxu0 0.0
    %2764 = vmatpush1.msra.mxu0 0.0
    %2765 = vmatprep.subr.mxu0 0.0
    %2766 = vmatpush1.msra.mxu0 0.0
    %2767 = vmatprep.mubr.f32.mxu0 0.0
    %2768 = vmatmul.mubr.f32.gmra.mrb[0].mxu0 %v2701
    %v2769 = vpop.f32.mrb[0].mxu0
    %v2770 = vadd.f32 0.0, %v2769
    %v2771 = vpop.f32.mrb[0].mxu0
    %v2772 = vadd.f32 0.0, %v2771
    %2773 = vdwg.mxu0
    %2774 = vmatprep.subr.mxu0 %v2697
    %2775 = vmatpush1.msra.mxu0 %v2696
    %2776 = vmatprep.subr.mxu0 0.0
    %2777 = vmatpush1.msra.mxu0 0.0
    %2778 = vmatprep.subr.mxu0 0.0
    %2779 = vmatpush1.msra.mxu0 0.0
    %2780 = vmatprep.subr.mxu0 0.0
    %2781 = vmatpush1.msra.mxu0 0.0
    %2782 = vmatprep.subr.mxu0 0.0
    %2783 = vmatpush1.msra.mxu0 0.0
    %2784 = vmatprep.subr.mxu0 0.0
    %2785 = vmatpush1.msra.mxu0 0.0
    %2786 = vmatprep.subr.mxu0 0.0
    %2787 = vmatpush1.msra.mxu0 0.0
    %2788 = vmatprep.subr.mxu0 0.0
    %2789 = vmatpush1.msra.mxu0 0.0
    %2790 = vmatprep.subr.mxu0 0.0
    %2791 = vmatpush1.msra.mxu0 0.0
    %2792 = vmatprep.subr.mxu0 0.0
    %2793 = vmatpush1.msra.mxu0 0.0
    %2794 = vmatprep.subr.mxu0 0.0
    %2795 = vmatpush1.msra.mxu0 0.0
    %2796 = vmatprep.subr.mxu0 0.0
    %2797 = vmatpush1.msra.mxu0 0.0
    %2798 = vmatprep.subr.mxu0 0.0
    %2799 = vmatpush1.msra.mxu0 0.0
    %2800 = vmatprep.subr.mxu0 0.0
    %2801 = vmatpush1.msra.mxu0 0.0
    %2802 = vmatprep.subr.mxu0 0.0
    %2803 = vmatpush1.msra.mxu0 0.0
    %2804 = vmatprep.subr.mxu0 0.0
    %2805 = vmatpush1.msra.mxu0 0.0
    %2806 = vmatprep.subr.mxu0 0.0
    %2807 = vmatpush1.msra.mxu0 0.0
    %2808 = vmatprep.subr.mxu0 0.0
    %2809 = vmatpush1.msra.mxu0 0.0
    %2810 = vmatprep.subr.mxu0 0.0
    %2811 = vmatpush1.msra.mxu0 0.0
    %2812 = vmatprep.subr.mxu0 0.0
    %2813 = vmatpush1.msra.mxu0 0.0
    %2814 = vmatprep.subr.mxu0 0.0
    %2815 = vmatpush1.msra.mxu0 0.0
    %2816 = vmatprep.subr.mxu0 0.0
    %2817 = vmatpush1.msra.mxu0 0.0
    %2818 = vmatprep.subr.mxu0 0.0
    %2819 = vmatpush1.msra.mxu0 0.0
    %2820 = vmatprep.subr.mxu0 0.0
    %2821 = vmatpush1.msra.mxu0 0.0
    %2822 = vmatprep.subr.mxu0 0.0
    %2823 = vmatpush1.msra.mxu0 0.0
    %2824 = vmatprep.subr.mxu0 0.0
    %2825 = vmatpush1.msra.mxu0 0.0
    %2826 = vmatprep.subr.mxu0 0.0
    %2827 = vmatpush1.msra.mxu0 0.0
    %2828 = vmatprep.subr.mxu0 0.0
    %2829 = vmatpush1.msra.mxu0 0.0
    %2830 = vmatprep.subr.mxu0 0.0
    %2831 = vmatpush1.msra.mxu0 0.0
    %2832 = vmatprep.subr.mxu0 0.0
    %2833 = vmatpush1.msra.mxu0 0.0
    %2834 = vmatprep.subr.mxu0 0.0
    %2835 = vmatpush1.msra.mxu0 0.0
    %2836 = vmatprep.subr.mxu0 0.0
    %2837 = vmatpush1.msra.mxu0 0.0
    %2838 = vmatprep.mubr.f32.mxu0 0.0
    %2839 = vmatmul.mubr.f32.gmra.mrb[0].mxu0 %v2701
    %v2840 = vpop.f32.mrb[0].mxu0
    %v2841 = vadd.f32 0.0, %v2840
    %v2842 = vpop.f32.mrb[0].mxu0
    %v2843 = vadd.f32 0.0, %v2842
    %2844 = vdwg.mxu0
    %v2845 = vadd.f32 %v2678, %v2770
    %v2846 = vadd.f32 %v2679, %v2772
    %v2847 = vadd.f32 %v2680, %v2841
    %v2848 = vadd.f32 %v2681, %v2843
    %2849 = vrot.lane.b32.xlu0 %v1701, 112
    %v2850 = vpop.permute.xlu0 %2849
    %2851 = vrot.lane.b32.xlu0 %v1702, 112
    %v2852 = vpop.permute.xlu0 %2851
    %2853 = vrot.lane.b32.xlu0 %v1703, 112
    %v2854 = vpop.permute.xlu0 %2853
    %2855 = vrot.lane.b32.xlu0 %v1704, 112
    %v2856 = vpop.permute.xlu0 %2855
    %v2857 = vsel %vm1295, %v2854, %v2856
    %v2858 = vsel %vm1295, %v2852, %v2854
    %v2859 = vsel %vm1295, %v2850, %v2852
    %v2860 = vsel %vm1295, %v2856, %v2850
    %v2861 = vmul.f32 %v2859, %v1303
    %v2862 = vmul.f32 %v2858, %v1307
    %v2863 = vmul.f32 %v2857, %v1311
    %v2864 = vmul.f32 %v2860, %v1315
    %s2865 = scalar_lea.vmem %s5, 56
    %v2866 = vld [vmem:[%s2865] sm:$0xff]
    %v2868 = vsel %vm109, %v2866, 0
    %2870 = vmatprep.subr.mxu0 %v2862
    %2871 = vmatpush1.msra.mxu0 %v2861
    %2872 = vmatprep.subr.mxu0 0.0
    %2873 = vmatpush1.msra.mxu0 0.0
    %2874 = vmatprep.subr.mxu0 0.0
    %2875 = vmatpush1.msra.mxu0 0.0
    %2876 = vmatprep.subr.mxu0 0.0
    %2877 = vmatpush1.msra.mxu0 0.0
    %2878 = vmatprep.subr.mxu0 0.0
    %2879 = vmatpush1.msra.mxu0 0.0
    %2880 = vmatprep.subr.mxu0 0.0
    %2881 = vmatpush1.msra.mxu0 0.0
    %2882 = vmatprep.subr.mxu0 0.0
    %2883 = vmatpush1.msra.mxu0 0.0
    %2884 = vmatprep.subr.mxu0 0.0
    %2885 = vmatpush1.msra.mxu0 0.0
    %2886 = vmatprep.subr.mxu0 0.0
    %2887 = vmatpush1.msra.mxu0 0.0
    %2888 = vmatprep.subr.mxu0 0.0
    %2889 = vmatpush1.msra.mxu0 0.0
    %2890 = vmatprep.subr.mxu0 0.0
    %2891 = vmatpush1.msra.mxu0 0.0
    %2892 = vmatprep.subr.mxu0 0.0
    %2893 = vmatpush1.msra.mxu0 0.0
    %2894 = vmatprep.subr.mxu0 0.0
    %2895 = vmatpush1.msra.mxu0 0.0
    %2896 = vmatprep.subr.mxu0 0.0
    %2897 = vmatpush1.msra.mxu0 0.0
    %2898 = vmatprep.subr.mxu0 0.0
    %2899 = vmatpush1.msra.mxu0 0.0
    %2900 = vmatprep.subr.mxu0 0.0
    %2901 = vmatpush1.msra.mxu0 0.0
    %2902 = vmatprep.subr.mxu0 0.0
    %2903 = vmatpush1.msra.mxu0 0.0
    %2904 = vmatprep.subr.mxu0 0.0
    %2905 = vmatpush1.msra.mxu0 0.0
    %2906 = vmatprep.subr.mxu0 0.0
    %2907 = vmatpush1.msra.mxu0 0.0
    %2908 = vmatprep.subr.mxu0 0.0
    %2909 = vmatpush1.msra.mxu0 0.0
    %2910 = vmatprep.subr.mxu0 0.0
    %2911 = vmatpush1.msra.mxu0 0.0
    %2912 = vmatprep.subr.mxu0 0.0
    %2913 = vmatpush1.msra.mxu0 0.0
    %2914 = vmatprep.subr.mxu0 0.0
    %2915 = vmatpush1.msra.mxu0 0.0
    %2916 = vmatprep.subr.mxu0 0.0
    %2917 = vmatpush1.msra.mxu0 0.0
    %2918 = vmatprep.subr.mxu0 0.0
    %2919 = vmatpush1.msra.mxu0 0.0
    %2920 = vmatprep.subr.mxu0 0.0
    %2921 = vmatpush1.msra.mxu0 0.0
    %2922 = vmatprep.subr.mxu0 0.0
    %2923 = vmatpush1.msra.mxu0 0.0
    %2924 = vmatprep.subr.mxu0 0.0
    %2925 = vmatpush1.msra.mxu0 0.0
    %2926 = vmatprep.subr.mxu0 0.0
    %2927 = vmatpush1.msra.mxu0 0.0
    %2928 = vmatprep.subr.mxu0 0.0
    %2929 = vmatpush1.msra.mxu0 0.0
    %2930 = vmatprep.subr.mxu0 0.0
    %2931 = vmatpush1.msra.mxu0 0.0
    %2932 = vmatprep.subr.mxu0 0.0
    %2933 = vmatpush1.msra.mxu0 0.0
    %2934 = vmatprep.mubr.f32.mxu0 0.0
    %2935 = vmatmul.mubr.f32.gmra.mrb[0].mxu0 %v2868
    %v2936 = vpop.f32.mrb[0].mxu0
    %v2937 = vadd.f32 0.0, %v2936
    %v2938 = vpop.f32.mrb[0].mxu0
    %v2939 = vadd.f32 0.0, %v2938
    %2940 = vdwg.mxu0
    %2941 = vmatprep.subr.mxu0 %v2864
    %2942 = vmatpush1.msra.mxu0 %v2863
    %2943 = vmatprep.subr.mxu0 0.0
    %2944 = vmatpush1.msra.mxu0 0.0
    %2945 = vmatprep.subr.mxu0 0.0
    %2946 = vmatpush1.msra.mxu0 0.0
    %2947 = vmatprep.subr.mxu0 0.0
    %2948 = vmatpush1.msra.mxu0 0.0
    %2949 = vmatprep.subr.mxu0 0.0
    %2950 = vmatpush1.msra.mxu0 0.0
    %2951 = vmatprep.subr.mxu0 0.0
    %2952 = vmatpush1.msra.mxu0 0.0
    %2953 = vmatprep.subr.mxu0 0.0
    %2954 = vmatpush1.msra.mxu0 0.0
    %2955 = vmatprep.subr.mxu0 0.0
    %2956 = vmatpush1.msra.mxu0 0.0
    %2957 = vmatprep.subr.mxu0 0.0
    %2958 = vmatpush1.msra.mxu0 0.0
    %2959 = vmatprep.subr.mxu0 0.0
    %2960 = vmatpush1.msra.mxu0 0.0
    %2961 = vmatprep.subr.mxu0 0.0
    %2962 = vmatpush1.msra.mxu0 0.0
    %2963 = vmatprep.subr.mxu0 0.0
    %2964 = vmatpush1.msra.mxu0 0.0
    %2965 = vmatprep.subr.mxu0 0.0
    %2966 = vmatpush1.msra.mxu0 0.0
    %2967 = vmatprep.subr.mxu0 0.0
    %2968 = vmatpush1.msra.mxu0 0.0
    %2969 = vmatprep.subr.mxu0 0.0
    %2970 = vmatpush1.msra.mxu0 0.0
    %2971 = vmatprep.subr.mxu0 0.0
    %2972 = vmatpush1.msra.mxu0 0.0
    %2973 = vmatprep.subr.mxu0 0.0
    %2974 = vmatpush1.msra.mxu0 0.0
    %2975 = vmatprep.subr.mxu0 0.0
    %2976 = vmatpush1.msra.mxu0 0.0
    %2977 = vmatprep.subr.mxu0 0.0
    %2978 = vmatpush1.msra.mxu0 0.0
    %2979 = vmatprep.subr.mxu0 0.0
    %2980 = vmatpush1.msra.mxu0 0.0
    %2981 = vmatprep.subr.mxu0 0.0
    %2982 = vmatpush1.msra.mxu0 0.0
    %2983 = vmatprep.subr.mxu0 0.0
    %2984 = vmatpush1.msra.mxu0 0.0
    %2985 = vmatprep.subr.mxu0 0.0
    %2986 = vmatpush1.msra.mxu0 0.0
    %2987 = vmatprep.subr.mxu0 0.0
    %2988 = vmatpush1.msra.mxu0 0.0
    %2989 = vmatprep.subr.mxu0 0.0
    %2990 = vmatpush1.msra.mxu0 0.0
    %2991 = vmatprep.subr.mxu0 0.0
    %2992 = vmatpush1.msra.mxu0 0.0
    %2993 = vmatprep.subr.mxu0 0.0
    %2994 = vmatpush1.msra.mxu0 0.0
    %2995 = vmatprep.subr.mxu0 0.0
    %2996 = vmatpush1.msra.mxu0 0.0
    %2997 = vmatprep.subr.mxu0 0.0
    %2998 = vmatpush1.msra.mxu0 0.0
    %2999 = vmatprep.subr.mxu0 0.0
    %3000 = vmatpush1.msra.mxu0 0.0
    %3001 = vmatprep.subr.mxu0 0.0
    %3002 = vmatpush1.msra.mxu0 0.0
    %3003 = vmatprep.subr.mxu0 0.0
    %3004 = vmatpush1.msra.mxu0 0.0
    %3005 = vmatprep.mubr.f32.mxu0 0.0
    %3006 = vmatmul.mubr.f32.gmra.mrb[0].mxu0 %v2868
    %v3007 = vpop.f32.mrb[0].mxu0
    %v3008 = vadd.f32 0.0, %v3007
    %v3009 = vpop.f32.mrb[0].mxu0
    %v3010 = vadd.f32 0.0, %v3009
    %3011 = vdwg.mxu0
    %v3012 = vadd.f32 %v2845, %v2937
    %v3013 = vadd.f32 %v2846, %v2939
    %v3014 = vadd.f32 %v2847, %v3008
    %v3015 = vadd.f32 %v2848, %v3010
    %3016 = vrot.lane.b32.xlu0 %v1701, 111
    %v3017 = vpop.permute.xlu0 %3016
    %3018 = vrot.lane.b32.xlu0 %v1702, 111
    %v3019 = vpop.permute.xlu0 %3018
    %3020 = vrot.lane.b32.xlu0 %v1703, 111
    %v3021 = vpop.permute.xlu0 %3020
    %3022 = vrot.lane.b32.xlu0 %v1704, 111
    %v3023 = vpop.permute.xlu0 %3022
    %v3024 = vsel %vm1479, %v3021, %v3023
    %v3025 = vsel %vm1479, %v3019, %v3021
    %v3026 = vsel %vm1479, %v3017, %v3019
    %v3027 = vsel %vm1479, %v3023, %v3017
    %v3028 = vmul.f32 %v3026, %v1487
    %v3029 = vmul.f32 %v3025, %v1491
    %v3030 = vmul.f32 %v3024, %v1495
    %v3031 = vmul.f32 %v3027, %v1499
    %s3032 = scalar_lea.vmem %s5, 64
    %v3033 = vld [vmem:[%s3032] sm:$0xff]
    %v3035 = vsel %vm109, %v3033, 0
    %3037 = vmatprep.subr.mxu0 %v3029
    %3038 = vmatpush1.msra.mxu0 %v3028
    %3039 = vmatprep.subr.mxu0 0.0
    %3040 = vmatpush1.msra.mxu0 0.0
    %3041 = vmatprep.subr.mxu0 0.0
    %3042 = vmatpush1.msra.mxu0 0.0
    %3043 = vmatprep.subr.mxu0 0.0
    %3044 = vmatpush1.msra.mxu0 0.0
    %3045 = vmatprep.subr.mxu0 0.0
    %3046 = vmatpush1.msra.mxu0 0.0
    %3047 = vmatprep.subr.mxu0 0.0
    %3048 = vmatpush1.msra.mxu0 0.0
    %3049 = vmatprep.subr.mxu0 0.0
    %3050 = vmatpush1.msra.mxu0 0.0
    %3051 = vmatprep.subr.mxu0 0.0
    %3052 = vmatpush1.msra.mxu0 0.0
    %3053 = vmatprep.subr.mxu0 0.0
    %3054 = vmatpush1.msra.mxu0 0.0
    %3055 = vmatprep.subr.mxu0 0.0
    %3056 = vmatpush1.msra.mxu0 0.0
    %3057 = vmatprep.subr.mxu0 0.0
    %3058 = vmatpush1.msra.mxu0 0.0
    %3059 = vmatprep.subr.mxu0 0.0
    %3060 = vmatpush1.msra.mxu0 0.0
    %3061 = vmatprep.subr.mxu0 0.0
    %3062 = vmatpush1.msra.mxu0 0.0
    %3063 = vmatprep.subr.mxu0 0.0
    %3064 = vmatpush1.msra.mxu0 0.0
    %3065 = vmatprep.subr.mxu0 0.0
    %3066 = vmatpush1.msra.mxu0 0.0
    %3067 = vmatprep.subr.mxu0 0.0
    %3068 = vmatpush1.msra.mxu0 0.0
    %3069 = vmatprep.subr.mxu0 0.0
    %3070 = vmatpush1.msra.mxu0 0.0
    %3071 = vmatprep.subr.mxu0 0.0
    %3072 = vmatpush1.msra.mxu0 0.0
    %3073 = vmatprep.subr.mxu0 0.0
    %3074 = vmatpush1.msra.mxu0 0.0
    %3075 = vmatprep.subr.mxu0 0.0
    %3076 = vmatpush1.msra.mxu0 0.0
    %3077 = vmatprep.subr.mxu0 0.0
    %3078 = vmatpush1.msra.mxu0 0.0
    %3079 = vmatprep.subr.mxu0 0.0
    %3080 = vmatpush1.msra.mxu0 0.0
    %3081 = vmatprep.subr.mxu0 0.0
    %3082 = vmatpush1.msra.mxu0 0.0
    %3083 = vmatprep.subr.mxu0 0.0
    %3084 = vmatpush1.msra.mxu0 0.0
    %3085 = vmatprep.subr.mxu0 0.0
    %3086 = vmatpush1.msra.mxu0 0.0
    %3087 = vmatprep.subr.mxu0 0.0
    %3088 = vmatpush1.msra.mxu0 0.0
    %3089 = vmatprep.subr.mxu0 0.0
    %3090 = vmatpush1.msra.mxu0 0.0
    %3091 = vmatprep.subr.mxu0 0.0
    %3092 = vmatpush1.msra.mxu0 0.0
    %3093 = vmatprep.subr.mxu0 0.0
    %3094 = vmatpush1.msra.mxu0 0.0
    %3095 = vmatprep.subr.mxu0 0.0
    %3096 = vmatpush1.msra.mxu0 0.0
    %3097 = vmatprep.subr.mxu0 0.0
    %3098 = vmatpush1.msra.mxu0 0.0
    %3099 = vmatprep.subr.mxu0 0.0
    %3100 = vmatpush1.msra.mxu0 0.0
    %3101 = vmatprep.mubr.f32.mxu0 0.0
    %3102 = vmatmul.mubr.f32.gmra.mrb[0].mxu0 %v3035
    %v3103 = vpop.f32.mrb[0].mxu0
    %v3104 = vadd.f32 0.0, %v3103
    %v3105 = vpop.f32.mrb[0].mxu0
    %v3106 = vadd.f32 0.0, %v3105
    %3107 = vdwg.mxu0
    %3108 = vmatprep.subr.mxu0 %v3031
    %3109 = vmatpush1.msra.mxu0 %v3030
    %3110 = vmatprep.subr.mxu0 0.0
    %3111 = vmatpush1.msra.mxu0 0.0
    %3112 = vmatprep.subr.mxu0 0.0
    %3113 = vmatpush1.msra.mxu0 0.0
    %3114 = vmatprep.subr.mxu0 0.0
    %3115 = vmatpush1.msra.mxu0 0.0
    %3116 = vmatprep.subr.mxu0 0.0
    %3117 = vmatpush1.msra.mxu0 0.0
    %3118 = vmatprep.subr.mxu0 0.0
    %3119 = vmatpush1.msra.mxu0 0.0
    %3120 = vmatprep.subr.mxu0 0.0
    %3121 = vmatpush1.msra.mxu0 0.0
    %3122 = vmatprep.subr.mxu0 0.0
    %3123 = vmatpush1.msra.mxu0 0.0
    %3124 = vmatprep.subr.mxu0 0.0
    %3125 = vmatpush1.msra.mxu0 0.0
    %3126 = vmatprep.subr.mxu0 0.0
    %3127 = vmatpush1.msra.mxu0 0.0
    %3128 = vmatprep.subr.mxu0 0.0
    %3129 = vmatpush1.msra.mxu0 0.0
    %3130 = vmatprep.subr.mxu0 0.0
    %3131 = vmatpush1.msra.mxu0 0.0
    %3132 = vmatprep.subr.mxu0 0.0
    %3133 = vmatpush1.msra.mxu0 0.0
    %3134 = vmatprep.subr.mxu0 0.0
    %3135 = vmatpush1.msra.mxu0 0.0
    %3136 = vmatprep.subr.mxu0 0.0
    %3137 = vmatpush1.msra.mxu0 0.0
    %3138 = vmatprep.subr.mxu0 0.0
    %3139 = vmatpush1.msra.mxu0 0.0
    %3140 = vmatprep.subr.mxu0 0.0
    %3141 = vmatpush1.msra.mxu0 0.0
    %3142 = vmatprep.subr.mxu0 0.0
    %3143 = vmatpush1.msra.mxu0 0.0
    %3144 = vmatprep.subr.mxu0 0.0
    %3145 = vmatpush1.msra.mxu0 0.0
    %3146 = vmatprep.subr.mxu0 0.0
    %3147 = vmatpush1.msra.mxu0 0.0
    %3148 = vmatprep.subr.mxu0 0.0
    %3149 = vmatpush1.msra.mxu0 0.0
    %3150 = vmatprep.subr.mxu0 0.0
    %3151 = vmatpush1.msra.mxu0 0.0
    %3152 = vmatprep.subr.mxu0 0.0
    %3153 = vmatpush1.msra.mxu0 0.0
    %3154 = vmatprep.subr.mxu0 0.0
    %3155 = vmatpush1.msra.mxu0 0.0
    %3156 = vmatprep.subr.mxu0 0.0
    %3157 = vmatpush1.msra.mxu0 0.0
    %3158 = vmatprep.subr.mxu0 0.0
    %3159 = vmatpush1.msra.mxu0 0.0
    %3160 = vmatprep.subr.mxu0 0.0
    %3161 = vmatpush1.msra.mxu0 0.0
    %3162 = vmatprep.subr.mxu0 0.0
    %3163 = vmatpush1.msra.mxu0 0.0
    %3164 = vmatprep.subr.mxu0 0.0
    %3165 = vmatpush1.msra.mxu0 0.0
    %3166 = vmatprep.subr.mxu0 0.0
    %3167 = vmatpush1.msra.mxu0 0.0
    %3168 = vmatprep.subr.mxu0 0.0
    %3169 = vmatpush1.msra.mxu0 0.0
    %3170 = vmatprep.subr.mxu0 0.0
    %3171 = vmatpush1.msra.mxu0 0.0
    %3172 = vmatprep.mubr.f32.mxu0 0.0
    %3173 = vmatmul.mubr.f32.gmra.mrb[0].mxu0 %v3035
    %v3174 = vpop.f32.mrb[0].mxu0
    %v3175 = vadd.f32 0.0, %v3174
    %v3176 = vpop.f32.mrb[0].mxu0
    %v3177 = vadd.f32 0.0, %v3176
    %3178 = vdwg.mxu0
    %v3179 = vadd.f32 %v3012, %v3104
    %v3180 = vadd.f32 %v3013, %v3106
    %v3181 = vadd.f32 %v3014, %v3175
    %v3182 = vadd.f32 %v3015, %v3177
    %v3183 = vld [vmem:[%s6] sm:$0xff]
    %v3184 = vld [vmem:[%s7] sm:$0xff]
    %v3185 = vadd.f32 %v3179, %v3180
    %v3186 = vadd.f32 %v3185, %v3181
    %v3187 = vadd.f32 %v3186, %v3182
    %3188 = vadd.xlane.f32.xlu0 %v3187
    %v3189 = vpop.xlane.xlu0 %3188
    %v3190 = vmul.f32 %v3189, 0.001953125
    %v3191 = vsub.f32 %v3179, %v3190
    %v3192 = vsub.f32 %v3180, %v3190
    %v3193 = vsub.f32 %v3181, %v3190
    %v3194 = vsub.f32 %v3182, %v3190
    %v3195 = vmul.f32 %v3191, %v3191
    %v3196 = vmul.f32 %v3192, %v3192
    %v3197 = vmul.f32 %v3193, %v3193
    %v3198 = vmul.f32 %v3194, %v3194
    %v3199 = vadd.f32 %v3195, %v3196
    %v3200 = vadd.f32 %v3199, %v3197
    %v3201 = vadd.f32 %v3200, %v3198
    %3202 = vadd.xlane.f32.xlu0 %v3201
    %v3203 = vpop.xlane.xlu0 %3202
    %v3204 = vmul.f32 %v3203, 0.001953125
    %v3205 = vadd.f32 %v3204, 1e-05
    %v3206 = vrsqrt.pop %v3205
    %v3207 = vmul.f32 %v3191, %v3206
    %v3208 = vmul.f32 %v3192, %v3206
    %v3209 = vmul.f32 %v3193, %v3206
    %v3210 = vmul.f32 %v3194, %v3206
    %3212 = vset.pattern.permute.xlu0 0
    %3213 = vperm.xlu0 %3212, %v3183
    %v3214 = vpop.permute.xlu0 %3213
    %v3216 = vmul.f32 %v3207, %v3214
    %v3217 = vmul.f32 %v3208, %v3214
    %v3218 = vmul.f32 %v3209, %v3214
    %v3219 = vmul.f32 %v3210, %v3214
    %3221 = vset.pattern.permute.xlu0 0
    %3222 = vperm.xlu0 %3221, %v3184
    %v3223 = vpop.permute.xlu0 %3222
    %v3225 = vadd.f32 %v3216, %v3223
    %v3226 = vadd.f32 %v3217, %v3223
    %v3227 = vadd.f32 %v3218, %v3223
    %v3228 = vadd.f32 %v3219, %v3223
    %v3229 = vadd.f32 %v3225, %v30
    %v3230 = vadd.f32 %v3226, %v31
    %v3231 = vadd.f32 %v3227, %v32
    %v3232 = vadd.f32 %v3228, %v33
    %v3233 = vmax.f32 %v3229, 0.0
    %v3234 = vmax.f32 %v3230, 0.0
    %v3235 = vmax.f32 %v3231, 0.0
    %v3236 = vmax.f32 %v3232, 0.0
    %3237 = vst [vmem:[#allocation2] sm:$0xff] %v3233
    %3238 = vst [vmem:[#allocation2 + $0x8] sm:$0xff] %v3234
    %3239 = vst [vmem:[#allocation2 + $0x10] sm:$0xff] %v3235
    %3240 = vst [vmem:[#allocation2 + $0x18] sm:$0xff] %v3236
    // Predicated region
    $region34: #{tpu_custom_call.1} parent=1 // pred_check
      _
    $region35: #{tpu_custom_call.1} parent=1 // pred_check_branch
      %3242 = sbr.rel (0) target = $region37
    $region36: #{tpu_custom_call.1} parent=1 // pred_region
      %s3244 = ssub.s32 512, 512
      %3245 = vsyncadd [#allocation3], %s3244
      %s3247 = sshll.u32 [#allocation2], 4
      %s3248 = int_to_ptr.vmem [resolvable:$true] %s3247
      %3250 = dma.vmem_to_hbm [thread:$0]  %s3248, 512, %s8, [#allocation3]
    $region37: #{tpu_custom_call.1} parent=1 // pred_fallthru
      _
    // Predicated region
    $region38: #{tpu_custom_call.1} parent=1 // pred_check
      _
    $region39: #{tpu_custom_call.1} parent=1 // pred_check_branch
      %3252 = sbr.rel (0) target = $region41
    $region40: #{tpu_custom_call.1} parent=1 // pred_region
      %3253 = dma.done [#allocation3], 512
    $region41: #{tpu_custom_call.1} parent=1 // pred_fallthru
      _
    %3254 = vsyncpa [#allocation3], 1

</llo_original>
